<compile_context>
chip_gen: v7x
topology: tpu7x:2x2x1
jax: 0.10.0
libtpu: 0.0.40
codegen_flags: <defaults>
</compile_context>

<pallas_src>
import math
from functools import partial

import jax
import jax.numpy as jnp
from jax.experimental import pallas as pl
from jax.experimental.pallas import tpu as pltpu

PAD = 0          # Constants.PAD
NEG_INF = -1e9   # finite large negative (avoids NaN for fully-masked rows)

# ----------------------------------------------------------------------------
# Compiler params / BlockSpec helpers
# ----------------------------------------------------------------------------
def _cparams(n_grid_dims):
    return pltpu.CompilerParams(
        dimension_semantics=("parallel",) * n_grid_dims,
        vmem_limit_bytes=48 * 1024 * 1024,
    )


def _make_buffered1():
    try:
        b1 = pl.Buffered(1)
        # feature-detect the pipeline_mode kwarg
        pl.BlockSpec((8, 128), lambda *_: (0, 0), pipeline_mode=b1)
        return b1
    except Exception:
        return None


_BUFFERED1 = _make_buffered1()


def _wspec(shape):
    """Constant-index (weight) BlockSpec, single-buffered when supported."""
    idx = lambda *_: (0,) * len(shape)
    if _BUFFERED1 is not None:
        return pl.BlockSpec(shape, idx, pipeline_mode=_BUFFERED1)
    return pl.BlockSpec(shape, idx)


# ----------------------------------------------------------------------------
# Pallas kernels
# ----------------------------------------------------------------------------
def mha_kernel(q_ref, kv_ref, kpad_ref, npm_ref,
               wq_ref, bq_ref, wkv_ref, bkv_ref,
               wo_ref, bo_ref, g_ref, beta_ref, o_ref,
               *, n_head, d_k, d_v, causal, q_tile):
    """Fused multi-head attention for one (batch, query-row-tile) grid cell.

    q_ref:  (TLq, D) bf16 (queries; also the residual)   kv_ref: (Lk, D) bf16
    kpad_ref: (1, Lk) f32 (1.0 where key token is PAD)
    npm_ref:  (TLq, 1) f32 non-pad mask
    wq: (D, H*dk) bf16 (1/sqrt(dk) folded in)  wkv: (D, H*(dk+dv)) bf16
    wo: (H*dv, D) bf16;  bq/bkv/bo/g/beta f32 row vectors.
    """
    x = q_ref[...]                                # (TLq, D) bf16
    kv = kv_ref[...]                              # (Lk, D) bf16
    tlq = x.shape[0]
    lk = kv.shape[0]
    hk = n_head * d_k

    residual = x.astype(jnp.float32)

    # Fused projections (bf16 MXU, f32 accumulation).
    qp = jnp.dot(x, wq_ref[...], preferred_element_type=jnp.float32) + bq_ref[...]
    kvp = jnp.dot(kv, wkv_ref[...], preferred_element_type=jnp.float32) + bkv_ref[...]

    # Split heads once (no per-head matmul loop).
    q3 = qp.reshape(tlq, n_head, d_k).transpose(1, 0, 2).astype(jnp.bfloat16)   # (H,TLq,dk)
    k3 = kvp[:, :hk].reshape(lk, n_head, d_k).transpose(1, 0, 2).astype(jnp.bfloat16)
    v3 = kvp[:, hk:].reshape(lk, n_head, d_v).transpose(1, 0, 2).astype(jnp.bfloat16)

    # Additive mask bias, built in-kernel; shared across heads.
    bias = kpad_ref[...] * NEG_INF                                              # (1, Lk)
    if causal:
        q_off = pl.program_id(1) * q_tile
        row = jax.lax.broadcasted_iota(jnp.int32, (tlq, lk), 0) + q_off
        col = jax.lax.broadcasted_iota(jnp.int32, (tlq, lk), 1)
        bias = bias + jnp.where(col > row, NEG_INF, 0.0)                        # (TLq, Lk)

    # Head-batched scores (scale already folded into wq/bq).
    s = jnp.einsum("hqd,hkd->hqk", q3, k3,
                   preferred_element_type=jnp.float32)                          # (H,TLq,Lk)
    s = s + bias[None]

    # softmax(dim=-1), EUP reciprocal for the denominator.
    m = jnp.max(s, axis=-1, keepdims=True)
    e = jnp.exp(s - m)
    p = e * pl.reciprocal(jnp.sum(e, axis=-1, keepdims=True), approx=True)

    # Head-batched context, then ONE concatenated output projection.
    ctx = jnp.einsum("hqk,hkd->hqd", p.astype(jnp.bfloat16), v3,
                     preferred_element_type=jnp.float32)                        # (H,TLq,dv)
    ctx = ctx.transpose(1, 0, 2).reshape(tlq, n_head * d_v).astype(jnp.bfloat16)

    y = jnp.dot(ctx, wo_ref[...], preferred_element_type=jnp.float32)
    y = y + bo_ref[...] + residual

    # LayerNorm (f32 stats) + non-pad mask; bf16 output.
    mean = jnp.mean(y, axis=-1, keepdims=True)
    var = jnp.mean(jnp.square(y - mean), axis=-1, keepdims=True)
    y = (y - mean) * jax.lax.rsqrt(var + 1e-5) * g_ref[...] + beta_ref[...]
    o_ref[...] = (y * npm_ref[...]).astype(o_ref.dtype)


def ffn_kernel(x_ref, npm_ref, w1_ref, b1_ref, w2_ref, b2_ref, g_ref, beta_ref, o_ref):
    """Fused PositionwiseFeedForward: LN(relu(x@W1+b1)@W2+b2 + x) * non_pad_mask."""
    x = x_ref[...]                                                     # (TL, D) bf16
    residual = x.astype(jnp.float32)
    h = jnp.dot(x, w1_ref[...], preferred_element_type=jnp.float32) + b1_ref[...]
    h = jnp.maximum(h, 0.0).astype(jnp.bfloat16)
    y = jnp.dot(h, w2_ref[...], preferred_element_type=jnp.float32) + b2_ref[...]
    z = y + residual
    mean = jnp.mean(z, axis=-1, keepdims=True)
    var = jnp.mean(jnp.square(z - mean), axis=-1, keepdims=True)
    out = (z - mean) * jax.lax.rsqrt(var + 1e-5) * g_ref[...] + beta_ref[...]
    o_ref[...] = (out * npm_ref[...]).astype(o_ref.dtype)


def embed_proj_kernel(e_ref, pe_ref, w_ref, b_ref, o_ref):
    """src_proj(word_emb) + bias + positional embedding, fused."""
    y = jnp.dot(e_ref[...], w_ref[...], preferred_element_type=jnp.float32)
    o_ref[...] = (y + b_ref[...] + pe_ref[...]).astype(o_ref.dtype)


def vocab_proj_kernel(x_ref, w_ref, o_ref):
    """Bias-free vocabulary projection (one (rows, vocab) tile)."""
    o_ref[...] = jnp.dot(x_ref[...], w_ref[...], preferred_element_type=jnp.float32)


# ----------------------------------------------------------------------------
# pallas_call wrappers (grid over (batch, rows[, vocab]); all axes "parallel")
# ----------------------------------------------------------------------------
def _row_tile(L):
    return L if L <= 256 else 256


def pallas_mha(p, q_in, kv_in, key_pad, npm, n_head, d_k, d_v, causal):
    B, Lq, D = q_in.shape
    Lk = kv_in.shape[1]
    Hk, Hv = n_head * d_k, n_head * d_v
    TL = _row_tile(Lq)
    kernel = partial(mha_kernel, n_head=n_head, d_k=d_k, d_v=d_v,
                     causal=causal, q_tile=TL)
    return pl.pallas_call(
        kernel,
        grid=(B, pl.cdiv(Lq, TL)),
        in_specs=[
            pl.BlockSpec((None, TL, D), lambda b, r: (b, r, 0)),
            pl.BlockSpec((None, Lk, D), lambda b, r: (b, 0, 0)),
            pl.BlockSpec((None, 1, Lk), lambda b, r: (b, 0, 0)),
            pl.BlockSpec((None, TL, 1), lambda b, r: (b, r, 0)),
            _wspec((D, Hk)), _wspec((1, Hk)),
            _wspec((D, Hk + Hv)), _wspec((1, Hk + Hv)),
            _wspec((Hv, D)), _wspec((1, D)),
            _wspec((1, D)), _wspec((1, D)),
        ],
        out_specs=pl.BlockSpec((None, TL, D), lambda b, r: (b, r, 0)),
        out_shape=jax.ShapeDtypeStruct((B, Lq, D), jnp.bfloat16),
        compiler_params=_cparams(2),
    )(q_in, kv_in, key_pad, npm,
      p["wq"], p["bq"], p["wkv"], p["bkv"],
      p["wo"], p["bo"], p["ln_g"], p["ln_b"])


def pallas_pos_ffn(p, x, npm):
    B, L, D = x.shape
    d_inner = p["w1"].shape[1]
    TL = _row_tile(L)
    return pl.pallas_call(
        ffn_kernel,
        grid=(B, pl.cdiv(L, TL)),
        in_specs=[
            pl.BlockSpec((None, TL, D), lambda b, r: (b, r, 0)),
            pl.BlockSpec((None, TL, 1), lambda b, r: (b, r, 0)),
            _wspec((D, d_inner)), _wspec((1, d_inner)),
            _wspec((d_inner, D)), _wspec((1, D)),
            _wspec((1, D)), _wspec((1, D)),
        ],
        out_specs=pl.BlockSpec((None, TL, D), lambda b, r: (b, r, 0)),
        out_shape=jax.ShapeDtypeStruct((B, L, D), jnp.bfloat16),
        compiler_params=_cparams(2),
    )(x, npm, p["w1"], p["b1"], p["w2"], p["b2"], p["ln_g"], p["ln_b"])


def pallas_embed_proj(emb, pe, w, b):
    B, L, E = emb.shape
    D = w.shape[1]
    TL = _row_tile(L)
    return pl.pallas_call(
        embed_proj_kernel,
        grid=(B, pl.cdiv(L, TL)),
        in_specs=[
            pl.BlockSpec((None, TL, E), lambda b, r: (b, r, 0)),
            pl.BlockSpec((TL, D), lambda b, r: (r, 0)),
            _wspec((E, D)), _wspec((1, D)),
        ],
        out_specs=pl.BlockSpec((None, TL, D), lambda b, r: (b, r, 0)),
        out_shape=jax.ShapeDtypeStruct((B, L, D), jnp.bfloat16),
        compiler_params=_cparams(2),
    )(emb, pe, w, b)


def pallas_vocab_proj(x, w):
    B, L, D = x.shape
    V = w.shape[1]
    TL = _row_tile(L)
    TV = V if V <= 2048 else 2048
    return pl.pallas_call(
        vocab_proj_kernel,
        grid=(B, pl.cdiv(L, TL), pl.cdiv(V, TV)),
        in_specs=[
            pl.BlockSpec((None, TL, D), lambda b, r, j: (b, r, 0)),
            pl.BlockSpec((D, TV), lambda b, r, j: (0, j)),
        ],
        out_specs=pl.BlockSpec((None, TL, TV), lambda b, r, j: (b, r, j)),
        out_shape=jax.ShapeDtypeStruct((B, L, V), jnp.float32),
        compiler_params=_cparams(3),
    )(x, w)


# ----------------------------------------------------------------------------
# Masks / positional embedding glue (plain JAX, tiny)
# ----------------------------------------------------------------------------
def get_non_pad_mask(seq):
    return (seq != PAD).astype(jnp.float32)[:, :, None]          # (B, L, 1)


def key_pad_vector(seq):
    # (B, 1, L) f32: 1.0 where the key token is PAD (bias built in-kernel)
    return (seq == PAD).astype(jnp.float32)[:, None, :]


def positional_embedding(L, d_model):
    position = jnp.arange(L, dtype=jnp.float32)[:, None]
    div_term = jnp.exp(
        jnp.arange(0, d_model, 2, dtype=jnp.float32) * -(math.log(10000.0) / d_model)
    )
    pe = jnp.zeros((L, d_model), dtype=jnp.float32)
    pe = pe.at[:, 0::2].set(jnp.sin(position * div_term))
    pe = pe.at[:, 1::2].set(jnp.cos(position * div_term))
    return pe


# ----------------------------------------------------------------------------
# Forward pass
# ----------------------------------------------------------------------------
def transformer_decoder_forward(params, tgt_seq, src_seq, *, n_head, d_model):
    d_k = d_model // n_head
    d_v = d_model // n_head
    B, Ls = src_seq.shape
    Lt = tgt_seq.shape[1]

    # -------- encoder over src_seq --------
    src_npm = get_non_pad_mask(src_seq)
    src_kpad = key_pad_vector(src_seq)
    # embedding gather stays in XLA (data-dependent gather); projection+PE fused in Pallas
    emb_s = params["word_emb"][src_seq]                          # (B, Ls, 384) bf16
    x = pallas_embed_proj(emb_s, positional_embedding(Ls, d_model),
                          params["src_proj_w"], params["src_proj_b"])
    for lp in params["enc_layers"]:
        x = pallas_mha(lp["slf"], x, x, src_kpad, src_npm, n_head, d_k, d_v, causal=False)
        x = pallas_pos_ffn(lp["ffn"], x, src_npm)
    enc_output = x

    # -------- decoder over tgt_seq --------
    tgt_npm = get_non_pad_mask(tgt_seq)
    tgt_kpad = key_pad_vector(tgt_seq)
    emb_t = params["word_emb"][tgt_seq]
    y = pallas_embed_proj(emb_t, positional_embedding(Lt, d_model),
                          params["src_proj_w"], params["src_proj_b"])
    for lp in params["dec_layers"]:
        y = pallas_mha(lp["slf"], y, y, tgt_kpad, tgt_npm, n_head, d_k, d_v, causal=True)
        y = pallas_mha(lp["enc"], y, enc_output, src_kpad, tgt_npm, n_head, d_k, d_v,
                       causal=False)
        y = pallas_pos_ffn(lp["ffn"], y, tgt_npm)

    return pallas_vocab_proj(y, params["tgt_prj_w"])             # (B, Lt, vocab) f32


# ----------------------------------------------------------------------------
# Deterministic parameter init (shapes from the module's __init__)
#   - weights pre-transposed to (in, out) layout, stored bf16; biases / LN f32
#   - 1/sqrt(d_k) folded into wq/bq; embedding width padded 300 -> 384
# ----------------------------------------------------------------------------
def init_params(key, vocab_size, d_word_vec, n_layers, d_model, n_head):
    d_k = d_model // n_head
    d_v = d_model // n_head
    d_inner = d_model * 4
    E_RAW, E_PAD = 300, 384
    inv_temp = 1.0 / math.sqrt(d_k)
    keys = iter(jax.random.split(key, 16 + n_layers * 64))

    def nrm(shape, std=0.1):
        return jax.random.normal(next(keys), shape, jnp.float32) * std

    params = {}
    emb = nrm((vocab_size, E_RAW)).at[PAD].set(0.0)              # padding row zero
    emb = jnp.pad(emb, ((0, 0), (0, E_PAD - E_RAW)))             # lane-align contraction
    params["word_emb"] = emb.astype(jnp.bfloat16)

    w_sp = nrm((d_word_vec, E_RAW)).T                            # torch (out,in) -> (in,out)
    w_sp = jnp.pad(w_sp, ((0, E_PAD - E_RAW), (0, 0)))           # zero rows for padded cols
    params["src_proj_w"] = w_sp.astype(jnp.bfloat16)             # (384, D)
    params["src_proj_b"] = nrm((1, d_word_vec))

    def mha_params():
        qk_std = math.sqrt(2.0 / (d_model + d_k))
        v_std = math.sqrt(2.0 / (d_model + d_v))
        w_q = nrm((n_head * d_k, d_model), qk_std)               # torch layout (out, in)
        b_q = nrm((1, n_head * d_k))
        w_k = nrm((n_head * d_k, d_model), qk_std)
        b_k = nrm((1, n_head * d_k))
        w_v = nrm((n_head * d_v, d_model), v_std)
        b_v = nrm((1, n_head * d_v))
        fc = nrm((d_model, n_head * d_v))
        b_o = nrm((1, d_model))
        return dict(
            wq=(w_q.T * inv_temp).astype(jnp.bfloat16),          # (D, H*dk), scale folded
            bq=b_q * inv_temp,
            wkv=jnp.concatenate([w_k.T, w_v.T], axis=1).astype(jnp.bfloat16),
            bkv=jnp.concatenate([b_k, b_v], axis=1),
            wo=fc.T.astype(jnp.bfloat16),                        # (H*dv, D)
            bo=b_o,
            ln_g=jnp.ones((1, d_model), jnp.float32),
            ln_b=jnp.zeros((1, d_model), jnp.float32),
        )

    def ffn_params():
        w1 = nrm((d_inner, d_model))        # Conv1d(d_in, d_hid, 1) folded into a matmul
        b1 = nrm((1, d_inner))
        w2 = nrm((d_model, d_inner))
        b2 = nrm((1, d_model))
        return dict(
            w1=w1.T.astype(jnp.bfloat16),                        # (D, d_inner)
            b1=b1,
            w2=w2.T.astype(jnp.bfloat16),                        # (d_inner, D)
            b2=b2,
            ln_g=jnp.ones((1, d_model), jnp.float32),
            ln_b=jnp.zeros((1, d_model), jnp.float32),
        )

    params["enc_layers"] = [dict(slf=mha_params(), ffn=ffn_params())
                            for _ in range(n_layers)]
    params["dec_layers"] = [dict(slf=mha_params(), enc=mha_params(), ffn=ffn_params())
                            for _ in range(n_layers)]
    params["tgt_prj_w"] = nrm((vocab_size, d_model)).T.astype(jnp.bfloat16)  # (D,V), no bias
    return params


# ----------------------------------------------------------------------------
if __name__ == "__main__":
    vocab_size = 64
    d_word_vec = 128
    d_model = 128           # lane-dense (multiple of 128)
    n_head = 4
    n_layers = 2
    B, Ls, Lt = 2, 8, 8

    root = jax.random.PRNGKey(0)
    kp, ks, kt = jax.random.split(root, 3)
    params = init_params(kp, vocab_size, d_word_vec, n_layers, d_model, n_head)

    # tokens in [1, vocab); one PAD at the end of each src row to exercise masking
    src_seq = jax.random.randint(ks, (B, Ls), 1, vocab_size, dtype=jnp.int32)
    src_seq = src_seq.at[:, -1].set(PAD)
    tgt_seq = jax.random.randint(kt, (B, Lt), 1, vocab_size, dtype=jnp.int32)

    fwd = jax.jit(partial(transformer_decoder_forward, n_head=n_head, d_model=d_model))
    logits = fwd(params, tgt_seq, src_seq)
    jax.block_until_ready(logits)

    assert logits.shape == (B, Lt, vocab_size)
    assert bool(jnp.all(jnp.isfinite(logits)))
    print("KERNEL_OK")
</pallas_src>

<mosaic_0001>
module attributes {stable_mosaic.version = 11 : i64} {
  func.func @embed_proj_kernel(%arg0: i32, %arg1: i32, %arg2: memref<1x8x384xbf16, #tpu.memory_space<vmem>>, %arg3: memref<8x128xf32, #tpu.memory_space<vmem>>, %arg4: memref<384x128xbf16, #tpu.memory_space<vmem>>, %arg5: memref<1x128xf32, #tpu.memory_space<vmem>>, %arg6: memref<1x8x128xbf16, #tpu.memory_space<vmem>>) attributes {dimension_semantics = [#tpu.dimension_semantics<parallel>, #tpu.dimension_semantics<parallel>], iteration_bounds = array<i64: 2, 1>, scalar_prefetch = 0 : i64, scratch_operands = 0 : i64, tpu.core_type = #tpu.core_type<tc>, window_params = [{transform_indices = @transform_0, window_bounds = array<i64: 1, 8, 384>}, {transform_indices = @transform_1, window_bounds = array<i64: 8, 128>}, {pipeline_mode = #tpu.pipeline_mode<synchronous>, transform_indices = @transform_2, window_bounds = array<i64: 384, 128>}, {pipeline_mode = #tpu.pipeline_mode<synchronous>, transform_indices = @transform_3, window_bounds = array<i64: 1, 128>}, {transform_indices = @transform_4, window_bounds = array<i64: 1, 8, 128>}]} {
    %c0 = arith.constant 0 : index
    %c0_0 = arith.constant 0 : index
    %c0_1 = arith.constant 0 : index
    %0 = vector.load %arg2[%c0, %c0_0, %c0_1] : memref<1x8x384xbf16, #tpu.memory_space<vmem>>, vector<1x8x384xbf16>
    %1 = vector.shape_cast %0 : vector<1x8x384xbf16> to vector<8x384xbf16>
    %c0_2 = arith.constant 0 : index
    %c0_3 = arith.constant 0 : index
    %2 = vector.load %arg4[%c0_2, %c0_3] : memref<384x128xbf16, #tpu.memory_space<vmem>>, vector<384x128xbf16>
    %cst = arith.constant dense<0.000000e+00> : vector<8x128xf32>
    %3 = tpu.matmul %1, %2, %cst {dimension_numbers = #tpu.dot_dimension_numbers<[1], [0], [0], [1], [0, 0, 1, 1], [], []>} : vector<8x384xbf16>, vector<384x128xbf16>, vector<8x128xf32> -> vector<8x128xf32>
    %c0_4 = arith.constant 0 : index
    %c0_5 = arith.constant 0 : index
    %4 = vector.load %arg5[%c0_4, %c0_5] : memref<1x128xf32, #tpu.memory_space<vmem>>, vector<1x128xf32>
    %5 = vector.broadcast %4 : vector<1x128xf32> to vector<8x128xf32>
    %6 = arith.addf %3, %5 : vector<8x128xf32>
    %c0_6 = arith.constant 0 : index
    %c0_7 = arith.constant 0 : index
    %7 = vector.load %arg3[%c0_6, %c0_7] : memref<8x128xf32, #tpu.memory_space<vmem>>, vector<8x128xf32>
    %8 = arith.addf %6, %7 : vector<8x128xf32>
    %9 = arith.truncf %8 : vector<8x128xf32> to vector<8x128xbf16>
    %c0_8 = arith.constant 0 : index
    %c0_9 = arith.constant 0 : index
    %c0_10 = arith.constant 0 : index
    %10 = vector.load %arg6[%c0_8, %c0_9, %c0_10] : memref<1x8x128xbf16, #tpu.memory_space<vmem>>, vector<1x8x128xbf16>
    %11 = vector.shape_cast %10 : vector<1x8x128xbf16> to vector<8x128xbf16>
    %12 = vector.shape_cast %9 : vector<8x128xbf16> to vector<1x8x128xbf16>
    tpu.vector_store %arg6[%c0_8, %c0_9, %c0_10], %12 {strides = array<i32>} : memref<1x8x128xbf16, #tpu.memory_space<vmem>>, vector<1x8x128xbf16>,
    return
  }
  func.func @transform_0(%arg0: i32, %arg1: i32) -> (i32, i32, i32) {
    %c0_i32 = arith.constant 0 : i32
    %c0_i32_0 = arith.constant 0 : i32
    return %arg0, %arg1, %c0_i32 : i32, i32, i32
  }
  func.func @transform_1(%arg0: i32, %arg1: i32) -> (i32, i32) {
    %c0_i32 = arith.constant 0 : i32
    %c0_i32_0 = arith.constant 0 : i32
    return %arg1, %c0_i32 : i32, i32
  }
  func.func @transform_2(%arg0: i32, %arg1: i32) -> (i32, i32) {
    %c0_i32 = arith.constant 0 : i32
    %c0_i32_0 = arith.constant 0 : i32
    %c0_i32_1 = arith.constant 0 : i32
    return %c0_i32, %c0_i32_0 : i32, i32
  }
  func.func @transform_3(%arg0: i32, %arg1: i32) -> (i32, i32) {
    %c0_i32 = arith.constant 0 : i32
    %c0_i32_0 = arith.constant 0 : i32
    %c0_i32_1 = arith.constant 0 : i32
    return %c0_i32, %c0_i32_0 : i32, i32
  }
  func.func @transform_4(%arg0: i32, %arg1: i32) -> (i32, i32, i32) {
    %c0_i32 = arith.constant 0 : i32
    %c0_i32_0 = arith.constant 0 : i32
    return %arg0, %arg1, %c0_i32 : i32, i32, i32
  }
}

module attributes {stable_mosaic.version = 11 : i64} {
  func.func @mha_kernel(%arg0: i32, %arg1: i32, %arg2: memref<1x8x128xbf16, #tpu.memory_space<vmem>>, %arg3: memref<1x8x128xbf16, #tpu.memory_space<vmem>>, %arg4: memref<1x1x8xf32, #tpu.memory_space<vmem>>, %arg5: memref<1x8x1xf32, #tpu.memory_space<vmem>>, %arg6: memref<128x128xbf16, #tpu.memory_space<vmem>>, %arg7: memref<1x128xf32, #tpu.memory_space<vmem>>, %arg8: memref<128x256xbf16, #tpu.memory_space<vmem>>, %arg9: memref<1x256xf32, #tpu.memory_space<vmem>>, %arg10: memref<128x128xbf16, #tpu.memory_space<vmem>>, %arg11: memref<1x128xf32, #tpu.memory_space<vmem>>, %arg12: memref<1x128xf32, #tpu.memory_space<vmem>>, %arg13: memref<1x128xf32, #tpu.memory_space<vmem>>, %arg14: memref<1x8x128xbf16, #tpu.memory_space<vmem>>) attributes {dimension_semantics = [#tpu.dimension_semantics<parallel>, #tpu.dimension_semantics<parallel>], iteration_bounds = array<i64: 2, 1>, scalar_prefetch = 0 : i64, scratch_operands = 0 : i64, tpu.core_type = #tpu.core_type<tc>, window_params = [{transform_indices = @transform_0, window_bounds = array<i64: 1, 8, 128>}, {transform_indices = @transform_1, window_bounds = array<i64: 1, 8, 128>}, {transform_indices = @transform_2, window_bounds = array<i64: 1, 1, 8>}, {transform_indices = @transform_3, window_bounds = array<i64: 1, 8, 1>}, {pipeline_mode = #tpu.pipeline_mode<synchronous>, transform_indices = @transform_4, window_bounds = array<i64: 128, 128>}, {pipeline_mode = #tpu.pipeline_mode<synchronous>, transform_indices = @transform_5, window_bounds = array<i64: 1, 128>}, {pipeline_mode = #tpu.pipeline_mode<synchronous>, transform_indices = @transform_6, window_bounds = array<i64: 128, 256>}, {pipeline_mode = #tpu.pipeline_mode<synchronous>, transform_indices = @transform_7, window_bounds = array<i64: 1, 256>}, {pipeline_mode = #tpu.pipeline_mode<synchronous>, transform_indices = @transform_8, window_bounds = array<i64: 128, 128>}, {pipeline_mode = #tpu.pipeline_mode<synchronous>, transform_indices = @transform_9, window_bounds = array<i64: 1, 128>}, {pipeline_mode = #tpu.pipeline_mode<synchronous>, transform_indices = @transform_10, window_bounds = array<i64: 1, 128>}, {pipeline_mode = #tpu.pipeline_mode<synchronous>, transform_indices = @transform_11, window_bounds = array<i64: 1, 128>}, {transform_indices = @transform_12, window_bounds = array<i64: 1, 8, 128>}]} {
    %c0 = arith.constant 0 : index
    %c0_0 = arith.constant 0 : index
    %c0_1 = arith.constant 0 : index
    %0 = vector.load %arg2[%c0, %c0_0, %c0_1] : memref<1x8x128xbf16, #tpu.memory_space<vmem>>, vector<1x8x128xbf16>
    %1 = vector.shape_cast %0 : vector<1x8x128xbf16> to vector<8x128xbf16>
    %c0_2 = arith.constant 0 : index
    %c0_3 = arith.constant 0 : index
    %c0_4 = arith.constant 0 : index
    %2 = vector.load %arg3[%c0_2, %c0_3, %c0_4] : memref<1x8x128xbf16, #tpu.memory_space<vmem>>, vector<1x8x128xbf16>
    %3 = vector.shape_cast %2 : vector<1x8x128xbf16> to vector<8x128xbf16>
    %4 = arith.extf %1 : vector<8x128xbf16> to vector<8x128xf32>
    %c0_5 = arith.constant 0 : index
    %c0_6 = arith.constant 0 : index
    %5 = vector.load %arg6[%c0_5, %c0_6] : memref<128x128xbf16, #tpu.memory_space<vmem>>, vector<128x128xbf16>
    %cst = arith.constant dense<0.000000e+00> : vector<8x128xf32>
    %6 = tpu.matmul %1, %5, %cst {dimension_numbers = #tpu.dot_dimension_numbers<[1], [0], [0], [1], [0, 0, 1, 1], [], []>} : vector<8x128xbf16>, vector<128x128xbf16>, vector<8x128xf32> -> vector<8x128xf32>
    %c0_7 = arith.constant 0 : index
    %c0_8 = arith.constant 0 : index
    %7 = vector.load %arg7[%c0_7, %c0_8] : memref<1x128xf32, #tpu.memory_space<vmem>>, vector<1x128xf32>
    %8 = vector.broadcast %7 : vector<1x128xf32> to vector<8x128xf32>
    %9 = arith.addf %6, %8 : vector<8x128xf32>
    %c0_9 = arith.constant 0 : index
    %c0_10 = arith.constant 0 : index
    %10 = vector.load %arg8[%c0_9, %c0_10] : memref<128x256xbf16, #tpu.memory_space<vmem>>, vector<128x256xbf16>
    %cst_11 = arith.constant dense<0.000000e+00> : vector<8x256xf32>
    %11 = tpu.matmul %3, %10, %cst_11 {dimension_numbers = #tpu.dot_dimension_numbers<[1], [0], [0], [1], [0, 0, 1, 1], [], []>} : vector<8x128xbf16>, vector<128x256xbf16>, vector<8x256xf32> -> vector<8x256xf32>
    %c0_12 = arith.constant 0 : index
    %c0_13 = arith.constant 0 : index
    %12 = vector.load %arg9[%c0_12, %c0_13] : memref<1x256xf32, #tpu.memory_space<vmem>>, vector<1x256xf32>
    %13 = vector.broadcast %12 : vector<1x256xf32> to vector<8x256xf32>
    %14 = arith.addf %11, %13 : vector<8x256xf32>
    %15 = vector.shape_cast %9 : vector<8x128xf32> to vector<8x4x32xf32>
    %16 = tpu.transpose %15, [1, 0, 2] : vector<8x4x32xf32> -> vector<4x8x32xf32>
    %17 = arith.truncf %16 : vector<4x8x32xf32> to vector<4x8x32xbf16>
    %18 = vector.extract_strided_slice %14 {offsets = [0, 0], sizes = [8, 128], strides = [1, 1]} : vector<8x256xf32> to vector<8x128xf32>
    %19 = vector.shape_cast %18 : vector<8x128xf32> to vector<8x4x32xf32>
    %20 = tpu.transpose %19, [1, 0, 2] : vector<8x4x32xf32> -> vector<4x8x32xf32>
    %21 = arith.truncf %20 : vector<4x8x32xf32> to vector<4x8x32xbf16>
    %22 = vector.extract_strided_slice %14 {offsets = [0, 128], sizes = [8, 128], strides = [1, 1]} : vector<8x256xf32> to vector<8x128xf32>
    %23 = vector.shape_cast %22 : vector<8x128xf32> to vector<8x4x32xf32>
    %24 = tpu.transpose %23, [1, 0, 2] : vector<8x4x32xf32> -> vector<4x8x32xf32>
    %25 = arith.truncf %24 : vector<4x8x32xf32> to vector<4x8x32xbf16>
    %c0_14 = arith.constant 0 : index
    %c0_15 = arith.constant 0 : index
    %c0_16 = arith.constant 0 : index
    %26 = vector.load %arg4[%c0_14, %c0_15, %c0_16] : memref<1x1x8xf32, #tpu.memory_space<vmem>>, vector<1x1x8xf32>
    %27 = vector.shape_cast %26 : vector<1x1x8xf32> to vector<1x8xf32>
    %cst_17 = arith.constant -1.000000e+09 : f32
    %28 = vector.broadcast %cst_17 : f32 to vector<1x8xf32>
    %29 = arith.mulf %27, %28 : vector<1x8xf32>
    "tpu.trace_start"() <{level = 10 : i32, message = "hqd,hkd->hqk"}> : () -> ()
    %cst_18 = arith.constant dense<0.000000e+00> : vector<4x8x8xf32>
    %30 = tpu.matmul %17, %21, %cst_18 {dimension_numbers = #tpu.dot_dimension_numbers<[2], [2], [1], [1], [0, 0, 0, 1, 1, 1], [0], [0]>} : vector<4x8x32xbf16>, vector<4x8x32xbf16>, vector<4x8x8xf32> -> vector<4x8x8xf32>
    "tpu.trace_stop"() : () -> ()
    %31 = vector.shape_cast %29 : vector<1x8xf32> to vector<1x1x8xf32>
    %32 = vector.broadcast %31 : vector<1x1x8xf32> to vector<4x8x8xf32>
    %33 = arith.addf %30, %32 : vector<4x8x8xf32>
    %cst_19 = arith.constant dense<0xFF800000> : vector<4x8xf32>
    %34 = vector.multi_reduction <maximumf>, %33, %cst_19 [2] : vector<4x8x8xf32> to vector<4x8xf32>
    %35 = vector.shape_cast %34 : vector<4x8xf32> to vector<4x8x1xf32>
    %36 = vector.broadcast %35 : vector<4x8x1xf32> to vector<4x8x8xf32>
    %37 = arith.subf %33, %36 : vector<4x8x8xf32>
    %38 = math.exp %37 : vector<4x8x8xf32>
    %cst_20 = arith.constant dense<0.000000e+00> : vector<4x8xf32>
    %39 = vector.multi_reduction <add>, %38, %cst_20 [2] : vector<4x8x8xf32> to vector<4x8xf32>
    %40 = vector.shape_cast %39 : vector<4x8xf32> to vector<4x8x1xf32>
    %41 = tpu.reciprocal %40 {approx = true} : vector<4x8x1xf32> -> vector<4x8x1xf32>
    %42 = vector.broadcast %41 : vector<4x8x1xf32> to vector<4x8x8xf32>
    %43 = arith.mulf %38, %42 : vector<4x8x8xf32>
    %44 = arith.truncf %43 : vector<4x8x8xf32> to vector<4x8x8xbf16>
    "tpu.trace_start"() <{level = 10 : i32, message = "hqk,hkd->hqd"}> : () -> ()
    %cst_21 = arith.constant dense<0.000000e+00> : vector<4x8x32xf32>
    %45 = tpu.matmul %44, %25, %cst_21 {dimension_numbers = #tpu.dot_dimension_numbers<[2], [1], [1], [2], [0, 0, 0, 1, 1, 2], [0], [0]>} : vector<4x8x8xbf16>, vector<4x8x32xbf16>, vector<4x8x32xf32> -> vector<4x8x32xf32>
    "tpu.trace_stop"() : () -> ()
    %46 = tpu.transpose %45, [1, 0, 2] : vector<4x8x32xf32> -> vector<8x4x32xf32>
    %47 = vector.shape_cast %46 : vector<8x4x32xf32> to vector<8x128xf32>
    %48 = arith.truncf %47 : vector<8x128xf32> to vector<8x128xbf16>
    %c0_22 = arith.constant 0 : index
    %c0_23 = arith.constant 0 : index
    %49 = vector.load %arg10[%c0_22, %c0_23] : memref<128x128xbf16, #tpu.memory_space<vmem>>, vector<128x128xbf16>
    %cst_24 = arith.constant dense<0.000000e+00> : vector<8x128xf32>
    %50 = tpu.matmul %48, %49, %cst_24 {dimension_numbers = #tpu.dot_dimension_numbers<[1], [0], [0], [1], [0, 0, 1, 1], [], []>} : vector<8x128xbf16>, vector<128x128xbf16>, vector<8x128xf32> -> vector<8x128xf32>
    %c0_25 = arith.constant 0 : index
    %c0_26 = arith.constant 0 : index
    %51 = vector.load %arg11[%c0_25, %c0_26] : memref<1x128xf32, #tpu.memory_space<vmem>>, vector<1x128xf32>
    %52 = vector.broadcast %51 : vector<1x128xf32> to vector<8x128xf32>
    %53 = arith.addf %50, %52 : vector<8x128xf32>
    %54 = arith.addf %53, %4 : vector<8x128xf32>
    %cst_27 = arith.constant dense<0.000000e+00> : vector<8xf32>
    %55 = vector.multi_reduction <add>, %54, %cst_27 [1] : vector<8x128xf32> to vector<8xf32>
    %56 = vector.shape_cast %55 : vector<8xf32> to vector<8x1xf32>
    %cst_28 = arith.constant 1.280000e+02 : f32
    %57 = vector.broadcast %cst_28 : f32 to vector<8x1xf32>
    %58 = arith.divf %56, %57 : vector<8x1xf32>
    %59 = vector.broadcast %58 : vector<8x1xf32> to vector<8x128xf32>
    %60 = arith.subf %54, %59 : vector<8x128xf32>
    %61 = arith.mulf %60, %60 : vector<8x128xf32>
    %cst_29 = arith.constant dense<0.000000e+00> : vector<8xf32>
    %62 = vector.multi_reduction <add>, %61, %cst_29 [1] : vector<8x128xf32> to vector<8xf32>
    %63 = vector.shape_cast %62 : vector<8xf32> to vector<8x1xf32>
    %cst_30 = arith.constant 1.280000e+02 : f32
    %64 = vector.broadcast %cst_30 : f32 to vector<8x1xf32>
    %65 = arith.divf %63, %64 : vector<8x1xf32>
    %66 = vector.broadcast %58 : vector<8x1xf32> to vector<8x128xf32>
    %67 = arith.subf %54, %66 : vector<8x128xf32>
    %cst_31 = arith.constant 9.99999974E-6 : f32
    %68 = vector.broadcast %cst_31 : f32 to vector<8x1xf32>
    %69 = arith.addf %65, %68 : vector<8x1xf32>
    %70 = math.rsqrt %69 : vector<8x1xf32>
    %71 = vector.broadcast %70 : vector<8x1xf32> to vector<8x128xf32>
    %72 = arith.mulf %67, %71 : vector<8x128xf32>
    %c0_32 = arith.constant 0 : index
    %c0_33 = arith.constant 0 : index
    %73 = vector.load %arg12[%c0_32, %c0_33] : memref<1x128xf32, #tpu.memory_space<vmem>>, vector<1x128xf32>
    %74 = vector.broadcast %73 : vector<1x128xf32> to vector<8x128xf32>
    %75 = arith.mulf %72, %74 : vector<8x128xf32>
    %c0_34 = arith.constant 0 : index
    %c0_35 = arith.constant 0 : index
    %76 = vector.load %arg13[%c0_34, %c0_35] : memref<1x128xf32, #tpu.memory_space<vmem>>, vector<1x128xf32>
    %77 = vector.broadcast %76 : vector<1x128xf32> to vector<8x128xf32>
    %78 = arith.addf %75, %77 : vector<8x128xf32>
    %c0_36 = arith.constant 0 : index
    %c0_37 = arith.constant 0 : index
    %c0_38 = arith.constant 0 : index
    %79 = vector.load %arg5[%c0_36, %c0_37, %c0_38] : memref<1x8x1xf32, #tpu.memory_space<vmem>>, vector<1x8x1xf32>
    %80 = vector.shape_cast %79 : vector<1x8x1xf32> to vector<8x1xf32>
    %81 = vector.broadcast %80 : vector<8x1xf32> to vector<8x128xf32>
    %82 = arith.mulf %78, %81 : vector<8x128xf32>
    %83 = arith.truncf %82 : vector<8x128xf32> to vector<8x128xbf16>
    %c0_39 = arith.constant 0 : index
    %c0_40 = arith.constant 0 : index
    %c0_41 = arith.constant 0 : index
    %84 = vector.load %arg14[%c0_39, %c0_40, %c0_41] : memref<1x8x128xbf16, #tpu.memory_space<vmem>>, vector<1x8x128xbf16>
    %85 = vector.shape_cast %84 : vector<1x8x128xbf16> to vector<8x128xbf16>
    %86 = vector.shape_cast %83 : vector<8x128xbf16> to vector<1x8x128xbf16>
    tpu.vector_store %arg14[%c0_39, %c0_40, %c0_41], %86 {strides = array<i32>} : memref<1x8x128xbf16, #tpu.memory_space<vmem>>, vector<1x8x128xbf16>,
    return
  }
  func.func @transform_0(%arg0: i32, %arg1: i32) -> (i32, i32, i32) {
    %c0_i32 = arith.constant 0 : i32
    %c0_i32_0 = arith.constant 0 : i32
    return %arg0, %arg1, %c0_i32 : i32, i32, i32
  }
  func.func @transform_1(%arg0: i32, %arg1: i32) -> (i32, i32, i32) {
    %c0_i32 = arith.constant 0 : i32
    %c0_i32_0 = arith.constant 0 : i32
    %c0_i32_1 = arith.constant 0 : i32
    return %arg0, %c0_i32, %c0_i32_0 : i32, i32, i32
  }
  func.func @transform_2(%arg0: i32, %arg1: i32) -> (i32, i32, i32) {
    %c0_i32 = arith.constant 0 : i32
    %c0_i32_0 = arith.constant 0 : i32
    %c0_i32_1 = arith.constant 0 : i32
    return %arg0, %c0_i32, %c0_i32_0 : i32, i32, i32
  }
  func.func @transform_3(%arg0: i32, %arg1: i32) -> (i32, i32, i32) {
    %c0_i32 = arith.constant 0 : i32
    %c0_i32_0 = arith.constant 0 : i32
    return %arg0, %arg1, %c0_i32 : i32, i32, i32
  }
  func.func @transform_4(%arg0: i32, %arg1: i32) -> (i32, i32) {
    %c0_i32 = arith.constant 0 : i32
    %c0_i32_0 = arith.constant 0 : i32
    %c0_i32_1 = arith.constant 0 : i32
    return %c0_i32, %c0_i32_0 : i32, i32
  }
  func.func @transform_5(%arg0: i32, %arg1: i32) -> (i32, i32) {
    %c0_i32 = arith.constant 0 : i32
    %c0_i32_0 = arith.constant 0 : i32
    %c0_i32_1 = arith.constant 0 : i32
    return %c0_i32, %c0_i32_0 : i32, i32
  }
  func.func @transform_6(%arg0: i32, %arg1: i32) -> (i32, i32) {
    %c0_i32 = arith.constant 0 : i32
    %c0_i32_0 = arith.constant 0 : i32
    %c0_i32_1 = arith.constant 0 : i32
    return %c0_i32, %c0_i32_0 : i32, i32
  }
  func.func @transform_7(%arg0: i32, %arg1: i32) -> (i32, i32) {
    %c0_i32 = arith.constant 0 : i32
    %c0_i32_0 = arith.constant 0 : i32
    %c0_i32_1 = arith.constant 0 : i32
    return %c0_i32, %c0_i32_0 : i32, i32
  }
  func.func @transform_8(%arg0: i32, %arg1: i32) -> (i32, i32) {
    %c0_i32 = arith.constant 0 : i32
    %c0_i32_0 = arith.constant 0 : i32
    %c0_i32_1 = arith.constant 0 : i32
    return %c0_i32, %c0_i32_0 : i32, i32
  }
  func.func @transform_9(%arg0: i32, %arg1: i32) -> (i32, i32) {
    %c0_i32 = arith.constant 0 : i32
    %c0_i32_0 = arith.constant 0 : i32
    %c0_i32_1 = arith.constant 0 : i32
    return %c0_i32, %c0_i32_0 : i32, i32
  }
  func.func @transform_10(%arg0: i32, %arg1: i32) -> (i32, i32) {
    %c0_i32 = arith.constant 0 : i32
    %c0_i32_0 = arith.constant 0 : i32
    %c0_i32_1 = arith.constant 0 : i32
    return %c0_i32, %c0_i32_0 : i32, i32
  }
  func.func @transform_11(%arg0: i32, %arg1: i32) -> (i32, i32) {
    %c0_i32 = arith.constant 0 : i32
    %c0_i32_0 = arith.constant 0 : i32
    %c0_i32_1 = arith.constant 0 : i32
    return %c0_i32, %c0_i32_0 : i32, i32
  }
  func.func @transform_12(%arg0: i32, %arg1: i32) -> (i32, i32, i32) {
    %c0_i32 = arith.constant 0 : i32
    %c0_i32_0 = arith.constant 0 : i32
    return %arg0, %arg1, %c0_i32 : i32, i32, i32
  }
}

module attributes {stable_mosaic.version = 11 : i64} {
  func.func @ffn_kernel(%arg0: i32, %arg1: i32, %arg2: memref<1x8x128xbf16, #tpu.memory_space<vmem>>, %arg3: memref<1x8x1xf32, #tpu.memory_space<vmem>>, %arg4: memref<128x512xbf16, #tpu.memory_space<vmem>>, %arg5: memref<1x512xf32, #tpu.memory_space<vmem>>, %arg6: memref<512x128xbf16, #tpu.memory_space<vmem>>, %arg7: memref<1x128xf32, #tpu.memory_space<vmem>>, %arg8: memref<1x128xf32, #tpu.memory_space<vmem>>, %arg9: memref<1x128xf32, #tpu.memory_space<vmem>>, %arg10: memref<1x8x128xbf16, #tpu.memory_space<vmem>>) attributes {dimension_semantics = [#tpu.dimension_semantics<parallel>, #tpu.dimension_semantics<parallel>], iteration_bounds = array<i64: 2, 1>, scalar_prefetch = 0 : i64, scratch_operands = 0 : i64, tpu.core_type = #tpu.core_type<tc>, window_params = [{transform_indices = @transform_0, window_bounds = array<i64: 1, 8, 128>}, {transform_indices = @transform_1, window_bounds = array<i64: 1, 8, 1>}, {pipeline_mode = #tpu.pipeline_mode<synchronous>, transform_indices = @transform_2, window_bounds = array<i64: 128, 512>}, {pipeline_mode = #tpu.pipeline_mode<synchronous>, transform_indices = @transform_3, window_bounds = array<i64: 1, 512>}, {pipeline_mode = #tpu.pipeline_mode<synchronous>, transform_indices = @transform_4, window_bounds = array<i64: 512, 128>}, {pipeline_mode = #tpu.pipeline_mode<synchronous>, transform_indices = @transform_5, window_bounds = array<i64: 1, 128>}, {pipeline_mode = #tpu.pipeline_mode<synchronous>, transform_indices = @transform_6, window_bounds = array<i64: 1, 128>}, {pipeline_mode = #tpu.pipeline_mode<synchronous>, transform_indices = @transform_7, window_bounds = array<i64: 1, 128>}, {transform_indices = @transform_8, window_bounds = array<i64: 1, 8, 128>}]} {
    %c0 = arith.constant 0 : index
    %c0_0 = arith.constant 0 : index
    %c0_1 = arith.constant 0 : index
    %0 = vector.load %arg2[%c0, %c0_0, %c0_1] : memref<1x8x128xbf16, #tpu.memory_space<vmem>>, vector<1x8x128xbf16>
    %1 = vector.shape_cast %0 : vector<1x8x128xbf16> to vector<8x128xbf16>
    %2 = arith.extf %1 : vector<8x128xbf16> to vector<8x128xf32>
    %c0_2 = arith.constant 0 : index
    %c0_3 = arith.constant 0 : index
    %3 = vector.load %arg4[%c0_2, %c0_3] : memref<128x512xbf16, #tpu.memory_space<vmem>>, vector<128x512xbf16>
    %cst = arith.constant dense<0.000000e+00> : vector<8x512xf32>
    %4 = tpu.matmul %1, %3, %cst {dimension_numbers = #tpu.dot_dimension_numbers<[1], [0], [0], [1], [0, 0, 1, 1], [], []>} : vector<8x128xbf16>, vector<128x512xbf16>, vector<8x512xf32> -> vector<8x512xf32>
    %c0_4 = arith.constant 0 : index
    %c0_5 = arith.constant 0 : index
    %5 = vector.load %arg5[%c0_4, %c0_5] : memref<1x512xf32, #tpu.memory_space<vmem>>, vector<1x512xf32>
    %6 = vector.broadcast %5 : vector<1x512xf32> to vector<8x512xf32>
    %7 = arith.addf %4, %6 : vector<8x512xf32>
    %cst_6 = arith.constant 0.000000e+00 : f32
    %8 = vector.broadcast %cst_6 : f32 to vector<8x512xf32>
    %9 = arith.maximumf %7, %8 : vector<8x512xf32>
    %10 = arith.truncf %9 : vector<8x512xf32> to vector<8x512xbf16>
    %c0_7 = arith.constant 0 : index
    %c0_8 = arith.constant 0 : index
    %11 = vector.load %arg6[%c0_7, %c0_8] : memref<512x128xbf16, #tpu.memory_space<vmem>>, vector<512x128xbf16>
    %cst_9 = arith.constant dense<0.000000e+00> : vector<8x128xf32>
    %12 = tpu.matmul %10, %11, %cst_9 {dimension_numbers = #tpu.dot_dimension_numbers<[1], [0], [0], [1], [0, 0, 1, 1], [], []>} : vector<8x512xbf16>, vector<512x128xbf16>, vector<8x128xf32> -> vector<8x128xf32>
    %c0_10 = arith.constant 0 : index
    %c0_11 = arith.constant 0 : index
    %13 = vector.load %arg7[%c0_10, %c0_11] : memref<1x128xf32, #tpu.memory_space<vmem>>, vector<1x128xf32>
    %14 = vector.broadcast %13 : vector<1x128xf32> to vector<8x128xf32>
    %15 = arith.addf %12, %14 : vector<8x128xf32>
    %16 = arith.addf %15, %2 : vector<8x128xf32>
    %cst_12 = arith.constant dense<0.000000e+00> : vector<8xf32>
    %17 = vector.multi_reduction <add>, %16, %cst_12 [1] : vector<8x128xf32> to vector<8xf32>
    %18 = vector.shape_cast %17 : vector<8xf32> to vector<8x1xf32>
    %cst_13 = arith.constant 1.280000e+02 : f32
    %19 = vector.broadcast %cst_13 : f32 to vector<8x1xf32>
    %20 = arith.divf %18, %19 : vector<8x1xf32>
    %21 = vector.broadcast %20 : vector<8x1xf32> to vector<8x128xf32>
    %22 = arith.subf %16, %21 : vector<8x128xf32>
    %23 = arith.mulf %22, %22 : vector<8x128xf32>
    %cst_14 = arith.constant dense<0.000000e+00> : vector<8xf32>
    %24 = vector.multi_reduction <add>, %23, %cst_14 [1] : vector<8x128xf32> to vector<8xf32>
    %25 = vector.shape_cast %24 : vector<8xf32> to vector<8x1xf32>
    %cst_15 = arith.constant 1.280000e+02 : f32
    %26 = vector.broadcast %cst_15 : f32 to vector<8x1xf32>
    %27 = arith.divf %25, %26 : vector<8x1xf32>
    %28 = vector.broadcast %20 : vector<8x1xf32> to vector<8x128xf32>
    %29 = arith.subf %16, %28 : vector<8x128xf32>
    %cst_16 = arith.constant 9.99999974E-6 : f32
    %30 = vector.broadcast %cst_16 : f32 to vector<8x1xf32>
    %31 = arith.addf %27, %30 : vector<8x1xf32>
    %32 = math.rsqrt %31 : vector<8x1xf32>
    %33 = vector.broadcast %32 : vector<8x1xf32> to vector<8x128xf32>
    %34 = arith.mulf %29, %33 : vector<8x128xf32>
    %c0_17 = arith.constant 0 : index
    %c0_18 = arith.constant 0 : index
    %35 = vector.load %arg8[%c0_17, %c0_18] : memref<1x128xf32, #tpu.memory_space<vmem>>, vector<1x128xf32>
    %36 = vector.broadcast %35 : vector<1x128xf32> to vector<8x128xf32>
    %37 = arith.mulf %34, %36 : vector<8x128xf32>
    %c0_19 = arith.constant 0 : index
    %c0_20 = arith.constant 0 : index
    %38 = vector.load %arg9[%c0_19, %c0_20] : memref<1x128xf32, #tpu.memory_space<vmem>>, vector<1x128xf32>
    %39 = vector.broadcast %38 : vector<1x128xf32> to vector<8x128xf32>
    %40 = arith.addf %37, %39 : vector<8x128xf32>
    %c0_21 = arith.constant 0 : index
    %c0_22 = arith.constant 0 : index
    %c0_23 = arith.constant 0 : index
    %41 = vector.load %arg3[%c0_21, %c0_22, %c0_23] : memref<1x8x1xf32, #tpu.memory_space<vmem>>, vector<1x8x1xf32>
    %42 = vector.shape_cast %41 : vector<1x8x1xf32> to vector<8x1xf32>
    %43 = vector.broadcast %42 : vector<8x1xf32> to vector<8x128xf32>
    %44 = arith.mulf %40, %43 : vector<8x128xf32>
    %45 = arith.truncf %44 : vector<8x128xf32> to vector<8x128xbf16>
    %c0_24 = arith.constant 0 : index
    %c0_25 = arith.constant 0 : index
    %c0_26 = arith.constant 0 : index
    %46 = vector.load %arg10[%c0_24, %c0_25, %c0_26] : memref<1x8x128xbf16, #tpu.memory_space<vmem>>, vector<1x8x128xbf16>
    %47 = vector.shape_cast %46 : vector<1x8x128xbf16> to vector<8x128xbf16>
    %48 = vector.shape_cast %45 : vector<8x128xbf16> to vector<1x8x128xbf16>
    tpu.vector_store %arg10[%c0_24, %c0_25, %c0_26], %48 {strides = array<i32>} : memref<1x8x128xbf16, #tpu.memory_space<vmem>>, vector<1x8x128xbf16>,
    return
  }
  func.func @transform_0(%arg0: i32, %arg1: i32) -> (i32, i32, i32) {
    %c0_i32 = arith.constant 0 : i32
    %c0_i32_0 = arith.constant 0 : i32
    return %arg0, %arg1, %c0_i32 : i32, i32, i32
  }
  func.func @transform_1(%arg0: i32, %arg1: i32) -> (i32, i32, i32) {
    %c0_i32 = arith.constant 0 : i32
    %c0_i32_0 = arith.constant 0 : i32
    return %arg0, %arg1, %c0_i32 : i32, i32, i32
  }
  func.func @transform_2(%arg0: i32, %arg1: i32) -> (i32, i32) {
    %c0_i32 = arith.constant 0 : i32
    %c0_i32_0 = arith.constant 0 : i32
    %c0_i32_1 = arith.constant 0 : i32
    return %c0_i32, %c0_i32_0 : i32, i32
  }
  func.func @transform_3(%arg0: i32, %arg1: i32) -> (i32, i32) {
    %c0_i32 = arith.constant 0 : i32
    %c0_i32_0 = arith.constant 0 : i32
    %c0_i32_1 = arith.constant 0 : i32
    return %c0_i32, %c0_i32_0 : i32, i32
  }
  func.func @transform_4(%arg0: i32, %arg1: i32) -> (i32, i32) {
    %c0_i32 = arith.constant 0 : i32
    %c0_i32_0 = arith.constant 0 : i32
    %c0_i32_1 = arith.constant 0 : i32
    return %c0_i32, %c0_i32_0 : i32, i32
  }
  func.func @transform_5(%arg0: i32, %arg1: i32) -> (i32, i32) {
    %c0_i32 = arith.constant 0 : i32
    %c0_i32_0 = arith.constant 0 : i32
    %c0_i32_1 = arith.constant 0 : i32
    return %c0_i32, %c0_i32_0 : i32, i32
  }
  func.func @transform_6(%arg0: i32, %arg1: i32) -> (i32, i32) {
    %c0_i32 = arith.constant 0 : i32
    %c0_i32_0 = arith.constant 0 : i32
    %c0_i32_1 = arith.constant 0 : i32
    return %c0_i32, %c0_i32_0 : i32, i32
  }
  func.func @transform_7(%arg0: i32, %arg1: i32) -> (i32, i32) {
    %c0_i32 = arith.constant 0 : i32
    %c0_i32_0 = arith.constant 0 : i32
    %c0_i32_1 = arith.constant 0 : i32
    return %c0_i32, %c0_i32_0 : i32, i32
  }
  func.func @transform_8(%arg0: i32, %arg1: i32) -> (i32, i32, i32) {
    %c0_i32 = arith.constant 0 : i32
    %c0_i32_0 = arith.constant 0 : i32
    return %arg0, %arg1, %c0_i32 : i32, i32, i32
  }
}

module attributes {stable_mosaic.version = 11 : i64} {
  func.func @mha_kernel(%arg0: i32, %arg1: i32, %arg2: memref<1x8x128xbf16, #tpu.memory_space<vmem>>, %arg3: memref<1x8x128xbf16, #tpu.memory_space<vmem>>, %arg4: memref<1x1x8xf32, #tpu.memory_space<vmem>>, %arg5: memref<1x8x1xf32, #tpu.memory_space<vmem>>, %arg6: memref<128x128xbf16, #tpu.memory_space<vmem>>, %arg7: memref<1x128xf32, #tpu.memory_space<vmem>>, %arg8: memref<128x256xbf16, #tpu.memory_space<vmem>>, %arg9: memref<1x256xf32, #tpu.memory_space<vmem>>, %arg10: memref<128x128xbf16, #tpu.memory_space<vmem>>, %arg11: memref<1x128xf32, #tpu.memory_space<vmem>>, %arg12: memref<1x128xf32, #tpu.memory_space<vmem>>, %arg13: memref<1x128xf32, #tpu.memory_space<vmem>>, %arg14: memref<1x8x128xbf16, #tpu.memory_space<vmem>>) attributes {dimension_semantics = [#tpu.dimension_semantics<parallel>, #tpu.dimension_semantics<parallel>], iteration_bounds = array<i64: 2, 1>, scalar_prefetch = 0 : i64, scratch_operands = 0 : i64, tpu.core_type = #tpu.core_type<tc>, window_params = [{transform_indices = @transform_0, window_bounds = array<i64: 1, 8, 128>}, {transform_indices = @transform_1, window_bounds = array<i64: 1, 8, 128>}, {transform_indices = @transform_2, window_bounds = array<i64: 1, 1, 8>}, {transform_indices = @transform_3, window_bounds = array<i64: 1, 8, 1>}, {pipeline_mode = #tpu.pipeline_mode<synchronous>, transform_indices = @transform_4, window_bounds = array<i64: 128, 128>}, {pipeline_mode = #tpu.pipeline_mode<synchronous>, transform_indices = @transform_5, window_bounds = array<i64: 1, 128>}, {pipeline_mode = #tpu.pipeline_mode<synchronous>, transform_indices = @transform_6, window_bounds = array<i64: 128, 256>}, {pipeline_mode = #tpu.pipeline_mode<synchronous>, transform_indices = @transform_7, window_bounds = array<i64: 1, 256>}, {pipeline_mode = #tpu.pipeline_mode<synchronous>, transform_indices = @transform_8, window_bounds = array<i64: 128, 128>}, {pipeline_mode = #tpu.pipeline_mode<synchronous>, transform_indices = @transform_9, window_bounds = array<i64: 1, 128>}, {pipeline_mode = #tpu.pipeline_mode<synchronous>, transform_indices = @transform_10, window_bounds = array<i64: 1, 128>}, {pipeline_mode = #tpu.pipeline_mode<synchronous>, transform_indices = @transform_11, window_bounds = array<i64: 1, 128>}, {transform_indices = @transform_12, window_bounds = array<i64: 1, 8, 128>}]} {
    %c0 = arith.constant 0 : index
    %c0_0 = arith.constant 0 : index
    %c0_1 = arith.constant 0 : index
    %0 = vector.load %arg2[%c0, %c0_0, %c0_1] : memref<1x8x128xbf16, #tpu.memory_space<vmem>>, vector<1x8x128xbf16>
    %1 = vector.shape_cast %0 : vector<1x8x128xbf16> to vector<8x128xbf16>
    %c0_2 = arith.constant 0 : index
    %c0_3 = arith.constant 0 : index
    %c0_4 = arith.constant 0 : index
    %2 = vector.load %arg3[%c0_2, %c0_3, %c0_4] : memref<1x8x128xbf16, #tpu.memory_space<vmem>>, vector<1x8x128xbf16>
    %3 = vector.shape_cast %2 : vector<1x8x128xbf16> to vector<8x128xbf16>
    %4 = arith.extf %1 : vector<8x128xbf16> to vector<8x128xf32>
    %c0_5 = arith.constant 0 : index
    %c0_6 = arith.constant 0 : index
    %5 = vector.load %arg6[%c0_5, %c0_6] : memref<128x128xbf16, #tpu.memory_space<vmem>>, vector<128x128xbf16>
    %cst = arith.constant dense<0.000000e+00> : vector<8x128xf32>
    %6 = tpu.matmul %1, %5, %cst {dimension_numbers = #tpu.dot_dimension_numbers<[1], [0], [0], [1], [0, 0, 1, 1], [], []>} : vector<8x128xbf16>, vector<128x128xbf16>, vector<8x128xf32> -> vector<8x128xf32>
    %c0_7 = arith.constant 0 : index
    %c0_8 = arith.constant 0 : index
    %7 = vector.load %arg7[%c0_7, %c0_8] : memref<1x128xf32, #tpu.memory_space<vmem>>, vector<1x128xf32>
    %8 = vector.broadcast %7 : vector<1x128xf32> to vector<8x128xf32>
    %9 = arith.addf %6, %8 : vector<8x128xf32>
    %c0_9 = arith.constant 0 : index
    %c0_10 = arith.constant 0 : index
    %10 = vector.load %arg8[%c0_9, %c0_10] : memref<128x256xbf16, #tpu.memory_space<vmem>>, vector<128x256xbf16>
    %cst_11 = arith.constant dense<0.000000e+00> : vector<8x256xf32>
    %11 = tpu.matmul %3, %10, %cst_11 {dimension_numbers = #tpu.dot_dimension_numbers<[1], [0], [0], [1], [0, 0, 1, 1], [], []>} : vector<8x128xbf16>, vector<128x256xbf16>, vector<8x256xf32> -> vector<8x256xf32>
    %c0_12 = arith.constant 0 : index
    %c0_13 = arith.constant 0 : index
    %12 = vector.load %arg9[%c0_12, %c0_13] : memref<1x256xf32, #tpu.memory_space<vmem>>, vector<1x256xf32>
    %13 = vector.broadcast %12 : vector<1x256xf32> to vector<8x256xf32>
    %14 = arith.addf %11, %13 : vector<8x256xf32>
    %15 = vector.shape_cast %9 : vector<8x128xf32> to vector<8x4x32xf32>
    %16 = tpu.transpose %15, [1, 0, 2] : vector<8x4x32xf32> -> vector<4x8x32xf32>
    %17 = arith.truncf %16 : vector<4x8x32xf32> to vector<4x8x32xbf16>
    %18 = vector.extract_strided_slice %14 {offsets = [0, 0], sizes = [8, 128], strides = [1, 1]} : vector<8x256xf32> to vector<8x128xf32>
    %19 = vector.shape_cast %18 : vector<8x128xf32> to vector<8x4x32xf32>
    %20 = tpu.transpose %19, [1, 0, 2] : vector<8x4x32xf32> -> vector<4x8x32xf32>
    %21 = arith.truncf %20 : vector<4x8x32xf32> to vector<4x8x32xbf16>
    %22 = vector.extract_strided_slice %14 {offsets = [0, 128], sizes = [8, 128], strides = [1, 1]} : vector<8x256xf32> to vector<8x128xf32>
    %23 = vector.shape_cast %22 : vector<8x128xf32> to vector<8x4x32xf32>
    %24 = tpu.transpose %23, [1, 0, 2] : vector<8x4x32xf32> -> vector<4x8x32xf32>
    %25 = arith.truncf %24 : vector<4x8x32xf32> to vector<4x8x32xbf16>
    %c0_14 = arith.constant 0 : index
    %c0_15 = arith.constant 0 : index
    %c0_16 = arith.constant 0 : index
    %26 = vector.load %arg4[%c0_14, %c0_15, %c0_16] : memref<1x1x8xf32, #tpu.memory_space<vmem>>, vector<1x1x8xf32>
    %27 = vector.shape_cast %26 : vector<1x1x8xf32> to vector<1x8xf32>
    %cst_17 = arith.constant -1.000000e+09 : f32
    %28 = vector.broadcast %cst_17 : f32 to vector<1x8xf32>
    %29 = arith.mulf %27, %28 : vector<1x8xf32>
    %c8_i32 = arith.constant 8 : i32
    %30 = arith.muli %arg1, %c8_i32 : i32
    %31 = tpu.iota {dimensions = array<i32: 0>} : vector<8x8xi32>
    %32 = vector.broadcast %30 : i32 to vector<8x8xi32>
    %33 = arith.addi %31, %32 : vector<8x8xi32>
    %34 = tpu.iota {dimensions = array<i32: 1>} : vector<8x8xi32>
    %35 = arith.cmpi sgt, %34, %33 : vector<8x8xi32>
    %cst_18 = arith.constant -1.000000e+09 : f32
    %cst_19 = arith.constant 0.000000e+00 : f32
    %36 = vector.broadcast %cst_18 : f32 to vector<8x8xf32>
    %37 = vector.broadcast %cst_19 : f32 to vector<8x8xf32>
    %38 = arith.select %35, %36, %37 : vector<8x8xi1>, vector<8x8xf32>
    %39 = vector.broadcast %29 : vector<1x8xf32> to vector<8x8xf32>
    %40 = arith.addf %39, %38 : vector<8x8xf32>
    "tpu.trace_start"() <{level = 10 : i32, message = "hqd,hkd->hqk"}> : () -> ()
    %cst_20 = arith.constant dense<0.000000e+00> : vector<4x8x8xf32>
    %41 = tpu.matmul %17, %21, %cst_20 {dimension_numbers = #tpu.dot_dimension_numbers<[2], [2], [1], [1], [0, 0, 0, 1, 1, 1], [0], [0]>} : vector<4x8x32xbf16>, vector<4x8x32xbf16>, vector<4x8x8xf32> -> vector<4x8x8xf32>
    "tpu.trace_stop"() : () -> ()
    %42 = vector.shape_cast %40 : vector<8x8xf32> to vector<1x8x8xf32>
    %43 = vector.broadcast %42 : vector<1x8x8xf32> to vector<4x8x8xf32>
    %44 = arith.addf %41, %43 : vector<4x8x8xf32>
    %cst_21 = arith.constant dense<0xFF800000> : vector<4x8xf32>
    %45 = vector.multi_reduction <maximumf>, %44, %cst_21 [2] : vector<4x8x8xf32> to vector<4x8xf32>
    %46 = vector.shape_cast %45 : vector<4x8xf32> to vector<4x8x1xf32>
    %47 = vector.broadcast %46 : vector<4x8x1xf32> to vector<4x8x8xf32>
    %48 = arith.subf %44, %47 : vector<4x8x8xf32>
    %49 = math.exp %48 : vector<4x8x8xf32>
    %cst_22 = arith.constant dense<0.000000e+00> : vector<4x8xf32>
    %50 = vector.multi_reduction <add>, %49, %cst_22 [2] : vector<4x8x8xf32> to vector<4x8xf32>
    %51 = vector.shape_cast %50 : vector<4x8xf32> to vector<4x8x1xf32>
    %52 = tpu.reciprocal %51 {approx = true} : vector<4x8x1xf32> -> vector<4x8x1xf32>
    %53 = vector.broadcast %52 : vector<4x8x1xf32> to vector<4x8x8xf32>
    %54 = arith.mulf %49, %53 : vector<4x8x8xf32>
    %55 = arith.truncf %54 : vector<4x8x8xf32> to vector<4x8x8xbf16>
    "tpu.trace_start"() <{level = 10 : i32, message = "hqk,hkd->hqd"}> : () -> ()
    %cst_23 = arith.constant dense<0.000000e+00> : vector<4x8x32xf32>
    %56 = tpu.matmul %55, %25, %cst_23 {dimension_numbers = #tpu.dot_dimension_numbers<[2], [1], [1], [2], [0, 0, 0, 1, 1, 2], [0], [0]>} : vector<4x8x8xbf16>, vector<4x8x32xbf16>, vector<4x8x32xf32> -> vector<4x8x32xf32>
    "tpu.trace_stop"() : () -> ()
    %57 = tpu.transpose %56, [1, 0, 2] : vector<4x8x32xf32> -> vector<8x4x32xf32>
    %58 = vector.shape_cast %57 : vector<8x4x32xf32> to vector<8x128xf32>
    %59 = arith.truncf %58 : vector<8x128xf32> to vector<8x128xbf16>
    %c0_24 = arith.constant 0 : index
    %c0_25 = arith.constant 0 : index
    %60 = vector.load %arg10[%c0_24, %c0_25] : memref<128x128xbf16, #tpu.memory_space<vmem>>, vector<128x128xbf16>
    %cst_26 = arith.constant dense<0.000000e+00> : vector<8x128xf32>
    %61 = tpu.matmul %59, %60, %cst_26 {dimension_numbers = #tpu.dot_dimension_numbers<[1], [0], [0], [1], [0, 0, 1, 1], [], []>} : vector<8x128xbf16>, vector<128x128xbf16>, vector<8x128xf32> -> vector<8x128xf32>
    %c0_27 = arith.constant 0 : index
    %c0_28 = arith.constant 0 : index
    %62 = vector.load %arg11[%c0_27, %c0_28] : memref<1x128xf32, #tpu.memory_space<vmem>>, vector<1x128xf32>
    %63 = vector.broadcast %62 : vector<1x128xf32> to vector<8x128xf32>
    %64 = arith.addf %61, %63 : vector<8x128xf32>
    %65 = arith.addf %64, %4 : vector<8x128xf32>
    %cst_29 = arith.constant dense<0.000000e+00> : vector<8xf32>
    %66 = vector.multi_reduction <add>, %65, %cst_29 [1] : vector<8x128xf32> to vector<8xf32>
    %67 = vector.shape_cast %66 : vector<8xf32> to vector<8x1xf32>
    %cst_30 = arith.constant 1.280000e+02 : f32
    %68 = vector.broadcast %cst_30 : f32 to vector<8x1xf32>
    %69 = arith.divf %67, %68 : vector<8x1xf32>
    %70 = vector.broadcast %69 : vector<8x1xf32> to vector<8x128xf32>
    %71 = arith.subf %65, %70 : vector<8x128xf32>
    %72 = arith.mulf %71, %71 : vector<8x128xf32>
    %cst_31 = arith.constant dense<0.000000e+00> : vector<8xf32>
    %73 = vector.multi_reduction <add>, %72, %cst_31 [1] : vector<8x128xf32> to vector<8xf32>
    %74 = vector.shape_cast %73 : vector<8xf32> to vector<8x1xf32>
    %cst_32 = arith.constant 1.280000e+02 : f32
    %75 = vector.broadcast %cst_32 : f32 to vector<8x1xf32>
    %76 = arith.divf %74, %75 : vector<8x1xf32>
    %77 = vector.broadcast %69 : vector<8x1xf32> to vector<8x128xf32>
    %78 = arith.subf %65, %77 : vector<8x128xf32>
    %cst_33 = arith.constant 9.99999974E-6 : f32
    %79 = vector.broadcast %cst_33 : f32 to vector<8x1xf32>
    %80 = arith.addf %76, %79 : vector<8x1xf32>
    %81 = math.rsqrt %80 : vector<8x1xf32>
    %82 = vector.broadcast %81 : vector<8x1xf32> to vector<8x128xf32>
    %83 = arith.mulf %78, %82 : vector<8x128xf32>
    %c0_34 = arith.constant 0 : index
    %c0_35 = arith.constant 0 : index
    %84 = vector.load %arg12[%c0_34, %c0_35] : memref<1x128xf32, #tpu.memory_space<vmem>>, vector<1x128xf32>
    %85 = vector.broadcast %84 : vector<1x128xf32> to vector<8x128xf32>
    %86 = arith.mulf %83, %85 : vector<8x128xf32>
    %c0_36 = arith.constant 0 : index
    %c0_37 = arith.constant 0 : index
    %87 = vector.load %arg13[%c0_36, %c0_37] : memref<1x128xf32, #tpu.memory_space<vmem>>, vector<1x128xf32>
    %88 = vector.broadcast %87 : vector<1x128xf32> to vector<8x128xf32>
    %89 = arith.addf %86, %88 : vector<8x128xf32>
    %c0_38 = arith.constant 0 : index
    %c0_39 = arith.constant 0 : index
    %c0_40 = arith.constant 0 : index
    %90 = vector.load %arg5[%c0_38, %c0_39, %c0_40] : memref<1x8x1xf32, #tpu.memory_space<vmem>>, vector<1x8x1xf32>
    %91 = vector.shape_cast %90 : vector<1x8x1xf32> to vector<8x1xf32>
    %92 = vector.broadcast %91 : vector<8x1xf32> to vector<8x128xf32>
    %93 = arith.mulf %89, %92 : vector<8x128xf32>
    %94 = arith.truncf %93 : vector<8x128xf32> to vector<8x128xbf16>
    %c0_41 = arith.constant 0 : index
    %c0_42 = arith.constant 0 : index
    %c0_43 = arith.constant 0 : index
    %95 = vector.load %arg14[%c0_41, %c0_42, %c0_43] : memref<1x8x128xbf16, #tpu.memory_space<vmem>>, vector<1x8x128xbf16>
    %96 = vector.shape_cast %95 : vector<1x8x128xbf16> to vector<8x128xbf16>
    %97 = vector.shape_cast %94 : vector<8x128xbf16> to vector<1x8x128xbf16>
    tpu.vector_store %arg14[%c0_41, %c0_42, %c0_43], %97 {strides = array<i32>} : memref<1x8x128xbf16, #tpu.memory_space<vmem>>, vector<1x8x128xbf16>,
    return
  }
  func.func @transform_0(%arg0: i32, %arg1: i32) -> (i32, i32, i32) {
    %c0_i32 = arith.constant 0 : i32
    %c0_i32_0 = arith.constant 0 : i32
    return %arg0, %arg1, %c0_i32 : i32, i32, i32
  }
  func.func @transform_1(%arg0: i32, %arg1: i32) -> (i32, i32, i32) {
    %c0_i32 = arith.constant 0 : i32
    %c0_i32_0 = arith.constant 0 : i32
    %c0_i32_1 = arith.constant 0 : i32
    return %arg0, %c0_i32, %c0_i32_0 : i32, i32, i32
  }
  func.func @transform_2(%arg0: i32, %arg1: i32) -> (i32, i32, i32) {
    %c0_i32 = arith.constant 0 : i32
    %c0_i32_0 = arith.constant 0 : i32
    %c0_i32_1 = arith.constant 0 : i32
    return %arg0, %c0_i32, %c0_i32_0 : i32, i32, i32
  }
  func.func @transform_3(%arg0: i32, %arg1: i32) -> (i32, i32, i32) {
    %c0_i32 = arith.constant 0 : i32
    %c0_i32_0 = arith.constant 0 : i32
    return %arg0, %arg1, %c0_i32 : i32, i32, i32
  }
  func.func @transform_4(%arg0: i32, %arg1: i32) -> (i32, i32) {
    %c0_i32 = arith.constant 0 : i32
    %c0_i32_0 = arith.constant 0 : i32
    %c0_i32_1 = arith.constant 0 : i32
    return %c0_i32, %c0_i32_0 : i32, i32
  }
  func.func @transform_5(%arg0: i32, %arg1: i32) -> (i32, i32) {
    %c0_i32 = arith.constant 0 : i32
    %c0_i32_0 = arith.constant 0 : i32
    %c0_i32_1 = arith.constant 0 : i32
    return %c0_i32, %c0_i32_0 : i32, i32
  }
  func.func @transform_6(%arg0: i32, %arg1: i32) -> (i32, i32) {
    %c0_i32 = arith.constant 0 : i32
    %c0_i32_0 = arith.constant 0 : i32
    %c0_i32_1 = arith.constant 0 : i32
    return %c0_i32, %c0_i32_0 : i32, i32
  }
  func.func @transform_7(%arg0: i32, %arg1: i32) -> (i32, i32) {
    %c0_i32 = arith.constant 0 : i32
    %c0_i32_0 = arith.constant 0 : i32
    %c0_i32_1 = arith.constant 0 : i32
    return %c0_i32, %c0_i32_0 : i32, i32
  }
  func.func @transform_8(%arg0: i32, %arg1: i32) -> (i32, i32) {
    %c0_i32 = arith.constant 0 : i32
    %c0_i32_0 = arith.constant 0 : i32
    %c0_i32_1 = arith.constant 0 : i32
    return %c0_i32, %c0_i32_0 : i32, i32
  }
  func.func @transform_9(%arg0: i32, %arg1: i32) -> (i32, i32) {
    %c0_i32 = arith.constant 0 : i32
    %c0_i32_0 = arith.constant 0 : i32
    %c0_i32_1 = arith.constant 0 : i32
    return %c0_i32, %c0_i32_0 : i32, i32
  }
  func.func @transform_10(%arg0: i32, %arg1: i32) -> (i32, i32) {
    %c0_i32 = arith.constant 0 : i32
    %c0_i32_0 = arith.constant 0 : i32
    %c0_i32_1 = arith.constant 0 : i32
    return %c0_i32, %c0_i32_0 : i32, i32
  }
  func.func @transform_11(%arg0: i32, %arg1: i32) -> (i32, i32) {
    %c0_i32 = arith.constant 0 : i32
    %c0_i32_0 = arith.constant 0 : i32
    %c0_i32_1 = arith.constant 0 : i32
    return %c0_i32, %c0_i32_0 : i32, i32
  }
  func.func @transform_12(%arg0: i32, %arg1: i32) -> (i32, i32, i32) {
    %c0_i32 = arith.constant 0 : i32
    %c0_i32_0 = arith.constant 0 : i32
    return %arg0, %arg1, %c0_i32 : i32, i32, i32
  }
}

module attributes {stable_mosaic.version = 11 : i64} {
  func.func @vocab_proj_kernel(%arg0: i32, %arg1: i32, %arg2: i32, %arg3: memref<1x8x128xbf16, #tpu.memory_space<vmem>>, %arg4: memref<128x64xbf16, #tpu.memory_space<vmem>>, %arg5: memref<1x8x64xf32, #tpu.memory_space<vmem>>) attributes {dimension_semantics = [#tpu.dimension_semantics<parallel>, #tpu.dimension_semantics<parallel>, #tpu.dimension_semantics<parallel>], iteration_bounds = array<i64: 2, 1, 1>, scalar_prefetch = 0 : i64, scratch_operands = 0 : i64, tpu.core_type = #tpu.core_type<tc>, window_params = [{transform_indices = @transform_0, window_bounds = array<i64: 1, 8, 128>}, {transform_indices = @transform_1, window_bounds = array<i64: 128, 64>}, {transform_indices = @transform_2, window_bounds = array<i64: 1, 8, 64>}]} {
    %c0 = arith.constant 0 : index
    %c0_0 = arith.constant 0 : index
    %c0_1 = arith.constant 0 : index
    %0 = vector.load %arg3[%c0, %c0_0, %c0_1] : memref<1x8x128xbf16, #tpu.memory_space<vmem>>, vector<1x8x128xbf16>
    %1 = vector.shape_cast %0 : vector<1x8x128xbf16> to vector<8x128xbf16>
    %c0_2 = arith.constant 0 : index
    %c0_3 = arith.constant 0 : index
    %2 = vector.load %arg4[%c0_2, %c0_3] : memref<128x64xbf16, #tpu.memory_space<vmem>>, vector<128x64xbf16>
    %cst = arith.constant dense<0.000000e+00> : vector<8x64xf32>
    %3 = tpu.matmul %1, %2, %cst {dimension_numbers = #tpu.dot_dimension_numbers<[1], [0], [0], [1], [0, 0, 1, 1], [], []>} : vector<8x128xbf16>, vector<128x64xbf16>, vector<8x64xf32> -> vector<8x64xf32>
    %c0_4 = arith.constant 0 : index
    %c0_5 = arith.constant 0 : index
    %c0_6 = arith.constant 0 : index
    %4 = vector.load %arg5[%c0_4, %c0_5, %c0_6] : memref<1x8x64xf32, #tpu.memory_space<vmem>>, vector<1x8x64xf32>
    %5 = vector.shape_cast %4 : vector<1x8x64xf32> to vector<8x64xf32>
    %6 = vector.shape_cast %3 : vector<8x64xf32> to vector<1x8x64xf32>
    tpu.vector_store %arg5[%c0_4, %c0_5, %c0_6], %6 {strides = array<i32>} : memref<1x8x64xf32, #tpu.memory_space<vmem>>, vector<1x8x64xf32>,
    return
  }
  func.func @transform_0(%arg0: i32, %arg1: i32, %arg2: i32) -> (i32, i32, i32) {
    %c0_i32 = arith.constant 0 : i32
    %c0_i32_0 = arith.constant 0 : i32
    return %arg0, %arg1, %c0_i32 : i32, i32, i32
  }
  func.func @transform_1(%arg0: i32, %arg1: i32, %arg2: i32) -> (i32, i32) {
    %c0_i32 = arith.constant 0 : i32
    %c0_i32_0 = arith.constant 0 : i32
    return %c0_i32, %arg2 : i32, i32
  }
  func.func @transform_2(%arg0: i32, %arg1: i32, %arg2: i32) -> (i32, i32, i32) {
    %c0_i32 = arith.constant 0 : i32
    return %arg0, %arg1, %arg2 : i32, i32, i32
  }
}

</mosaic_0001>

<llo_original>
// kernel: transformer_decoder_forward.13
$region0: #{transformer_decoder_forward.13}
  #allocation0 [shape = 'u32[]', space=smem, size = 0x4, offset = 0x4, fixed_abs, tag = 'smem constant byte address 0x4 - core index']
  #allocation1 [shape = 'u32[144,128]{1,0:T(1,128)}', space=vmem, size = 0x12000, scoped, tag = 'internal scratch']
  %s0 = inlined_call_operand.vmem [shape: bf16[2,8,384], index: 0, kind: input, shape index: {}]
  %s1 = inlined_call_operand.vmem [shape: f32[8,128], index: 1, kind: input, shape index: {}]
  %s2 = inlined_call_operand.vmem [shape: bf16[384,128], index: 2, kind: input, shape index: {}]
  %s3 = inlined_call_operand.vmem [shape: f32[1,128], index: 3, kind: input, shape index: {}]
  %s4 = inlined_call_operand.vmem [shape: bf16[2,8,128], index: 4, kind: output, shape index: {}]
  %s5 = sld [smem:[#allocation0]]
  $region49: #{transformer_decoder_forward.13} parent=0
    _
  %s7 = ssub.s32 1, %s5
  %s8 = scalar_select 0, %s7, %s5
  loop: start=0, step=1, limit=4
  $region2: #{transformer_decoder_forward.13} parent=0 // loop_pre_header
    _
  $region3: #{transformer_decoder_forward.13} parent=0 // loop_header
    %s10 = sphi 0, %s14
    %p11 = scmp.ge.s32.totalorder %s10, 4
    %s17 = sphi 0, %s29
    %s18 = sphi 0, %s25
    %s19 = sphi 0, %s17
    %s20 = sphi 0, %s18
    %s21 = sphi 0, %s19
    %s22 = sphi 0, %s20
    %s34 = sphi 0, %s36
    %s37 = sphi 0, %s34
    %s38 = sphi 0, %s37
    %s54 = sphi 0, %s38
    %s60 = sphi 0, %s62
    %s63 = sphi 0, %s60
    %s64 = sphi 0, %s63
    %s80 = sphi 0, %s64
    %s84 = sphi 0, %s84
    %s86 = sphi 0, %s84
    %s87 = sphi 0, %s86
    %s101 = sphi 0, %s87
    %s105 = sphi 0, %s105
    %s107 = sphi 0, %s105
    %s108 = sphi 0, %s107
    %s122 = sphi 0, %s108
    %s130 = sphi 0, %s132
    %s133 = sphi 0, %s130
    %s134 = sphi 0, %s133
    %s150 = sphi 0, %s134
  $region4: #{transformer_decoder_forward.13} parent=0 // loop_header_branch
    %13 = sbr.rel (%p11) target = $region8
  $region5: #{transformer_decoder_forward.13} parent=0 // loop_body
    %s15 = ssub.s32 %s10, 1
    %s16 = ssub.s32 %s10, 2
    %s23 = sadd.s32 1, %s18
    %p24 = scmp.ge.s32.totalorder %s23, 1
    %s25 = scalar_select %p24, 0, %s23
    %s26 = sadd.s32 1, %s17
    %s27 = scalar_select %p24, %s26, %s17
    %p28 = scmp.ge.s32.totalorder %s27, 2
    %s29 = scalar_select %p28, 0, %s27
    %s30 = ssub.s32 %s17, %s29
    %s31 = ssub.s32 %s18, %s25
    %s32 = sor.u32 %s30, %s31
    %p33 = scmp.eq.s32.totalorder %s32, 0
    %s35 = sadd.s32 %s34, 1
    %s36 = scalar_select %p33, %s34, %s35
    %p39 = pneg %p33
    %p40 = scmp.eq.s32.totalorder %s10, 1
    %p41 = por %p39, %p40
    %p42 = scmp.ne.s32.totalorder %s34, %s37
    %p43 = scmp.eq.s32.totalorder %s10, 0
    %p44 = por %p42, %p43
    %p45 = scmp.ne.s32.totalorder %s34, %s37
    %p46 = scmp.eq.s32.totalorder %s15, 1
    %p47 = por %p45, %p46
    %p48 = scmp.ne.s32.totalorder %s37, %s38
    %p49 = scmp.eq.s32.totalorder %s15, 0
    %p50 = por %p48, %p49
    %p51 = scmp.ne.s32.totalorder %s37, %s38
    %p52 = scmp.eq.s32.totalorder %s16, 1
    %p53 = por %p51, %p52
    %p55 = scmp.ne.s32.totalorder %s38, %s54
    %p56 = scmp.eq.s32.totalorder %s16, 0
    %p57 = por %p55, %p56
    %s58 = ssub.s32 %s18, %s25
    %p59 = scmp.eq.s32.totalorder %s58, 0
    %s61 = sadd.s32 %s60, 1
    %s62 = scalar_select %p59, %s60, %s61
    %p65 = pneg %p59
    %p66 = scmp.eq.s32.totalorder %s10, 1
    %p67 = por %p65, %p66
    %p68 = scmp.ne.s32.totalorder %s60, %s63
    %p69 = scmp.eq.s32.totalorder %s10, 0
    %p70 = por %p68, %p69
    %p71 = scmp.ne.s32.totalorder %s60, %s63
    %p72 = scmp.eq.s32.totalorder %s15, 1
    %p73 = por %p71, %p72
    %p74 = scmp.ne.s32.totalorder %s63, %s64
    %p75 = scmp.eq.s32.totalorder %s15, 0
    %p76 = por %p74, %p75
    %p77 = scmp.ne.s32.totalorder %s63, %s64
    %p78 = scmp.eq.s32.totalorder %s16, 1
    %p79 = por %p77, %p78
    %p81 = scmp.ne.s32.totalorder %s64, %s80
    %p82 = scmp.eq.s32.totalorder %s16, 0
    %p83 = por %p81, %p82
    %s85 = sadd.s32 %s84, 1
    %p88 = scmp.eq.s32.totalorder %s10, 1
    %p89 = scmp.ne.s32.totalorder %s84, %s86
    %p90 = scmp.eq.s32.totalorder %s10, 0
    %p91 = por %p89, %p90
    %p92 = scmp.ne.s32.totalorder %s84, %s86
    %p93 = scmp.eq.s32.totalorder %s15, 1
    %p94 = por %p92, %p93
    %p95 = scmp.ne.s32.totalorder %s86, %s87
    %p96 = scmp.eq.s32.totalorder %s15, 0
    %p97 = por %p95, %p96
    %p98 = scmp.ne.s32.totalorder %s86, %s87
    %p99 = scmp.eq.s32.totalorder %s16, 1
    %p100 = por %p98, %p99
    %p102 = scmp.ne.s32.totalorder %s87, %s101
    %p103 = scmp.eq.s32.totalorder %s16, 0
    %p104 = por %p102, %p103
    %s106 = sadd.s32 %s105, 1
    %p109 = scmp.eq.s32.totalorder %s10, 1
    %p110 = scmp.ne.s32.totalorder %s105, %s107
    %p111 = scmp.eq.s32.totalorder %s10, 0
    %p112 = por %p110, %p111
    %p113 = scmp.ne.s32.totalorder %s105, %s107
    %p114 = scmp.eq.s32.totalorder %s15, 1
    %p115 = por %p113, %p114
    %p116 = scmp.ne.s32.totalorder %s107, %s108
    %p117 = scmp.eq.s32.totalorder %s15, 0
    %p118 = por %p116, %p117
    %p119 = scmp.ne.s32.totalorder %s107, %s108
    %p120 = scmp.eq.s32.totalorder %s16, 1
    %p121 = por %p119, %p120
    %p123 = scmp.ne.s32.totalorder %s108, %s122
    %p124 = scmp.eq.s32.totalorder %s16, 0
    %p125 = por %p123, %p124
    %s126 = ssub.s32 %s17, %s29
    %s127 = ssub.s32 %s18, %s25
    %s128 = sor.u32 %s126, %s127
    %p129 = scmp.eq.s32.totalorder %s128, 0
    %s131 = sadd.s32 %s130, 1
    %s132 = scalar_select %p129, %s130, %s131
    %p135 = pneg %p129
    %p136 = scmp.eq.s32.totalorder %s10, 1
    %p137 = por %p135, %p136
    %p138 = scmp.ne.s32.totalorder %s130, %s133
    %p139 = scmp.eq.s32.totalorder %s10, 0
    %p140 = por %p138, %p139
    %p141 = scmp.ne.s32.totalorder %s130, %s133
    %p142 = scmp.eq.s32.totalorder %s15, 1
    %p143 = por %p141, %p142
    %p144 = scmp.ne.s32.totalorder %s133, %s134
    %p145 = scmp.eq.s32.totalorder %s15, 0
    %p146 = por %p144, %p145
    %p147 = scmp.ne.s32.totalorder %s133, %s134
    %p148 = scmp.eq.s32.totalorder %s16, 1
    %p149 = por %p147, %p148
    %p151 = scmp.ne.s32.totalorder %s134, %s150
    %p152 = scmp.eq.s32.totalorder %s16, 0
    %p153 = por %p151, %p152
    %p154 = scmp.le.s32.totalorder 1, %s10
    %p155 = scmp.lt.s32.totalorder %s10, 3
    %p156 = pnand %p154, %p155
    %p157 = pneg %p156
    // Predicated region
    $region9: #{transformer_decoder_forward.13} parent=5 // pred_check
      _
    $region10: #{transformer_decoder_forward.13} parent=5 // pred_check_branch
      %159 = sbr.rel (%p156) target = $region12
    $region11: #{transformer_decoder_forward.13} parent=5 // pred_region
      %s160 = ssub.s32 %s10, 1
      // Predicated region
      $region13: #{transformer_decoder_forward.13} parent=11 // pred_check
        %p161 = pneg %p76
      $region14: #{transformer_decoder_forward.13} parent=11 // pred_check_branch
        %163 = sbr.rel (%p161) target = $region16
      $region15: #{transformer_decoder_forward.13} parent=11 // pred_region
        %p164 = scmp.lt.s32.totalorder %s20, 0
        %s165 = scalar_select %p164, %s20, 0
        %s166 = smul.addr %s165, 8
        %s167 = scalar_lea.vmem %s1, %s166
      $region16: #{transformer_decoder_forward.13} parent=11 // pred_fallthru
        _
      // Predicated region
      $region17: #{transformer_decoder_forward.13} parent=11 // pred_check
        %p168 = pneg %p97
      $region18: #{transformer_decoder_forward.13} parent=11 // pred_check_branch
        %170 = sbr.rel (%p168) target = $region20
      $region19: #{transformer_decoder_forward.13} parent=11 // pred_region
        _
      $region20: #{transformer_decoder_forward.13} parent=11 // pred_fallthru
        _
      // Predicated region
      $region21: #{transformer_decoder_forward.13} parent=11 // pred_check
        %p171 = pneg %p118
      $region22: #{transformer_decoder_forward.13} parent=11 // pred_check_branch
        %173 = sbr.rel (%p171) target = $region24
      $region23: #{transformer_decoder_forward.13} parent=11 // pred_region
        _
      $region24: #{transformer_decoder_forward.13} parent=11 // pred_fallthru
        _
    $region12: #{transformer_decoder_forward.13} parent=5 // pred_fallthru
      _
    %p174 = scmp.lt.s32.totalorder %s10, 2
    // Predicated region
    $region25: #{transformer_decoder_forward.13} parent=5 // pred_check
      %p175 = pneg %p174
    $region26: #{transformer_decoder_forward.13} parent=5 // pred_check_branch
      %177 = sbr.rel (%p175) target = $region28
    $region27: #{transformer_decoder_forward.13} parent=5 // pred_region
      // Predicated region
      $region29: #{transformer_decoder_forward.13} parent=27 // pred_check
        %p178 = pneg %p44
      $region30: #{transformer_decoder_forward.13} parent=27 // pred_check_branch
        %180 = sbr.rel (%p178) target = $region32
      $region31: #{transformer_decoder_forward.13} parent=27 // pred_region
        %p181 = scmp.lt.s32.totalorder %s17, 1
        %s182 = scalar_select %p181, %s17, 1
        %p183 = scmp.lt.s32.totalorder %s18, 0
        %s184 = scalar_select %p183, %s18, 0
        %s185 = smul.addr %s184, 3
        %s186 = smul.addr %s182, 3
        %s187 = sadd.s32 %s185, %s186
        %s188 = smul.addr %s187, 4
        %s189 = scalar_lea.vmem %s0, %s188
      $region32: #{transformer_decoder_forward.13} parent=27 // pred_fallthru
        _
    $region28: #{transformer_decoder_forward.13} parent=5 // pred_fallthru
      _
    %p190 = scmp.le.s32.totalorder 1, %s10
    %p191 = scmp.lt.s32.totalorder %s10, 3
    %p192 = pnand %p190, %p191
    %p193 = pneg %p192
    // Predicated region
    $region33: #{transformer_decoder_forward.13} parent=5 // pred_check
      _
    $region34: #{transformer_decoder_forward.13} parent=5 // pred_check_branch
      %195 = sbr.rel (%p192) target = $region36
    $region35: #{transformer_decoder_forward.13} parent=5 // pred_region
      %s196 = ssub.s32 %s10, 1
      %p197 = scmp.lt.s32.totalorder %s19, 1
      %s198 = scalar_select %p197, %s19, 1
      %p199 = scmp.lt.s32.totalorder %s20, 0
      %s200 = scalar_select %p199, %s20, 0
      %s201 = smul.addr %s200, 3
      %s202 = smul.addr %s198, 3
      %s203 = sadd.s32 %s201, %s202
      %s204 = smul.addr %s203, 4
      %s205 = scalar_lea.vmem %s0, %s204
      %p206 = pneg %p50
      %p207 = pneg %p47
      %p208 = scmp.lt.s32.totalorder %s20, 0
      %s209 = scalar_select %p208, %s20, 0
      %s210 = smul.addr %s209, 8
      %s211 = scalar_lea.vmem %s1, %s210
      %p212 = pneg %p76
      %p213 = pneg %p73
      %p214 = pneg %p97
      %p215 = pneg %p94
      %p216 = pneg %p118
      %p217 = pneg %p115
      %p218 = pneg %p146
      %p219 = pneg %p143
      %p220 = scmp.lt.s32.totalorder %s19, 1
      %s221 = scalar_select %p220, %s19, 1
      %p222 = scmp.lt.s32.totalorder %s20, 0
      %s223 = scalar_select %p222, %s20, 0
      %s224 = sadd.s32 %s223, %s221
      %s225 = smul.addr %s224, 4
      %s226 = scalar_lea.vmem %s4, %s225
      %p227 = scmp.lt.s32.totalorder %s19, 1
      %s228 = scalar_select %p227, %s19, 1
      %p229 = scmp.lt.s32.totalorder %s20, 0
      %s230 = scalar_select %p229, %s20, 0
      %s231 = smul.addr %s230, 3
      %s232 = smul.addr %s228, 3
      %s233 = sadd.s32 %s231, %s232
      %s234 = smul.addr %s233, 4
      %s235 = scalar_lea.vmem %s0, %s234
      %p236 = scmp.lt.s32.totalorder %s20, 0
      %s237 = scalar_select %p236, %s20, 0
      %s238 = smul.addr %s237, 8
      %s239 = scalar_lea.vmem %s1, %s238
      %p240 = scmp.lt.s32.totalorder %s19, 1
      %s241 = scalar_select %p240, %s19, 1
      %p242 = scmp.lt.s32.totalorder %s20, 0
      %s243 = scalar_select %p242, %s20, 0
      %s244 = sadd.s32 %s243, %s241
      %s245 = smul.addr %s244, 4
      %s246 = scalar_lea.vmem %s4, %s245
      %v248 = vld [vmem:[%s235] sm:$0xff]
      %v249 = vld [vmem:[%s235 + $0x8] sm:$0xf]
      %v250 = vld [vmem:[%s2] sm:$0xf]
      %v251 = vld [vmem:[%s2 + $0x4] sm:$0xf]
      %v252 = vld [vmem:[%s2 + $0x8] sm:$0xf]
      %v253 = vld [vmem:[%s2 + $0xc] sm:$0xf]
      %v254 = vld [vmem:[%s2 + $0x10] sm:$0xf]
      %v255 = vld [vmem:[%s2 + $0x14] sm:$0xf]
      %v256 = vld [vmem:[%s2 + $0x18] sm:$0xf]
      %v257 = vld [vmem:[%s2 + $0x1c] sm:$0xf]
      %v258 = vld [vmem:[%s2 + $0x20] sm:$0xf]
      %v259 = vld [vmem:[%s2 + $0x24] sm:$0xf]
      %v260 = vld [vmem:[%s2 + $0x28] sm:$0xf]
      %v261 = vld [vmem:[%s2 + $0x2c] sm:$0xf]
      %v262 = vld [vmem:[%s2 + $0x30] sm:$0xf]
      %v263 = vld [vmem:[%s2 + $0x34] sm:$0xf]
      %v264 = vld [vmem:[%s2 + $0x38] sm:$0xf]
      %v265 = vld [vmem:[%s2 + $0x3c] sm:$0xf]
      %v266 = vld [vmem:[%s2 + $0x40] sm:$0xf]
      %v267 = vld [vmem:[%s2 + $0x44] sm:$0xf]
      %v268 = vld [vmem:[%s2 + $0x48] sm:$0xf]
      %v269 = vld [vmem:[%s2 + $0x4c] sm:$0xf]
      %v270 = vld [vmem:[%s2 + $0x50] sm:$0xf]
      %v271 = vld [vmem:[%s2 + $0x54] sm:$0xf]
      %v272 = vld [vmem:[%s2 + $0x58] sm:$0xf]
      %v273 = vld [vmem:[%s2 + $0x5c] sm:$0xf]
      %v274 = vld [vmem:[%s2 + $0x60] sm:$0xf]
      %v275 = vld [vmem:[%s2 + $0x64] sm:$0xf]
      %v276 = vld [vmem:[%s2 + $0x68] sm:$0xf]
      %v277 = vld [vmem:[%s2 + $0x6c] sm:$0xf]
      %v278 = vld [vmem:[%s2 + $0x70] sm:$0xf]
      %v279 = vld [vmem:[%s2 + $0x74] sm:$0xf]
      %v280 = vld [vmem:[%s2 + $0x78] sm:$0xf]
      %v281 = vld [vmem:[%s2 + $0x7c] sm:$0xf]
      %v282 = vld [vmem:[%s2 + $0x80] sm:$0xf]
      %v283 = vld [vmem:[%s2 + $0x84] sm:$0xf]
      %v284 = vld [vmem:[%s2 + $0x88] sm:$0xf]
      %v285 = vld [vmem:[%s2 + $0x8c] sm:$0xf]
      %v286 = vld [vmem:[%s2 + $0x90] sm:$0xf]
      %v287 = vld [vmem:[%s2 + $0x94] sm:$0xf]
      %v288 = vld [vmem:[%s2 + $0x98] sm:$0xf]
      %v289 = vld [vmem:[%s2 + $0x9c] sm:$0xf]
      %v290 = vld [vmem:[%s2 + $0xa0] sm:$0xf]
      %v291 = vld [vmem:[%s2 + $0xa4] sm:$0xf]
      %v292 = vld [vmem:[%s2 + $0xa8] sm:$0xf]
      %v293 = vld [vmem:[%s2 + $0xac] sm:$0xf]
      %v294 = vld [vmem:[%s2 + $0xb0] sm:$0xf]
      %v295 = vld [vmem:[%s2 + $0xb4] sm:$0xf]
      %v296 = vld [vmem:[%s2 + $0xb8] sm:$0xf]
      %v297 = vld [vmem:[%s2 + $0xbc] sm:$0xf]
      %v298 = vld [vmem:[%s3] sm:$0x1]
      %v300 = vlaneseq
      %v301 = vshrl.u32 %v300, 7
      %v302 = vsub.s32 0, %v301
      %v303 = vrot.slane %v298, %v302
      %v307 = vunpack.c.l.b16 %v248
      %v308 = vunpack.c.h.b16 %v248
      %v309 = vunpack.c.l.b16 %v249
      %v310 = vpack.c.b16 %v307, %v307
      %v311 = vpack.c.b16 %v308, %v308
      %v312 = vpack.c.b16 %v309, %v309
      %v364 = vunpack.c.l.b16 %v250
      %v365 = vunpack.c.l.b16 %v251
      %v366 = vunpack.c.l.b16 %v252
      %v367 = vunpack.c.l.b16 %v253
      %v368 = vunpack.c.l.b16 %v254
      %v369 = vunpack.c.l.b16 %v255
      %v370 = vunpack.c.l.b16 %v256
      %v371 = vunpack.c.l.b16 %v257
      %v372 = vunpack.c.l.b16 %v258
      %v373 = vunpack.c.l.b16 %v259
      %v374 = vunpack.c.l.b16 %v260
      %v375 = vunpack.c.l.b16 %v261
      %v376 = vunpack.c.l.b16 %v262
      %v377 = vunpack.c.l.b16 %v263
      %v378 = vunpack.c.l.b16 %v264
      %v379 = vunpack.c.l.b16 %v265
      %v380 = vunpack.c.l.b16 %v266
      %v381 = vunpack.c.l.b16 %v267
      %v382 = vunpack.c.l.b16 %v268
      %v383 = vunpack.c.l.b16 %v269
      %v384 = vunpack.c.l.b16 %v270
      %v385 = vunpack.c.l.b16 %v271
      %v386 = vunpack.c.l.b16 %v272
      %v387 = vunpack.c.l.b16 %v273
      %v388 = vunpack.c.l.b16 %v274
      %v389 = vunpack.c.l.b16 %v275
      %v390 = vunpack.c.l.b16 %v276
      %v391 = vunpack.c.l.b16 %v277
      %v392 = vunpack.c.l.b16 %v278
      %v393 = vunpack.c.l.b16 %v279
      %v394 = vunpack.c.l.b16 %v280
      %v395 = vunpack.c.l.b16 %v281
      %v396 = vunpack.c.l.b16 %v282
      %v397 = vunpack.c.l.b16 %v283
      %v398 = vunpack.c.l.b16 %v284
      %v399 = vunpack.c.l.b16 %v285
      %v400 = vunpack.c.l.b16 %v286
      %v401 = vunpack.c.l.b16 %v287
      %v402 = vunpack.c.l.b16 %v288
      %v403 = vunpack.c.l.b16 %v289
      %v404 = vunpack.c.l.b16 %v290
      %v405 = vunpack.c.l.b16 %v291
      %v406 = vunpack.c.l.b16 %v292
      %v407 = vunpack.c.l.b16 %v293
      %v408 = vunpack.c.l.b16 %v294
      %v409 = vunpack.c.l.b16 %v295
      %v410 = vunpack.c.l.b16 %v296
      %v411 = vunpack.c.l.b16 %v297
      %v412 = vpack.c.b16 %v365, %v364
      %v413 = vpack.c.b16 %v367, %v366
      %v414 = vpack.c.b16 %v369, %v368
      %v415 = vpack.c.b16 %v371, %v370
      %v416 = vpack.c.b16 %v373, %v372
      %v417 = vpack.c.b16 %v375, %v374
      %v418 = vpack.c.b16 %v377, %v376
      %v419 = vpack.c.b16 %v379, %v378
      %v420 = vpack.c.b16 %v381, %v380
      %v421 = vpack.c.b16 %v383, %v382
      %v422 = vpack.c.b16 %v385, %v384
      %v423 = vpack.c.b16 %v387, %v386
      %v424 = vpack.c.b16 %v389, %v388
      %v425 = vpack.c.b16 %v391, %v390
      %v426 = vpack.c.b16 %v393, %v392
      %v427 = vpack.c.b16 %v395, %v394
      %v428 = vpack.c.b16 %v397, %v396
      %v429 = vpack.c.b16 %v399, %v398
      %v430 = vpack.c.b16 %v401, %v400
      %v431 = vpack.c.b16 %v403, %v402
      %v432 = vpack.c.b16 %v405, %v404
      %v433 = vpack.c.b16 %v407, %v406
      %v434 = vpack.c.b16 %v409, %v408
      %v435 = vpack.c.b16 %v411, %v410
      %460 = vmatprep.subr.bf16.mxu0 0
      %461 = vmatpush1.bf16.msra.mxu0 %v412
      %462 = vmatprep.subr.bf16.mxu0 0
      %463 = vmatpush1.bf16.msra.mxu0 %v413
      %464 = vmatprep.subr.bf16.mxu0 0
      %465 = vmatpush1.bf16.msra.mxu0 %v414
      %466 = vmatprep.subr.bf16.mxu0 0
      %467 = vmatpush1.bf16.msra.mxu0 %v415
      %468 = vmatprep.subr.bf16.mxu0 0
      %469 = vmatpush1.bf16.msra.mxu0 %v416
      %470 = vmatprep.subr.bf16.mxu0 0
      %471 = vmatpush1.bf16.msra.mxu0 %v417
      %472 = vmatprep.subr.bf16.mxu0 0
      %473 = vmatpush1.bf16.msra.mxu0 %v418
      %474 = vmatprep.subr.bf16.mxu0 0
      %475 = vmatpush1.bf16.msra.mxu0 %v419
      %476 = vmatprep.subr.bf16.mxu0 0
      %477 = vmatpush1.bf16.msra.mxu0 %v420
      %478 = vmatprep.subr.bf16.mxu0 0
      %479 = vmatpush1.bf16.msra.mxu0 %v421
      %480 = vmatprep.subr.bf16.mxu0 0
      %481 = vmatpush1.bf16.msra.mxu0 %v422
      %482 = vmatprep.subr.bf16.mxu0 0
      %483 = vmatpush1.bf16.msra.mxu0 %v423
      %484 = vmatprep.subr.bf16.mxu0 0
      %485 = vmatpush1.bf16.msra.mxu0 %v424
      %486 = vmatprep.subr.bf16.mxu0 0
      %487 = vmatpush1.bf16.msra.mxu0 %v425
      %488 = vmatprep.subr.bf16.mxu0 0
      %489 = vmatpush1.bf16.msra.mxu0 %v426
      %490 = vmatprep.subr.bf16.mxu0 0
      %491 = vmatpush1.bf16.msra.mxu0 %v427
      %492 = vmatprep.mubr.bf16.mxu0 %v311
      %493 = vmatmul.mubr.bf16.gmra.mrb[0].mxu0 %v310
      %v494 = vpop.f32.mrb[0].mxu0
      %v495 = vadd.f32 %v303, %v494
      %v496 = vpop.f32.mrb[0].mxu0
      %v497 = vpop.f32.mrb[0].mxu0
      %v498 = vpop.f32.mrb[0].mxu0
      %499 = vdwg.mxu0
      %500 = vmatprep.subr.bf16.mxu0 0
      %501 = vmatpush1.bf16.msra.mxu0 %v428
      %502 = vmatprep.subr.bf16.mxu0 0
      %503 = vmatpush1.bf16.msra.mxu0 %v429
      %504 = vmatprep.subr.bf16.mxu0 0
      %505 = vmatpush1.bf16.msra.mxu0 %v430
      %506 = vmatprep.subr.bf16.mxu0 0
      %507 = vmatpush1.bf16.msra.mxu0 %v431
      %508 = vmatprep.subr.bf16.mxu0 0
      %509 = vmatpush1.bf16.msra.mxu0 %v432
      %510 = vmatprep.subr.bf16.mxu0 0
      %511 = vmatpush1.bf16.msra.mxu0 %v433
      %512 = vmatprep.subr.bf16.mxu0 0
      %513 = vmatpush1.bf16.msra.mxu0 %v434
      %514 = vmatprep.subr.bf16.mxu0 0
      %515 = vmatpush1.bf16.msra.mxu0 %v435
      %516 = vmatprep.subr.bf16.mxu0 0
      %517 = vmatpush1.bf16.msra.mxu0 0
      %518 = vmatprep.subr.bf16.mxu0 0
      %519 = vmatpush1.bf16.msra.mxu0 0
      %520 = vmatprep.subr.bf16.mxu0 0
      %521 = vmatpush1.bf16.msra.mxu0 0
      %522 = vmatprep.subr.bf16.mxu0 0
      %523 = vmatpush1.bf16.msra.mxu0 0
      %524 = vmatprep.subr.bf16.mxu0 0
      %525 = vmatpush1.bf16.msra.mxu0 0
      %526 = vmatprep.subr.bf16.mxu0 0
      %527 = vmatpush1.bf16.msra.mxu0 0
      %528 = vmatprep.subr.bf16.mxu0 0
      %529 = vmatpush1.bf16.msra.mxu0 0
      %530 = vmatprep.subr.bf16.mxu0 0
      %531 = vmatpush1.bf16.msra.mxu0 0
      %532 = vmatprep.mubr.bf16.mxu0 0
      %533 = vmatmul.mubr.bf16.gmra.mrb[0].mxu0 %v312
      %v534 = vpop.f32.mrb[0].mxu0
      %v535 = vadd.f32 %v495, %v534
      %v536 = vpop.f32.mrb[0].mxu0
      %v537 = vpop.f32.mrb[0].mxu0
      %v538 = vpop.f32.mrb[0].mxu0
      %539 = vdwg.mxu0
      %v540 = vld [vmem:[%s239] sm:$0xff]
      %v541 = vadd.f32 %v535, %v540
      %v542 = vpack.c.bf16 %v541, %v541
      %543 = vst [vmem:[%s246] sm:$0xf] %v542
      %p544 = scmp.lt.s32.totalorder %s19, 1
      %s545 = scalar_select %p544, %s19, 1
      %p546 = scmp.lt.s32.totalorder %s20, 0
      %s547 = scalar_select %p546, %s20, 0
      %s548 = sadd.s32 %s547, %s545
      %s549 = smul.addr %s548, 4
      %s550 = scalar_lea.vmem %s4, %s549
      // Predicated region
      $region37: #{transformer_decoder_forward.13} parent=35 // pred_check
        %p551 = pneg %p143
      $region38: #{transformer_decoder_forward.13} parent=35 // pred_check_branch
        %553 = sbr.rel (%p551) target = $region40
      $region39: #{transformer_decoder_forward.13} parent=35 // pred_region
        _
      $region40: #{transformer_decoder_forward.13} parent=35 // pred_fallthru
        _
    $region36: #{transformer_decoder_forward.13} parent=5 // pred_fallthru
      _
    %p554 = scmp.le.s32.totalorder 2, %s10
    // Predicated region
    $region41: #{transformer_decoder_forward.13} parent=5 // pred_check
      %p555 = pneg %p554
    $region42: #{transformer_decoder_forward.13} parent=5 // pred_check_branch
      %557 = sbr.rel (%p555) target = $region44
    $region43: #{transformer_decoder_forward.13} parent=5 // pred_region
      %s558 = ssub.s32 %s10, 2
      // Predicated region
      $region45: #{transformer_decoder_forward.13} parent=43 // pred_check
        %p559 = pneg %p149
      $region46: #{transformer_decoder_forward.13} parent=43 // pred_check_branch
        %561 = sbr.rel (%p559) target = $region48
      $region47: #{transformer_decoder_forward.13} parent=43 // pred_region
        %p562 = scmp.lt.s32.totalorder %s21, 1
        %s563 = scalar_select %p562, %s21, 1
        %p564 = scmp.lt.s32.totalorder %s22, 0
        %s565 = scalar_select %p564, %s22, 0
        %s566 = sadd.s32 %s565, %s563
        %s567 = smul.addr %s566, 4
        %s568 = scalar_lea.vmem %s4, %s567
      $region48: #{transformer_decoder_forward.13} parent=43 // pred_fallthru
        _
    $region44: #{transformer_decoder_forward.13} parent=5 // pred_fallthru
      _
  $region6: #{transformer_decoder_forward.13} parent=0 // loop_footer
    %s14 = sadd.s32 1, %s10
  $region7: #{transformer_decoder_forward.13} parent=0 // loop_footer_branch
    %9 = sbr.rel target = $region3
  $region8: #{transformer_decoder_forward.13} parent=0 // loop_exit
    _

// kernel: transformer_decoder_forward.14
$region0: #{transformer_decoder_forward.14}
  #allocation0 [shape = 'u32[]', space=smem, size = 0x4, offset = 0x4, fixed_abs, tag = 'smem constant byte address 0x4 - core index']
  #allocation1 [shape = 'u32[144,128]{1,0:T(1,128)}', space=vmem, size = 0x12000, scoped, tag = 'internal scratch']
  %s0 = inlined_call_operand.vmem [shape: bf16[2,8,128], index: 0, kind: input, shape index: {}, may-alias: {0,1}]
  %s1 = inlined_call_operand.vmem [shape: bf16[2,8,128], index: 1, kind: input, shape index: {}, may-alias: {0,1}]
  %s2 = inlined_call_operand.vmem [shape: f32[2,1,8], index: 2, kind: input, shape index: {}]
  %s3 = inlined_call_operand.vmem [shape: f32[2,8,1], index: 3, kind: input, shape index: {}]
  %s4 = inlined_call_operand.vmem [shape: bf16[128,128], index: 4, kind: input, shape index: {}]
  %s5 = inlined_call_operand.vmem [shape: f32[1,128], index: 5, kind: input, shape index: {}]
  %s6 = inlined_call_operand.vmem [shape: bf16[128,256], index: 6, kind: input, shape index: {}]
  %s7 = inlined_call_operand.vmem [shape: f32[1,256], index: 7, kind: input, shape index: {}]
  %s8 = inlined_call_operand.vmem [shape: bf16[128,128], index: 8, kind: input, shape index: {}]
  %s9 = inlined_call_operand.vmem [shape: f32[1,128], index: 9, kind: input, shape index: {}]
  %s10 = inlined_call_operand.vmem [shape: f32[1,128], index: 10, kind: input, shape index: {}]
  %s11 = inlined_call_operand.vmem [shape: f32[1,128], index: 11, kind: input, shape index: {}]
  %s12 = inlined_call_operand.vmem [shape: bf16[2,8,128], index: 12, kind: output, shape index: {}]
  %s13 = sld [smem:[#allocation0]]
  $region81: #{transformer_decoder_forward.14} parent=0
    _
  %s15 = ssub.s32 1, %s13
  %s16 = scalar_select 0, %s15, %s13
  loop: start=0, step=1, limit=4
  $region2: #{transformer_decoder_forward.14} parent=0 // loop_pre_header
    _
  $region3: #{transformer_decoder_forward.14} parent=0 // loop_header
    %s18 = sphi 0, %s22
    %p19 = scmp.ge.s32.totalorder %s18, 4
    %s25 = sphi 0, %s37
    %s26 = sphi 0, %s33
    %s27 = sphi 0, %s25
    %s28 = sphi 0, %s26
    %s29 = sphi 0, %s27
    %s30 = sphi 0, %s28
    %s42 = sphi 0, %s44
    %s45 = sphi 0, %s42
    %s46 = sphi 0, %s45
    %s62 = sphi 0, %s46
    %s68 = sphi 0, %s70
    %s71 = sphi 0, %s68
    %s72 = sphi 0, %s71
    %s88 = sphi 0, %s72
    %s94 = sphi 0, %s96
    %s97 = sphi 0, %s94
    %s98 = sphi 0, %s97
    %s114 = sphi 0, %s98
    %s122 = sphi 0, %s124
    %s125 = sphi 0, %s122
    %s126 = sphi 0, %s125
    %s142 = sphi 0, %s126
    %s146 = sphi 0, %s146
    %s148 = sphi 0, %s146
    %s149 = sphi 0, %s148
    %s163 = sphi 0, %s149
    %s167 = sphi 0, %s167
    %s169 = sphi 0, %s167
    %s170 = sphi 0, %s169
    %s184 = sphi 0, %s170
    %s188 = sphi 0, %s188
    %s190 = sphi 0, %s188
    %s191 = sphi 0, %s190
    %s205 = sphi 0, %s191
    %s209 = sphi 0, %s209
    %s211 = sphi 0, %s209
    %s212 = sphi 0, %s211
    %s226 = sphi 0, %s212
    %s230 = sphi 0, %s230
    %s232 = sphi 0, %s230
    %s233 = sphi 0, %s232
    %s247 = sphi 0, %s233
    %s251 = sphi 0, %s251
    %s253 = sphi 0, %s251
    %s254 = sphi 0, %s253
    %s268 = sphi 0, %s254
    %s272 = sphi 0, %s272
    %s274 = sphi 0, %s272
    %s275 = sphi 0, %s274
    %s289 = sphi 0, %s275
    %s293 = sphi 0, %s293
    %s295 = sphi 0, %s293
    %s296 = sphi 0, %s295
    %s310 = sphi 0, %s296
    %s318 = sphi 0, %s320
    %s321 = sphi 0, %s318
    %s322 = sphi 0, %s321
    %s338 = sphi 0, %s322
  $region4: #{transformer_decoder_forward.14} parent=0 // loop_header_branch
    %21 = sbr.rel (%p19) target = $region8
  $region5: #{transformer_decoder_forward.14} parent=0 // loop_body
    %s23 = ssub.s32 %s18, 1
    %s24 = ssub.s32 %s18, 2
    %s31 = sadd.s32 1, %s26
    %p32 = scmp.ge.s32.totalorder %s31, 1
    %s33 = scalar_select %p32, 0, %s31
    %s34 = sadd.s32 1, %s25
    %s35 = scalar_select %p32, %s34, %s25
    %p36 = scmp.ge.s32.totalorder %s35, 2
    %s37 = scalar_select %p36, 0, %s35
    %s38 = ssub.s32 %s25, %s37
    %s39 = ssub.s32 %s26, %s33
    %s40 = sor.u32 %s38, %s39
    %p41 = scmp.eq.s32.totalorder %s40, 0
    %s43 = sadd.s32 %s42, 1
    %s44 = scalar_select %p41, %s42, %s43
    %p47 = pneg %p41
    %p48 = scmp.eq.s32.totalorder %s18, 1
    %p49 = por %p47, %p48
    %p50 = scmp.ne.s32.totalorder %s42, %s45
    %p51 = scmp.eq.s32.totalorder %s18, 0
    %p52 = por %p50, %p51
    %p53 = scmp.ne.s32.totalorder %s42, %s45
    %p54 = scmp.eq.s32.totalorder %s23, 1
    %p55 = por %p53, %p54
    %p56 = scmp.ne.s32.totalorder %s45, %s46
    %p57 = scmp.eq.s32.totalorder %s23, 0
    %p58 = por %p56, %p57
    %p59 = scmp.ne.s32.totalorder %s45, %s46
    %p60 = scmp.eq.s32.totalorder %s24, 1
    %p61 = por %p59, %p60
    %p63 = scmp.ne.s32.totalorder %s46, %s62
    %p64 = scmp.eq.s32.totalorder %s24, 0
    %p65 = por %p63, %p64
    %s66 = ssub.s32 %s25, %s37
    %p67 = scmp.eq.s32.totalorder %s66, 0
    %s69 = sadd.s32 %s68, 1
    %s70 = scalar_select %p67, %s68, %s69
    %p73 = pneg %p67
    %p74 = scmp.eq.s32.totalorder %s18, 1
    %p75 = por %p73, %p74
    %p76 = scmp.ne.s32.totalorder %s68, %s71
    %p77 = scmp.eq.s32.totalorder %s18, 0
    %p78 = por %p76, %p77
    %p79 = scmp.ne.s32.totalorder %s68, %s71
    %p80 = scmp.eq.s32.totalorder %s23, 1
    %p81 = por %p79, %p80
    %p82 = scmp.ne.s32.totalorder %s71, %s72
    %p83 = scmp.eq.s32.totalorder %s23, 0
    %p84 = por %p82, %p83
    %p85 = scmp.ne.s32.totalorder %s71, %s72
    %p86 = scmp.eq.s32.totalorder %s24, 1
    %p87 = por %p85, %p86
    %p89 = scmp.ne.s32.totalorder %s72, %s88
    %p90 = scmp.eq.s32.totalorder %s24, 0
    %p91 = por %p89, %p90
    %s92 = ssub.s32 %s25, %s37
    %p93 = scmp.eq.s32.totalorder %s92, 0
    %s95 = sadd.s32 %s94, 1
    %s96 = scalar_select %p93, %s94, %s95
    %p99 = pneg %p93
    %p100 = scmp.eq.s32.totalorder %s18, 1
    %p101 = por %p99, %p100
    %p102 = scmp.ne.s32.totalorder %s94, %s97
    %p103 = scmp.eq.s32.totalorder %s18, 0
    %p104 = por %p102, %p103
    %p105 = scmp.ne.s32.totalorder %s94, %s97
    %p106 = scmp.eq.s32.totalorder %s23, 1
    %p107 = por %p105, %p106
    %p108 = scmp.ne.s32.totalorder %s97, %s98
    %p109 = scmp.eq.s32.totalorder %s23, 0
    %p110 = por %p108, %p109
    %p111 = scmp.ne.s32.totalorder %s97, %s98
    %p112 = scmp.eq.s32.totalorder %s24, 1
    %p113 = por %p111, %p112
    %p115 = scmp.ne.s32.totalorder %s98, %s114
    %p116 = scmp.eq.s32.totalorder %s24, 0
    %p117 = por %p115, %p116
    %s118 = ssub.s32 %s25, %s37
    %s119 = ssub.s32 %s26, %s33
    %s120 = sor.u32 %s118, %s119
    %p121 = scmp.eq.s32.totalorder %s120, 0
    %s123 = sadd.s32 %s122, 1
    %s124 = scalar_select %p121, %s122, %s123
    %p127 = pneg %p121
    %p128 = scmp.eq.s32.totalorder %s18, 1
    %p129 = por %p127, %p128
    %p130 = scmp.ne.s32.totalorder %s122, %s125
    %p131 = scmp.eq.s32.totalorder %s18, 0
    %p132 = por %p130, %p131
    %p133 = scmp.ne.s32.totalorder %s122, %s125
    %p134 = scmp.eq.s32.totalorder %s23, 1
    %p135 = por %p133, %p134
    %p136 = scmp.ne.s32.totalorder %s125, %s126
    %p137 = scmp.eq.s32.totalorder %s23, 0
    %p138 = por %p136, %p137
    %p139 = scmp.ne.s32.totalorder %s125, %s126
    %p140 = scmp.eq.s32.totalorder %s24, 1
    %p141 = por %p139, %p140
    %p143 = scmp.ne.s32.totalorder %s126, %s142
    %p144 = scmp.eq.s32.totalorder %s24, 0
    %p145 = por %p143, %p144
    %s147 = sadd.s32 %s146, 1
    %p150 = scmp.eq.s32.totalorder %s18, 1
    %p151 = scmp.ne.s32.totalorder %s146, %s148
    %p152 = scmp.eq.s32.totalorder %s18, 0
    %p153 = por %p151, %p152
    %p154 = scmp.ne.s32.totalorder %s146, %s148
    %p155 = scmp.eq.s32.totalorder %s23, 1
    %p156 = por %p154, %p155
    %p157 = scmp.ne.s32.totalorder %s148, %s149
    %p158 = scmp.eq.s32.totalorder %s23, 0
    %p159 = por %p157, %p158
    %p160 = scmp.ne.s32.totalorder %s148, %s149
    %p161 = scmp.eq.s32.totalorder %s24, 1
    %p162 = por %p160, %p161
    %p164 = scmp.ne.s32.totalorder %s149, %s163
    %p165 = scmp.eq.s32.totalorder %s24, 0
    %p166 = por %p164, %p165
    %s168 = sadd.s32 %s167, 1
    %p171 = scmp.eq.s32.totalorder %s18, 1
    %p172 = scmp.ne.s32.totalorder %s167, %s169
    %p173 = scmp.eq.s32.totalorder %s18, 0
    %p174 = por %p172, %p173
    %p175 = scmp.ne.s32.totalorder %s167, %s169
    %p176 = scmp.eq.s32.totalorder %s23, 1
    %p177 = por %p175, %p176
    %p178 = scmp.ne.s32.totalorder %s169, %s170
    %p179 = scmp.eq.s32.totalorder %s23, 0
    %p180 = por %p178, %p179
    %p181 = scmp.ne.s32.totalorder %s169, %s170
    %p182 = scmp.eq.s32.totalorder %s24, 1
    %p183 = por %p181, %p182
    %p185 = scmp.ne.s32.totalorder %s170, %s184
    %p186 = scmp.eq.s32.totalorder %s24, 0
    %p187 = por %p185, %p186
    %s189 = sadd.s32 %s188, 1
    %p192 = scmp.eq.s32.totalorder %s18, 1
    %p193 = scmp.ne.s32.totalorder %s188, %s190
    %p194 = scmp.eq.s32.totalorder %s18, 0
    %p195 = por %p193, %p194
    %p196 = scmp.ne.s32.totalorder %s188, %s190
    %p197 = scmp.eq.s32.totalorder %s23, 1
    %p198 = por %p196, %p197
    %p199 = scmp.ne.s32.totalorder %s190, %s191
    %p200 = scmp.eq.s32.totalorder %s23, 0
    %p201 = por %p199, %p200
    %p202 = scmp.ne.s32.totalorder %s190, %s191
    %p203 = scmp.eq.s32.totalorder %s24, 1
    %p204 = por %p202, %p203
    %p206 = scmp.ne.s32.totalorder %s191, %s205
    %p207 = scmp.eq.s32.totalorder %s24, 0
    %p208 = por %p206, %p207
    %s210 = sadd.s32 %s209, 1
    %p213 = scmp.eq.s32.totalorder %s18, 1
    %p214 = scmp.ne.s32.totalorder %s209, %s211
    %p215 = scmp.eq.s32.totalorder %s18, 0
    %p216 = por %p214, %p215
    %p217 = scmp.ne.s32.totalorder %s209, %s211
    %p218 = scmp.eq.s32.totalorder %s23, 1
    %p219 = por %p217, %p218
    %p220 = scmp.ne.s32.totalorder %s211, %s212
    %p221 = scmp.eq.s32.totalorder %s23, 0
    %p222 = por %p220, %p221
    %p223 = scmp.ne.s32.totalorder %s211, %s212
    %p224 = scmp.eq.s32.totalorder %s24, 1
    %p225 = por %p223, %p224
    %p227 = scmp.ne.s32.totalorder %s212, %s226
    %p228 = scmp.eq.s32.totalorder %s24, 0
    %p229 = por %p227, %p228
    %s231 = sadd.s32 %s230, 1
    %p234 = scmp.eq.s32.totalorder %s18, 1
    %p235 = scmp.ne.s32.totalorder %s230, %s232
    %p236 = scmp.eq.s32.totalorder %s18, 0
    %p237 = por %p235, %p236
    %p238 = scmp.ne.s32.totalorder %s230, %s232
    %p239 = scmp.eq.s32.totalorder %s23, 1
    %p240 = por %p238, %p239
    %p241 = scmp.ne.s32.totalorder %s232, %s233
    %p242 = scmp.eq.s32.totalorder %s23, 0
    %p243 = por %p241, %p242
    %p244 = scmp.ne.s32.totalorder %s232, %s233
    %p245 = scmp.eq.s32.totalorder %s24, 1
    %p246 = por %p244, %p245
    %p248 = scmp.ne.s32.totalorder %s233, %s247
    %p249 = scmp.eq.s32.totalorder %s24, 0
    %p250 = por %p248, %p249
    %s252 = sadd.s32 %s251, 1
    %p255 = scmp.eq.s32.totalorder %s18, 1
    %p256 = scmp.ne.s32.totalorder %s251, %s253
    %p257 = scmp.eq.s32.totalorder %s18, 0
    %p258 = por %p256, %p257
    %p259 = scmp.ne.s32.totalorder %s251, %s253
    %p260 = scmp.eq.s32.totalorder %s23, 1
    %p261 = por %p259, %p260
    %p262 = scmp.ne.s32.totalorder %s253, %s254
    %p263 = scmp.eq.s32.totalorder %s23, 0
    %p264 = por %p262, %p263
    %p265 = scmp.ne.s32.totalorder %s253, %s254
    %p266 = scmp.eq.s32.totalorder %s24, 1
    %p267 = por %p265, %p266
    %p269 = scmp.ne.s32.totalorder %s254, %s268
    %p270 = scmp.eq.s32.totalorder %s24, 0
    %p271 = por %p269, %p270
    %s273 = sadd.s32 %s272, 1
    %p276 = scmp.eq.s32.totalorder %s18, 1
    %p277 = scmp.ne.s32.totalorder %s272, %s274
    %p278 = scmp.eq.s32.totalorder %s18, 0
    %p279 = por %p277, %p278
    %p280 = scmp.ne.s32.totalorder %s272, %s274
    %p281 = scmp.eq.s32.totalorder %s23, 1
    %p282 = por %p280, %p281
    %p283 = scmp.ne.s32.totalorder %s274, %s275
    %p284 = scmp.eq.s32.totalorder %s23, 0
    %p285 = por %p283, %p284
    %p286 = scmp.ne.s32.totalorder %s274, %s275
    %p287 = scmp.eq.s32.totalorder %s24, 1
    %p288 = por %p286, %p287
    %p290 = scmp.ne.s32.totalorder %s275, %s289
    %p291 = scmp.eq.s32.totalorder %s24, 0
    %p292 = por %p290, %p291
    %s294 = sadd.s32 %s293, 1
    %p297 = scmp.eq.s32.totalorder %s18, 1
    %p298 = scmp.ne.s32.totalorder %s293, %s295
    %p299 = scmp.eq.s32.totalorder %s18, 0
    %p300 = por %p298, %p299
    %p301 = scmp.ne.s32.totalorder %s293, %s295
    %p302 = scmp.eq.s32.totalorder %s23, 1
    %p303 = por %p301, %p302
    %p304 = scmp.ne.s32.totalorder %s295, %s296
    %p305 = scmp.eq.s32.totalorder %s23, 0
    %p306 = por %p304, %p305
    %p307 = scmp.ne.s32.totalorder %s295, %s296
    %p308 = scmp.eq.s32.totalorder %s24, 1
    %p309 = por %p307, %p308
    %p311 = scmp.ne.s32.totalorder %s296, %s310
    %p312 = scmp.eq.s32.totalorder %s24, 0
    %p313 = por %p311, %p312
    %s314 = ssub.s32 %s25, %s37
    %s315 = ssub.s32 %s26, %s33
    %s316 = sor.u32 %s314, %s315
    %p317 = scmp.eq.s32.totalorder %s316, 0
    %s319 = sadd.s32 %s318, 1
    %s320 = scalar_select %p317, %s318, %s319
    %p323 = pneg %p317
    %p324 = scmp.eq.s32.totalorder %s18, 1
    %p325 = por %p323, %p324
    %p326 = scmp.ne.s32.totalorder %s318, %s321
    %p327 = scmp.eq.s32.totalorder %s18, 0
    %p328 = por %p326, %p327
    %p329 = scmp.ne.s32.totalorder %s318, %s321
    %p330 = scmp.eq.s32.totalorder %s23, 1
    %p331 = por %p329, %p330
    %p332 = scmp.ne.s32.totalorder %s321, %s322
    %p333 = scmp.eq.s32.totalorder %s23, 0
    %p334 = por %p332, %p333
    %p335 = scmp.ne.s32.totalorder %s321, %s322
    %p336 = scmp.eq.s32.totalorder %s24, 1
    %p337 = por %p335, %p336
    %p339 = scmp.ne.s32.totalorder %s322, %s338
    %p340 = scmp.eq.s32.totalorder %s24, 0
    %p341 = por %p339, %p340
    %p342 = scmp.le.s32.totalorder 1, %s18
    %p343 = scmp.lt.s32.totalorder %s18, 3
    %p344 = pnand %p342, %p343
    %p345 = pneg %p344
    // Predicated region
    $region9: #{transformer_decoder_forward.14} parent=5 // pred_check
      _
    $region10: #{transformer_decoder_forward.14} parent=5 // pred_check_branch
      %347 = sbr.rel (%p344) target = $region12
    $region11: #{transformer_decoder_forward.14} parent=5 // pred_region
      %s348 = ssub.s32 %s18, 1
      // Predicated region
      $region13: #{transformer_decoder_forward.14} parent=11 // pred_check
        %p349 = pneg %p159
      $region14: #{transformer_decoder_forward.14} parent=11 // pred_check_branch
        %351 = sbr.rel (%p349) target = $region16
      $region15: #{transformer_decoder_forward.14} parent=11 // pred_region
        _
      $region16: #{transformer_decoder_forward.14} parent=11 // pred_fallthru
        _
      // Predicated region
      $region17: #{transformer_decoder_forward.14} parent=11 // pred_check
        %p352 = pneg %p180
      $region18: #{transformer_decoder_forward.14} parent=11 // pred_check_branch
        %354 = sbr.rel (%p352) target = $region20
      $region19: #{transformer_decoder_forward.14} parent=11 // pred_region
        _
      $region20: #{transformer_decoder_forward.14} parent=11 // pred_fallthru
        _
      // Predicated region
      $region21: #{transformer_decoder_forward.14} parent=11 // pred_check
        %p355 = pneg %p201
      $region22: #{transformer_decoder_forward.14} parent=11 // pred_check_branch
        %357 = sbr.rel (%p355) target = $region24
      $region23: #{transformer_decoder_forward.14} parent=11 // pred_region
        _
      $region24: #{transformer_decoder_forward.14} parent=11 // pred_fallthru
        _
      // Predicated region
      $region25: #{transformer_decoder_forward.14} parent=11 // pred_check
        %p358 = pneg %p222
      $region26: #{transformer_decoder_forward.14} parent=11 // pred_check_branch
        %360 = sbr.rel (%p358) target = $region28
      $region27: #{transformer_decoder_forward.14} parent=11 // pred_region
        _
      $region28: #{transformer_decoder_forward.14} parent=11 // pred_fallthru
        _
      // Predicated region
      $region29: #{transformer_decoder_forward.14} parent=11 // pred_check
        %p361 = pneg %p243
      $region30: #{transformer_decoder_forward.14} parent=11 // pred_check_branch
        %363 = sbr.rel (%p361) target = $region32
      $region31: #{transformer_decoder_forward.14} parent=11 // pred_region
        _
      $region32: #{transformer_decoder_forward.14} parent=11 // pred_fallthru
        _
      // Predicated region
      $region33: #{transformer_decoder_forward.14} parent=11 // pred_check
        %p364 = pneg %p264
      $region34: #{transformer_decoder_forward.14} parent=11 // pred_check_branch
        %366 = sbr.rel (%p364) target = $region36
      $region35: #{transformer_decoder_forward.14} parent=11 // pred_region
        _
      $region36: #{transformer_decoder_forward.14} parent=11 // pred_fallthru
        _
      // Predicated region
      $region37: #{transformer_decoder_forward.14} parent=11 // pred_check
        %p367 = pneg %p285
      $region38: #{transformer_decoder_forward.14} parent=11 // pred_check_branch
        %369 = sbr.rel (%p367) target = $region40
      $region39: #{transformer_decoder_forward.14} parent=11 // pred_region
        _
      $region40: #{transformer_decoder_forward.14} parent=11 // pred_fallthru
        _
      // Predicated region
      $region41: #{transformer_decoder_forward.14} parent=11 // pred_check
        %p370 = pneg %p306
      $region42: #{transformer_decoder_forward.14} parent=11 // pred_check_branch
        %372 = sbr.rel (%p370) target = $region44
      $region43: #{transformer_decoder_forward.14} parent=11 // pred_region
        _
      $region44: #{transformer_decoder_forward.14} parent=11 // pred_fallthru
        _
    $region12: #{transformer_decoder_forward.14} parent=5 // pred_fallthru
      _
    %p373 = scmp.lt.s32.totalorder %s18, 2
    // Predicated region
    $region45: #{transformer_decoder_forward.14} parent=5 // pred_check
      %p374 = pneg %p373
    $region46: #{transformer_decoder_forward.14} parent=5 // pred_check_branch
      %376 = sbr.rel (%p374) target = $region48
    $region47: #{transformer_decoder_forward.14} parent=5 // pred_region
      // Predicated region
      $region49: #{transformer_decoder_forward.14} parent=47 // pred_check
        %p377 = pneg %p52
      $region50: #{transformer_decoder_forward.14} parent=47 // pred_check_branch
        %379 = sbr.rel (%p377) target = $region52
      $region51: #{transformer_decoder_forward.14} parent=47 // pred_region
        %p380 = scmp.lt.s32.totalorder %s25, 1
        %s381 = scalar_select %p380, %s25, 1
        %p382 = scmp.lt.s32.totalorder %s26, 0
        %s383 = scalar_select %p382, %s26, 0
        %s384 = sadd.s32 %s383, %s381
        %s385 = smul.addr %s384, 4
        %s386 = scalar_lea.vmem %s0, %s385
      $region52: #{transformer_decoder_forward.14} parent=47 // pred_fallthru
        _
      // Predicated region
      $region53: #{transformer_decoder_forward.14} parent=47 // pred_check
        %p387 = pneg %p78
      $region54: #{transformer_decoder_forward.14} parent=47 // pred_check_branch
        %389 = sbr.rel (%p387) target = $region56
      $region55: #{transformer_decoder_forward.14} parent=47 // pred_region
        %p390 = scmp.lt.s32.totalorder %s25, 1
        %s391 = scalar_select %p390, %s25, 1
        %s392 = smul.addr %s391, 4
        %s393 = scalar_lea.vmem %s1, %s392
      $region56: #{transformer_decoder_forward.14} parent=47 // pred_fallthru
        _
      // Predicated region
      $region57: #{transformer_decoder_forward.14} parent=47 // pred_check
        %p394 = pneg %p104
      $region58: #{transformer_decoder_forward.14} parent=47 // pred_check_branch
        %396 = sbr.rel (%p394) target = $region60
      $region59: #{transformer_decoder_forward.14} parent=47 // pred_region
        %p397 = scmp.lt.s32.totalorder %s25, 1
        %s398 = scalar_select %p397, %s25, 1
        %s399 = scalar_lea.vmem %s2, %s398
      $region60: #{transformer_decoder_forward.14} parent=47 // pred_fallthru
        _
      // Predicated region
      $region61: #{transformer_decoder_forward.14} parent=47 // pred_check
        %p400 = pneg %p132
      $region62: #{transformer_decoder_forward.14} parent=47 // pred_check_branch
        %402 = sbr.rel (%p400) target = $region64
      $region63: #{transformer_decoder_forward.14} parent=47 // pred_region
        %p403 = scmp.lt.s32.totalorder %s25, 1
        %s404 = scalar_select %p403, %s25, 1
        %p405 = scmp.lt.s32.totalorder %s26, 0
        %s406 = scalar_select %p405, %s26, 0
        %s407 = sadd.s32 %s406, %s404
        %s408 = smul.addr %s407, 8
        %s409 = scalar_lea.vmem %s3, %s408
      $region64: #{transformer_decoder_forward.14} parent=47 // pred_fallthru
        _
    $region48: #{transformer_decoder_forward.14} parent=5 // pred_fallthru
      _
    %p410 = scmp.le.s32.totalorder 1, %s18
    %p411 = scmp.lt.s32.totalorder %s18, 3
    %p412 = pnand %p410, %p411
    %p413 = pneg %p412
    // Predicated region
    $region65: #{transformer_decoder_forward.14} parent=5 // pred_check
      _
    $region66: #{transformer_decoder_forward.14} parent=5 // pred_check_branch
      %415 = sbr.rel (%p412) target = $region68
    $region67: #{transformer_decoder_forward.14} parent=5 // pred_region
      %s416 = ssub.s32 %s18, 1
      %p417 = scmp.lt.s32.totalorder %s27, 1
      %s418 = scalar_select %p417, %s27, 1
      %p419 = scmp.lt.s32.totalorder %s28, 0
      %s420 = scalar_select %p419, %s28, 0
      %s421 = sadd.s32 %s420, %s418
      %s422 = smul.addr %s421, 4
      %s423 = scalar_lea.vmem %s0, %s422
      %p424 = pneg %p58
      %p425 = pneg %p55
      %p426 = scmp.lt.s32.totalorder %s27, 1
      %s427 = scalar_select %p426, %s27, 1
      %s428 = smul.addr %s427, 4
      %s429 = scalar_lea.vmem %s1, %s428
      %p430 = pneg %p84
      %p431 = pneg %p81
      %p432 = scmp.lt.s32.totalorder %s27, 1
      %s433 = scalar_select %p432, %s27, 1
      %s434 = scalar_lea.vmem %s2, %s433
      %p435 = pneg %p110
      %p436 = pneg %p107
      %p437 = scmp.lt.s32.totalorder %s27, 1
      %s438 = scalar_select %p437, %s27, 1
      %p439 = scmp.lt.s32.totalorder %s28, 0
      %s440 = scalar_select %p439, %s28, 0
      %s441 = sadd.s32 %s440, %s438
      %s442 = smul.addr %s441, 8
      %s443 = scalar_lea.vmem %s3, %s442
      %p444 = pneg %p138
      %p445 = pneg %p135
      %p446 = pneg %p159
      %p447 = pneg %p156
      %p448 = pneg %p180
      %p449 = pneg %p177
      %p450 = pneg %p201
      %p451 = pneg %p198
      %p452 = pneg %p222
      %p453 = pneg %p219
      %p454 = pneg %p243
      %p455 = pneg %p240
      %p456 = pneg %p264
      %p457 = pneg %p261
      %p458 = pneg %p285
      %p459 = pneg %p282
      %p460 = pneg %p306
      %p461 = pneg %p303
      %p462 = pneg %p334
      %p463 = pneg %p331
      %p464 = scmp.lt.s32.totalorder %s27, 1
      %s465 = scalar_select %p464, %s27, 1
      %p466 = scmp.lt.s32.totalorder %s28, 0
      %s467 = scalar_select %p466, %s28, 0
      %s468 = sadd.s32 %s467, %s465
      %s469 = smul.addr %s468, 4
      %s470 = scalar_lea.vmem %s12, %s469
      %p471 = scmp.lt.s32.totalorder %s27, 1
      %s472 = scalar_select %p471, %s27, 1
      %p473 = scmp.lt.s32.totalorder %s28, 0
      %s474 = scalar_select %p473, %s28, 0
      %s475 = sadd.s32 %s474, %s472
      %s476 = smul.addr %s475, 4
      %s477 = scalar_lea.vmem %s0, %s476
      %p478 = scmp.lt.s32.totalorder %s27, 1
      %s479 = scalar_select %p478, %s27, 1
      %s480 = smul.addr %s479, 4
      %s481 = scalar_lea.vmem %s1, %s480
      %p482 = scmp.lt.s32.totalorder %s27, 1
      %s483 = scalar_select %p482, %s27, 1
      %s484 = scalar_lea.vmem %s2, %s483
      %p485 = scmp.lt.s32.totalorder %s27, 1
      %s486 = scalar_select %p485, %s27, 1
      %p487 = scmp.lt.s32.totalorder %s28, 0
      %s488 = scalar_select %p487, %s28, 0
      %s489 = sadd.s32 %s488, %s486
      %s490 = smul.addr %s489, 8
      %s491 = scalar_lea.vmem %s3, %s490
      %p492 = scmp.lt.s32.totalorder %s27, 1
      %s493 = scalar_select %p492, %s27, 1
      %p494 = scmp.lt.s32.totalorder %s28, 0
      %s495 = scalar_select %p494, %s28, 0
      %s496 = sadd.s32 %s495, %s493
      %s497 = smul.addr %s496, 4
      %s498 = scalar_lea.vmem %s12, %s497
      %v500 = vld [vmem:[%s477] sm:$0xf]
      %v501 = vld [vmem:[%s481] sm:$0xf]
      %v502 = vunpack.c.l.bf16 %v500
      %v503 = vld [vmem:[%s4] sm:$0xf]
      %v504 = vld [vmem:[%s4 + $0x4] sm:$0xf]
      %v505 = vld [vmem:[%s4 + $0x8] sm:$0xf]
      %v506 = vld [vmem:[%s4 + $0xc] sm:$0xf]
      %v507 = vld [vmem:[%s4 + $0x10] sm:$0xf]
      %v508 = vld [vmem:[%s4 + $0x14] sm:$0xf]
      %v509 = vld [vmem:[%s4 + $0x18] sm:$0xf]
      %v510 = vld [vmem:[%s4 + $0x1c] sm:$0xf]
      %v511 = vld [vmem:[%s4 + $0x20] sm:$0xf]
      %v512 = vld [vmem:[%s4 + $0x24] sm:$0xf]
      %v513 = vld [vmem:[%s4 + $0x28] sm:$0xf]
      %v514 = vld [vmem:[%s4 + $0x2c] sm:$0xf]
      %v515 = vld [vmem:[%s4 + $0x30] sm:$0xf]
      %v516 = vld [vmem:[%s4 + $0x34] sm:$0xf]
      %v517 = vld [vmem:[%s4 + $0x38] sm:$0xf]
      %v518 = vld [vmem:[%s4 + $0x3c] sm:$0xf]
      %v519 = vld [vmem:[%s5] sm:$0x1]
      %v521 = vlaneseq
      %v522 = vshrl.u32 %v521, 7
      %v523 = vsub.s32 0, %v522
      %v524 = vrot.slane %v519, %v523
      %v542 = vunpack.c.l.b16 %v503
      %v543 = vunpack.c.l.b16 %v504
      %v544 = vunpack.c.l.b16 %v505
      %v545 = vunpack.c.l.b16 %v506
      %v546 = vunpack.c.l.b16 %v507
      %v547 = vunpack.c.l.b16 %v508
      %v548 = vunpack.c.l.b16 %v509
      %v549 = vunpack.c.l.b16 %v510
      %v550 = vunpack.c.l.b16 %v511
      %v551 = vunpack.c.l.b16 %v512
      %v552 = vunpack.c.l.b16 %v513
      %v553 = vunpack.c.l.b16 %v514
      %v554 = vunpack.c.l.b16 %v515
      %v555 = vunpack.c.l.b16 %v516
      %v556 = vunpack.c.l.b16 %v517
      %v557 = vunpack.c.l.b16 %v518
      %v558 = vpack.c.b16 %v543, %v542
      %v559 = vpack.c.b16 %v545, %v544
      %v560 = vpack.c.b16 %v547, %v546
      %v561 = vpack.c.b16 %v549, %v548
      %v562 = vpack.c.b16 %v551, %v550
      %v563 = vpack.c.b16 %v553, %v552
      %v564 = vpack.c.b16 %v555, %v554
      %v565 = vpack.c.b16 %v557, %v556
      %574 = vmatprep.subr.bf16.mxu0 0
      %575 = vmatpush1.bf16.msra.mxu0 %v558
      %576 = vmatprep.subr.bf16.mxu0 0
      %577 = vmatpush1.bf16.msra.mxu0 %v559
      %578 = vmatprep.subr.bf16.mxu0 0
      %579 = vmatpush1.bf16.msra.mxu0 %v560
      %580 = vmatprep.subr.bf16.mxu0 0
      %581 = vmatpush1.bf16.msra.mxu0 %v561
      %582 = vmatprep.subr.bf16.mxu0 0
      %583 = vmatpush1.bf16.msra.mxu0 %v562
      %584 = vmatprep.subr.bf16.mxu0 0
      %585 = vmatpush1.bf16.msra.mxu0 %v563
      %586 = vmatprep.subr.bf16.mxu0 0
      %587 = vmatpush1.bf16.msra.mxu0 %v564
      %588 = vmatprep.subr.bf16.mxu0 0
      %589 = vmatpush1.bf16.msra.mxu0 %v565
      %590 = vmatprep.subr.bf16.mxu0 0
      %591 = vmatpush1.bf16.msra.mxu0 0
      %592 = vmatprep.subr.bf16.mxu0 0
      %593 = vmatpush1.bf16.msra.mxu0 0
      %594 = vmatprep.subr.bf16.mxu0 0
      %595 = vmatpush1.bf16.msra.mxu0 0
      %596 = vmatprep.subr.bf16.mxu0 0
      %597 = vmatpush1.bf16.msra.mxu0 0
      %598 = vmatprep.subr.bf16.mxu0 0
      %599 = vmatpush1.bf16.msra.mxu0 0
      %600 = vmatprep.subr.bf16.mxu0 0
      %601 = vmatpush1.bf16.msra.mxu0 0
      %602 = vmatprep.subr.bf16.mxu0 0
      %603 = vmatpush1.bf16.msra.mxu0 0
      %604 = vmatprep.subr.bf16.mxu0 0
      %605 = vmatpush1.bf16.msra.mxu0 0
      %606 = vmatprep.mubr.bf16.mxu0 0
      %607 = vmatmul.mubr.bf16.gmra.mrb[0].mxu0 %v500
      %v608 = vpop.f32.mrb[0].mxu0
      %v609 = vadd.f32 %v524, %v608
      %v610 = vpop.f32.mrb[0].mxu0
      %v611 = vpop.f32.mrb[0].mxu0
      %v612 = vpop.f32.mrb[0].mxu0
      %613 = vdwg.mxu0
      %v614 = vld [vmem:[%s6] sm:$0xff]
      %v615 = vld [vmem:[%s6 + $0x8] sm:$0xff]
      %v616 = vld [vmem:[%s6 + $0x10] sm:$0xff]
      %v617 = vld [vmem:[%s6 + $0x18] sm:$0xff]
      %v618 = vld [vmem:[%s6 + $0x20] sm:$0xff]
      %v619 = vld [vmem:[%s6 + $0x28] sm:$0xff]
      %v620 = vld [vmem:[%s6 + $0x30] sm:$0xff]
      %v621 = vld [vmem:[%s6 + $0x38] sm:$0xff]
      %v622 = vld [vmem:[%s6 + $0x40] sm:$0xff]
      %v623 = vld [vmem:[%s6 + $0x48] sm:$0xff]
      %v624 = vld [vmem:[%s6 + $0x50] sm:$0xff]
      %v625 = vld [vmem:[%s6 + $0x58] sm:$0xff]
      %v626 = vld [vmem:[%s6 + $0x60] sm:$0xff]
      %v627 = vld [vmem:[%s6 + $0x68] sm:$0xff]
      %v628 = vld [vmem:[%s6 + $0x70] sm:$0xff]
      %v629 = vld [vmem:[%s6 + $0x78] sm:$0xff]
      %v630 = vld [vmem:[%s7] sm:$0x3]
      %v632 = vlaneseq
      %v633 = vshrl.u32 %v632, 7
      %v634 = vsub.s32 0, %v633
      %v635 = vrot.slane %v630, %v634
      %v636 = vlaneseq
      %v637 = vshrl.u32 %v636, 7
      %v638 = vsub.s32 1, %v637
      %v639 = vrot.slane %v630, %v638
      %v658 = vunpack.c.l.b16 %v614
      %v659 = vunpack.c.h.b16 %v614
      %v660 = vunpack.c.l.b16 %v615
      %v661 = vunpack.c.h.b16 %v615
      %v662 = vunpack.c.l.b16 %v616
      %v663 = vunpack.c.h.b16 %v616
      %v664 = vunpack.c.l.b16 %v617
      %v665 = vunpack.c.h.b16 %v617
      %v666 = vunpack.c.l.b16 %v618
      %v667 = vunpack.c.h.b16 %v618
      %v668 = vunpack.c.l.b16 %v619
      %v669 = vunpack.c.h.b16 %v619
      %v670 = vunpack.c.l.b16 %v620
      %v671 = vunpack.c.h.b16 %v620
      %v672 = vunpack.c.l.b16 %v621
      %v673 = vunpack.c.h.b16 %v621
      %v674 = vunpack.c.l.b16 %v622
      %v675 = vunpack.c.h.b16 %v622
      %v676 = vunpack.c.l.b16 %v623
      %v677 = vunpack.c.h.b16 %v623
      %v678 = vunpack.c.l.b16 %v624
      %v679 = vunpack.c.h.b16 %v624
      %v680 = vunpack.c.l.b16 %v625
      %v681 = vunpack.c.h.b16 %v625
      %v682 = vunpack.c.l.b16 %v626
      %v683 = vunpack.c.h.b16 %v626
      %v684 = vunpack.c.l.b16 %v627
      %v685 = vunpack.c.h.b16 %v627
      %v686 = vunpack.c.l.b16 %v628
      %v687 = vunpack.c.h.b16 %v628
      %v688 = vunpack.c.l.b16 %v629
      %v689 = vunpack.c.h.b16 %v629
      %v690 = vpack.c.b16 %v660, %v658
      %v691 = vpack.c.b16 %v661, %v659
      %v692 = vpack.c.b16 %v664, %v662
      %v693 = vpack.c.b16 %v665, %v663
      %v694 = vpack.c.b16 %v668, %v666
      %v695 = vpack.c.b16 %v669, %v667
      %v696 = vpack.c.b16 %v672, %v670
      %v697 = vpack.c.b16 %v673, %v671
      %v698 = vpack.c.b16 %v676, %v674
      %v699 = vpack.c.b16 %v677, %v675
      %v700 = vpack.c.b16 %v680, %v678
      %v701 = vpack.c.b16 %v681, %v679
      %v702 = vpack.c.b16 %v684, %v682
      %v703 = vpack.c.b16 %v685, %v683
      %v704 = vpack.c.b16 %v688, %v686
      %v705 = vpack.c.b16 %v689, %v687
      %722 = vmatprep.subr.bf16.mxu0 %v691
      %723 = vmatpush1.bf16.msra.mxu0 %v690
      %724 = vmatprep.subr.bf16.mxu0 %v693
      %725 = vmatpush1.bf16.msra.mxu0 %v692
      %726 = vmatprep.subr.bf16.mxu0 %v695
      %727 = vmatpush1.bf16.msra.mxu0 %v694
      %728 = vmatprep.subr.bf16.mxu0 %v697
      %729 = vmatpush1.bf16.msra.mxu0 %v696
      %730 = vmatprep.subr.bf16.mxu0 %v699
      %731 = vmatpush1.bf16.msra.mxu0 %v698
      %732 = vmatprep.subr.bf16.mxu0 %v701
      %733 = vmatpush1.bf16.msra.mxu0 %v700
      %734 = vmatprep.subr.bf16.mxu0 %v703
      %735 = vmatpush1.bf16.msra.mxu0 %v702
      %736 = vmatprep.subr.bf16.mxu0 %v705
      %737 = vmatpush1.bf16.msra.mxu0 %v704
      %738 = vmatprep.subr.bf16.mxu0 0
      %739 = vmatpush1.bf16.msra.mxu0 0
      %740 = vmatprep.subr.bf16.mxu0 0
      %741 = vmatpush1.bf16.msra.mxu0 0
      %742 = vmatprep.subr.bf16.mxu0 0
      %743 = vmatpush1.bf16.msra.mxu0 0
      %744 = vmatprep.subr.bf16.mxu0 0
      %745 = vmatpush1.bf16.msra.mxu0 0
      %746 = vmatprep.subr.bf16.mxu0 0
      %747 = vmatpush1.bf16.msra.mxu0 0
      %748 = vmatprep.subr.bf16.mxu0 0
      %749 = vmatpush1.bf16.msra.mxu0 0
      %750 = vmatprep.subr.bf16.mxu0 0
      %751 = vmatpush1.bf16.msra.mxu0 0
      %752 = vmatprep.subr.bf16.mxu0 0
      %753 = vmatpush1.bf16.msra.mxu0 0
      %754 = vmatprep.mubr.bf16.mxu0 0
      %755 = vmatmul.mubr.bf16.gmra.mrb[0].mxu0 %v501
      %v756 = vpop.f32.mrb[0].mxu0
      %v757 = vadd.f32 %v635, %v756
      %v758 = vpop.f32.mrb[0].mxu0
      %v759 = vadd.f32 %v639, %v758
      %v760 = vpop.f32.mrb[0].mxu0
      %v761 = vpop.f32.mrb[0].mxu0
      %762 = vdwg.mxu0
      %764 = vrot.lane.b32.xlu0 %v609, 96
      %v765 = vpop.permute.xlu0 %764
      %767 = vrot.lane.b32.xlu0 %v609, 64
      %v768 = vpop.permute.xlu0 %767
      %770 = vrot.lane.b32.xlu0 %v609, 32
      %v771 = vpop.permute.xlu0 %770
      %v773 = vcombine.low %v609, %v768
      %v774 = vcombine.high %v609, %v768
      %v776 = vunpack.c.l.s4 1983009808
      %v777 = vunpack.c.0.s8 %v776
      %v778 = vlaneseq
      %v779 = vshrl.u32 %v778, 7
      %v780 = vsub.s32 %v777, %v779
      %v781 = vrot.slane %v773, %v780
      %v783 = vunpack.c.l.s4 1983009808
      %v784 = vunpack.c.0.s8 %v783
      %v785 = vlaneseq
      %v786 = vshrl.u32 %v785, 7
      %v787 = vsub.s32 %v784, %v786
      %v788 = vrot.slane %v774, %v787
      %v789 = vcombine.low %v765, %v771
      %v790 = vcombine.high %v765, %v771
      %v792 = vunpack.c.l.s4 1983009808
      %v793 = vunpack.c.0.s8 %v792
      %v794 = vlaneseq
      %v795 = vshrl.u32 %v794, 7
      %v796 = vsub.s32 %v793, %v795
      %v797 = vrot.slane %v789, %v796
      %v799 = vunpack.c.l.s4 1983009808
      %v800 = vunpack.c.0.s8 %v799
      %v801 = vlaneseq
      %v802 = vshrl.u32 %v801, 7
      %v803 = vsub.s32 %v800, %v802
      %v804 = vrot.slane %v790, %v803
      %v805 = vcombine.low %v781, %v797
      %v806 = vcombine.high %v781, %v797
      %v808 = vunpack.c.l.s4 1934713408
      %v809 = vunpack.c.0.s8 %v808
      %v810 = vlaneseq
      %v811 = vshrl.u32 %v810, 7
      %v812 = vsub.s32 %v809, %v811
      %v813 = vrot.slane %v805, %v812
      %v815 = vunpack.c.l.s4 1934713408
      %v816 = vunpack.c.0.s8 %v815
      %v817 = vlaneseq
      %v818 = vshrl.u32 %v817, 7
      %v819 = vsub.s32 %v816, %v818
      %v820 = vrot.slane %v806, %v819
      %v821 = vcombine.low %v788, %v804
      %v822 = vcombine.high %v788, %v804
      %v824 = vunpack.c.l.s4 1934713408
      %v825 = vunpack.c.0.s8 %v824
      %v826 = vlaneseq
      %v827 = vshrl.u32 %v826, 7
      %v828 = vsub.s32 %v825, %v827
      %v829 = vrot.slane %v821, %v828
      %v831 = vunpack.c.l.s4 1934713408
      %v832 = vunpack.c.0.s8 %v831
      %v833 = vlaneseq
      %v834 = vshrl.u32 %v833, 7
      %v835 = vsub.s32 %v832, %v834
      %v836 = vrot.slane %v822, %v835
      %v837 = vcombine.high %v813, 0.0
      %v838 = vcombine.high %v820, 0.0
      %v839 = vcombine.high %v829, 0.0
      %v840 = vcombine.high %v836, 0.0
      %v841 = vcombine.low %v813, %v820
      %v843 = vunpack.c.l.s4 1983009808
      %v844 = vunpack.c.0.s8 %v843
      %v845 = vlaneseq
      %v846 = vshrl.u32 %v845, 7
      %v847 = vsub.s32 %v844, %v846
      %v848 = vrot.slane %v841, %v847
      %v849 = vcombine.low %v837, %v838
      %v851 = vunpack.c.l.s4 1983009808
      %v852 = vunpack.c.0.s8 %v851
      %v853 = vlaneseq
      %v854 = vshrl.u32 %v853, 7
      %v855 = vsub.s32 %v852, %v854
      %v856 = vrot.slane %v849, %v855
      %v857 = vcombine.low %v829, %v836
      %v859 = vunpack.c.l.s4 1983009808
      %v860 = vunpack.c.0.s8 %v859
      %v861 = vlaneseq
      %v862 = vshrl.u32 %v861, 7
      %v863 = vsub.s32 %v860, %v862
      %v864 = vrot.slane %v857, %v863
      %v865 = vcombine.low %v839, %v840
      %v867 = vunpack.c.l.s4 1983009808
      %v868 = vunpack.c.0.s8 %v867
      %v869 = vlaneseq
      %v870 = vshrl.u32 %v869, 7
      %v871 = vsub.s32 %v868, %v870
      %v872 = vrot.slane %v865, %v871
      %v873 = vcombine.low %v848, %v856
      %v874 = vcombine.high %v848, %v856
      %v876 = vunpack.c.l.s4 1934713408
      %v877 = vunpack.c.0.s8 %v876
      %v878 = vlaneseq
      %v879 = vshrl.u32 %v878, 7
      %v880 = vsub.s32 %v877, %v879
      %v881 = vrot.slane %v873, %v880
      %v883 = vunpack.c.l.s4 1934713408
      %v884 = vunpack.c.0.s8 %v883
      %v885 = vlaneseq
      %v886 = vshrl.u32 %v885, 7
      %v887 = vsub.s32 %v884, %v886
      %v888 = vrot.slane %v874, %v887
      %v889 = vcombine.low %v864, %v872
      %v890 = vcombine.high %v864, %v872
      %v892 = vunpack.c.l.s4 1934713408
      %v893 = vunpack.c.0.s8 %v892
      %v894 = vlaneseq
      %v895 = vshrl.u32 %v894, 7
      %v896 = vsub.s32 %v893, %v895
      %v897 = vrot.slane %v889, %v896
      %v899 = vunpack.c.l.s4 1934713408
      %v900 = vunpack.c.0.s8 %v899
      %v901 = vlaneseq
      %v902 = vshrl.u32 %v901, 7
      %v903 = vsub.s32 %v900, %v902
      %v904 = vrot.slane %v890, %v903
      %v905 = vcombine.low %v881, %v897
      %v906 = vcombine.high %v881, %v897
      %v907 = vcombine.low %v888, %v904
      %v908 = vcombine.high %v888, %v904
      %v909 = vpack.c.bf16 %v905, %v905
      %v910 = vpack.c.bf16 %v906, %v906
      %v911 = vpack.c.bf16 %v907, %v907
      %v912 = vpack.c.bf16 %v908, %v908
      %914 = vrot.lane.b32.xlu0 %v757, 96
      %v915 = vpop.permute.xlu0 %914
      %917 = vrot.lane.b32.xlu0 %v757, 64
      %v918 = vpop.permute.xlu0 %917
      %920 = vrot.lane.b32.xlu0 %v757, 32
      %v921 = vpop.permute.xlu0 %920
      %v923 = vcombine.low %v757, %v918
      %v924 = vcombine.high %v757, %v918
      %v926 = vunpack.c.l.s4 1983009808
      %v927 = vunpack.c.0.s8 %v926
      %v928 = vlaneseq
      %v929 = vshrl.u32 %v928, 7
      %v930 = vsub.s32 %v927, %v929
      %v931 = vrot.slane %v923, %v930
      %v933 = vunpack.c.l.s4 1983009808
      %v934 = vunpack.c.0.s8 %v933
      %v935 = vlaneseq
      %v936 = vshrl.u32 %v935, 7
      %v937 = vsub.s32 %v934, %v936
      %v938 = vrot.slane %v924, %v937
      %v939 = vcombine.low %v915, %v921
      %v940 = vcombine.high %v915, %v921
      %v942 = vunpack.c.l.s4 1983009808
      %v943 = vunpack.c.0.s8 %v942
      %v944 = vlaneseq
      %v945 = vshrl.u32 %v944, 7
      %v946 = vsub.s32 %v943, %v945
      %v947 = vrot.slane %v939, %v946
      %v949 = vunpack.c.l.s4 1983009808
      %v950 = vunpack.c.0.s8 %v949
      %v951 = vlaneseq
      %v952 = vshrl.u32 %v951, 7
      %v953 = vsub.s32 %v950, %v952
      %v954 = vrot.slane %v940, %v953
      %v955 = vcombine.low %v931, %v947
      %v956 = vcombine.high %v931, %v947
      %v958 = vunpack.c.l.s4 1934713408
      %v959 = vunpack.c.0.s8 %v958
      %v960 = vlaneseq
      %v961 = vshrl.u32 %v960, 7
      %v962 = vsub.s32 %v959, %v961
      %v963 = vrot.slane %v955, %v962
      %v965 = vunpack.c.l.s4 1934713408
      %v966 = vunpack.c.0.s8 %v965
      %v967 = vlaneseq
      %v968 = vshrl.u32 %v967, 7
      %v969 = vsub.s32 %v966, %v968
      %v970 = vrot.slane %v956, %v969
      %v971 = vcombine.low %v938, %v954
      %v972 = vcombine.high %v938, %v954
      %v974 = vunpack.c.l.s4 1934713408
      %v975 = vunpack.c.0.s8 %v974
      %v976 = vlaneseq
      %v977 = vshrl.u32 %v976, 7
      %v978 = vsub.s32 %v975, %v977
      %v979 = vrot.slane %v971, %v978
      %v981 = vunpack.c.l.s4 1934713408
      %v982 = vunpack.c.0.s8 %v981
      %v983 = vlaneseq
      %v984 = vshrl.u32 %v983, 7
      %v985 = vsub.s32 %v982, %v984
      %v986 = vrot.slane %v972, %v985
      %v987 = vcombine.high %v963, 0.0
      %v988 = vcombine.high %v970, 0.0
      %v989 = vcombine.high %v979, 0.0
      %v990 = vcombine.high %v986, 0.0
      %v991 = vcombine.low %v963, %v970
      %v993 = vunpack.c.l.s4 1983009808
      %v994 = vunpack.c.0.s8 %v993
      %v995 = vlaneseq
      %v996 = vshrl.u32 %v995, 7
      %v997 = vsub.s32 %v994, %v996
      %v998 = vrot.slane %v991, %v997
      %v999 = vcombine.low %v987, %v988
      %v1001 = vunpack.c.l.s4 1983009808
      %v1002 = vunpack.c.0.s8 %v1001
      %v1003 = vlaneseq
      %v1004 = vshrl.u32 %v1003, 7
      %v1005 = vsub.s32 %v1002, %v1004
      %v1006 = vrot.slane %v999, %v1005
      %v1007 = vcombine.low %v979, %v986
      %v1009 = vunpack.c.l.s4 1983009808
      %v1010 = vunpack.c.0.s8 %v1009
      %v1011 = vlaneseq
      %v1012 = vshrl.u32 %v1011, 7
      %v1013 = vsub.s32 %v1010, %v1012
      %v1014 = vrot.slane %v1007, %v1013
      %v1015 = vcombine.low %v989, %v990
      %v1017 = vunpack.c.l.s4 1983009808
      %v1018 = vunpack.c.0.s8 %v1017
      %v1019 = vlaneseq
      %v1020 = vshrl.u32 %v1019, 7
      %v1021 = vsub.s32 %v1018, %v1020
      %v1022 = vrot.slane %v1015, %v1021
      %v1023 = vcombine.low %v998, %v1006
      %v1024 = vcombine.high %v998, %v1006
      %v1026 = vunpack.c.l.s4 1934713408
      %v1027 = vunpack.c.0.s8 %v1026
      %v1028 = vlaneseq
      %v1029 = vshrl.u32 %v1028, 7
      %v1030 = vsub.s32 %v1027, %v1029
      %v1031 = vrot.slane %v1023, %v1030
      %v1033 = vunpack.c.l.s4 1934713408
      %v1034 = vunpack.c.0.s8 %v1033
      %v1035 = vlaneseq
      %v1036 = vshrl.u32 %v1035, 7
      %v1037 = vsub.s32 %v1034, %v1036
      %v1038 = vrot.slane %v1024, %v1037
      %v1039 = vcombine.low %v1014, %v1022
      %v1040 = vcombine.high %v1014, %v1022
      %v1042 = vunpack.c.l.s4 1934713408
      %v1043 = vunpack.c.0.s8 %v1042
      %v1044 = vlaneseq
      %v1045 = vshrl.u32 %v1044, 7
      %v1046 = vsub.s32 %v1043, %v1045
      %v1047 = vrot.slane %v1039, %v1046
      %v1049 = vunpack.c.l.s4 1934713408
      %v1050 = vunpack.c.0.s8 %v1049
      %v1051 = vlaneseq
      %v1052 = vshrl.u32 %v1051, 7
      %v1053 = vsub.s32 %v1050, %v1052
      %v1054 = vrot.slane %v1040, %v1053
      %v1055 = vcombine.low %v1031, %v1047
      %v1056 = vcombine.high %v1031, %v1047
      %v1057 = vcombine.low %v1038, %v1054
      %v1058 = vcombine.high %v1038, %v1054
      %v1059 = vpack.c.bf16 %v1055, %v1055
      %v1060 = vpack.c.bf16 %v1056, %v1056
      %v1061 = vpack.c.bf16 %v1057, %v1057
      %v1062 = vpack.c.bf16 %v1058, %v1058
      %1064 = vrot.lane.b32.xlu0 %v759, 96
      %v1065 = vpop.permute.xlu0 %1064
      %1067 = vrot.lane.b32.xlu0 %v759, 64
      %v1068 = vpop.permute.xlu0 %1067
      %1070 = vrot.lane.b32.xlu0 %v759, 32
      %v1071 = vpop.permute.xlu0 %1070
      %v1073 = vcombine.low %v759, %v1068
      %v1074 = vcombine.high %v759, %v1068
      %v1076 = vunpack.c.l.s4 1983009808
      %v1077 = vunpack.c.0.s8 %v1076
      %v1078 = vlaneseq
      %v1079 = vshrl.u32 %v1078, 7
      %v1080 = vsub.s32 %v1077, %v1079
      %v1081 = vrot.slane %v1073, %v1080
      %v1083 = vunpack.c.l.s4 1983009808
      %v1084 = vunpack.c.0.s8 %v1083
      %v1085 = vlaneseq
      %v1086 = vshrl.u32 %v1085, 7
      %v1087 = vsub.s32 %v1084, %v1086
      %v1088 = vrot.slane %v1074, %v1087
      %v1089 = vcombine.low %v1065, %v1071
      %v1090 = vcombine.high %v1065, %v1071
      %v1092 = vunpack.c.l.s4 1983009808
      %v1093 = vunpack.c.0.s8 %v1092
      %v1094 = vlaneseq
      %v1095 = vshrl.u32 %v1094, 7
      %v1096 = vsub.s32 %v1093, %v1095
      %v1097 = vrot.slane %v1089, %v1096
      %v1099 = vunpack.c.l.s4 1983009808
      %v1100 = vunpack.c.0.s8 %v1099
      %v1101 = vlaneseq
      %v1102 = vshrl.u32 %v1101, 7
      %v1103 = vsub.s32 %v1100, %v1102
      %v1104 = vrot.slane %v1090, %v1103
      %v1105 = vcombine.low %v1081, %v1097
      %v1106 = vcombine.high %v1081, %v1097
      %v1108 = vunpack.c.l.s4 1934713408
      %v1109 = vunpack.c.0.s8 %v1108
      %v1110 = vlaneseq
      %v1111 = vshrl.u32 %v1110, 7
      %v1112 = vsub.s32 %v1109, %v1111
      %v1113 = vrot.slane %v1105, %v1112
      %v1115 = vunpack.c.l.s4 1934713408
      %v1116 = vunpack.c.0.s8 %v1115
      %v1117 = vlaneseq
      %v1118 = vshrl.u32 %v1117, 7
      %v1119 = vsub.s32 %v1116, %v1118
      %v1120 = vrot.slane %v1106, %v1119
      %v1121 = vcombine.low %v1088, %v1104
      %v1122 = vcombine.high %v1088, %v1104
      %v1124 = vunpack.c.l.s4 1934713408
      %v1125 = vunpack.c.0.s8 %v1124
      %v1126 = vlaneseq
      %v1127 = vshrl.u32 %v1126, 7
      %v1128 = vsub.s32 %v1125, %v1127
      %v1129 = vrot.slane %v1121, %v1128
      %v1131 = vunpack.c.l.s4 1934713408
      %v1132 = vunpack.c.0.s8 %v1131
      %v1133 = vlaneseq
      %v1134 = vshrl.u32 %v1133, 7
      %v1135 = vsub.s32 %v1132, %v1134
      %v1136 = vrot.slane %v1122, %v1135
      %v1137 = vcombine.high %v1113, 0.0
      %v1138 = vcombine.high %v1120, 0.0
      %v1139 = vcombine.high %v1129, 0.0
      %v1140 = vcombine.high %v1136, 0.0
      %v1141 = vcombine.low %v1113, %v1120
      %v1143 = vunpack.c.l.s4 1983009808
      %v1144 = vunpack.c.0.s8 %v1143
      %v1145 = vlaneseq
      %v1146 = vshrl.u32 %v1145, 7
      %v1147 = vsub.s32 %v1144, %v1146
      %v1148 = vrot.slane %v1141, %v1147
      %v1149 = vcombine.low %v1137, %v1138
      %v1151 = vunpack.c.l.s4 1983009808
      %v1152 = vunpack.c.0.s8 %v1151
      %v1153 = vlaneseq
      %v1154 = vshrl.u32 %v1153, 7
      %v1155 = vsub.s32 %v1152, %v1154
      %v1156 = vrot.slane %v1149, %v1155
      %v1157 = vcombine.low %v1129, %v1136
      %v1159 = vunpack.c.l.s4 1983009808
      %v1160 = vunpack.c.0.s8 %v1159
      %v1161 = vlaneseq
      %v1162 = vshrl.u32 %v1161, 7
      %v1163 = vsub.s32 %v1160, %v1162
      %v1164 = vrot.slane %v1157, %v1163
      %v1165 = vcombine.low %v1139, %v1140
      %v1167 = vunpack.c.l.s4 1983009808
      %v1168 = vunpack.c.0.s8 %v1167
      %v1169 = vlaneseq
      %v1170 = vshrl.u32 %v1169, 7
      %v1171 = vsub.s32 %v1168, %v1170
      %v1172 = vrot.slane %v1165, %v1171
      %v1173 = vcombine.low %v1148, %v1156
      %v1174 = vcombine.high %v1148, %v1156
      %v1176 = vunpack.c.l.s4 1934713408
      %v1177 = vunpack.c.0.s8 %v1176
      %v1178 = vlaneseq
      %v1179 = vshrl.u32 %v1178, 7
      %v1180 = vsub.s32 %v1177, %v1179
      %v1181 = vrot.slane %v1173, %v1180
      %v1183 = vunpack.c.l.s4 1934713408
      %v1184 = vunpack.c.0.s8 %v1183
      %v1185 = vlaneseq
      %v1186 = vshrl.u32 %v1185, 7
      %v1187 = vsub.s32 %v1184, %v1186
      %v1188 = vrot.slane %v1174, %v1187
      %v1189 = vcombine.low %v1164, %v1172
      %v1190 = vcombine.high %v1164, %v1172
      %v1192 = vunpack.c.l.s4 1934713408
      %v1193 = vunpack.c.0.s8 %v1192
      %v1194 = vlaneseq
      %v1195 = vshrl.u32 %v1194, 7
      %v1196 = vsub.s32 %v1193, %v1195
      %v1197 = vrot.slane %v1189, %v1196
      %v1199 = vunpack.c.l.s4 1934713408
      %v1200 = vunpack.c.0.s8 %v1199
      %v1201 = vlaneseq
      %v1202 = vshrl.u32 %v1201, 7
      %v1203 = vsub.s32 %v1200, %v1202
      %v1204 = vrot.slane %v1190, %v1203
      %v1205 = vcombine.low %v1181, %v1197
      %v1206 = vcombine.high %v1181, %v1197
      %v1207 = vcombine.low %v1188, %v1204
      %v1208 = vcombine.high %v1188, %v1204
      %v1209 = vpack.c.bf16 %v1205, %v1205
      %v1210 = vpack.c.bf16 %v1206, %v1206
      %v1211 = vpack.c.bf16 %v1207, %v1207
      %v1212 = vpack.c.bf16 %v1208, %v1208
      %v1213 = vld [vmem:[%s484] sm:$0x1]
      %v1214 = vmul.f32 %v1213, -1e+09
      %v1216 = vlaneseq
      %v1217 = vshrl.u32 %v1216, 7
      %v1218 = vsub.s32 0, %v1217
      %v1219 = vrot.slane %v1214, %v1218
      %vm1221 = vcmask 261120
      %v1223 = vsel %vm1221, %v909, 0
      %v1226 = vsel %vm1221, %v1059, 0
      %1228 = vmatprep.subr.bf16.mxu0 0
      %1229 = vmatpush1.bf16.xpose.msra.mxu0 %v1226
      %1230 = vmatprep.subr.bf16.mxu0 0
      %1231 = vmatpush1.bf16.xpose.msra.mxu0 0
      %1232 = vmatprep.subr.bf16.mxu0 0
      %1233 = vmatpush1.bf16.xpose.msra.mxu0 0
      %1234 = vmatprep.subr.bf16.mxu0 0
      %1235 = vmatpush1.bf16.xpose.msra.mxu0 0
      %1236 = vmatprep.subr.bf16.mxu0 0
      %1237 = vmatpush1.bf16.xpose.msra.mxu0 0
      %1238 = vmatprep.subr.bf16.mxu0 0
      %1239 = vmatpush1.bf16.xpose.msra.mxu0 0
      %1240 = vmatprep.subr.bf16.mxu0 0
      %1241 = vmatpush1.bf16.xpose.msra.mxu0 0
      %1242 = vmatprep.subr.bf16.mxu0 0
      %1243 = vmatpush1.bf16.xpose.msra.mxu0 0
      %1244 = vmatprep.subr.bf16.mxu0 0
      %1245 = vmatpush1.bf16.xpose.msra.mxu0 0
      %1246 = vmatprep.subr.bf16.mxu0 0
      %1247 = vmatpush1.bf16.xpose.msra.mxu0 0
      %1248 = vmatprep.subr.bf16.mxu0 0
      %1249 = vmatpush1.bf16.xpose.msra.mxu0 0
      %1250 = vmatprep.subr.bf16.mxu0 0
      %1251 = vmatpush1.bf16.xpose.msra.mxu0 0
      %1252 = vmatprep.subr.bf16.mxu0 0
      %1253 = vmatpush1.bf16.xpose.msra.mxu0 0
      %1254 = vmatprep.subr.bf16.mxu0 0
      %1255 = vmatpush1.bf16.xpose.msra.mxu0 0
      %1256 = vmatprep.subr.bf16.mxu0 0
      %1257 = vmatpush1.bf16.xpose.msra.mxu0 0
      %1258 = vmatprep.subr.bf16.mxu0 0
      %1259 = vmatpush1.bf16.xpose.msra.mxu0 0
      %1260 = vmatprep.mubr.bf16.mxu0 0
      %1261 = vmatmul.mubr.bf16.gmra.mrb[0].mxu0 %v1223
      %v1262 = vpop.f32.mrb[0].mxu0
      %v1263 = vadd.f32 %v1219, %v1262
      %v1264 = vpop.f32.mrb[0].mxu0
      %v1265 = vpop.f32.mrb[0].mxu0
      %v1266 = vpop.f32.mrb[0].mxu0
      %1267 = vdwg.mxu0
      %v1269 = vsel %vm1221, %v910, 0
      %v1272 = vsel %vm1221, %v1060, 0
      %1274 = vmatprep.subr.bf16.mxu0 0
      %1275 = vmatpush1.bf16.xpose.msra.mxu0 %v1272
      %1276 = vmatprep.subr.bf16.mxu0 0
      %1277 = vmatpush1.bf16.xpose.msra.mxu0 0
      %1278 = vmatprep.subr.bf16.mxu0 0
      %1279 = vmatpush1.bf16.xpose.msra.mxu0 0
      %1280 = vmatprep.subr.bf16.mxu0 0
      %1281 = vmatpush1.bf16.xpose.msra.mxu0 0
      %1282 = vmatprep.subr.bf16.mxu0 0
      %1283 = vmatpush1.bf16.xpose.msra.mxu0 0
      %1284 = vmatprep.subr.bf16.mxu0 0
      %1285 = vmatpush1.bf16.xpose.msra.mxu0 0
      %1286 = vmatprep.subr.bf16.mxu0 0
      %1287 = vmatpush1.bf16.xpose.msra.mxu0 0
      %1288 = vmatprep.subr.bf16.mxu0 0
      %1289 = vmatpush1.bf16.xpose.msra.mxu0 0
      %1290 = vmatprep.subr.bf16.mxu0 0
      %1291 = vmatpush1.bf16.xpose.msra.mxu0 0
      %1292 = vmatprep.subr.bf16.mxu0 0
      %1293 = vmatpush1.bf16.xpose.msra.mxu0 0
      %1294 = vmatprep.subr.bf16.mxu0 0
      %1295 = vmatpush1.bf16.xpose.msra.mxu0 0
      %1296 = vmatprep.subr.bf16.mxu0 0
      %1297 = vmatpush1.bf16.xpose.msra.mxu0 0
      %1298 = vmatprep.subr.bf16.mxu0 0
      %1299 = vmatpush1.bf16.xpose.msra.mxu0 0
      %1300 = vmatprep.subr.bf16.mxu0 0
      %1301 = vmatpush1.bf16.xpose.msra.mxu0 0
      %1302 = vmatprep.subr.bf16.mxu0 0
      %1303 = vmatpush1.bf16.xpose.msra.mxu0 0
      %1304 = vmatprep.subr.bf16.mxu0 0
      %1305 = vmatpush1.bf16.xpose.msra.mxu0 0
      %1306 = vmatprep.mubr.bf16.mxu0 0
      %1307 = vmatmul.mubr.bf16.gmra.mrb[0].mxu0 %v1269
      %v1308 = vpop.f32.mrb[0].mxu0
      %v1309 = vadd.f32 %v1219, %v1308
      %v1310 = vpop.f32.mrb[0].mxu0
      %v1311 = vpop.f32.mrb[0].mxu0
      %v1312 = vpop.f32.mrb[0].mxu0
      %1313 = vdwg.mxu0
      %v1315 = vsel %vm1221, %v911, 0
      %v1318 = vsel %vm1221, %v1061, 0
      %1320 = vmatprep.subr.bf16.mxu0 0
      %1321 = vmatpush1.bf16.xpose.msra.mxu0 %v1318
      %1322 = vmatprep.subr.bf16.mxu0 0
      %1323 = vmatpush1.bf16.xpose.msra.mxu0 0
      %1324 = vmatprep.subr.bf16.mxu0 0
      %1325 = vmatpush1.bf16.xpose.msra.mxu0 0
      %1326 = vmatprep.subr.bf16.mxu0 0
      %1327 = vmatpush1.bf16.xpose.msra.mxu0 0
      %1328 = vmatprep.subr.bf16.mxu0 0
      %1329 = vmatpush1.bf16.xpose.msra.mxu0 0
      %1330 = vmatprep.subr.bf16.mxu0 0
      %1331 = vmatpush1.bf16.xpose.msra.mxu0 0
      %1332 = vmatprep.subr.bf16.mxu0 0
      %1333 = vmatpush1.bf16.xpose.msra.mxu0 0
      %1334 = vmatprep.subr.bf16.mxu0 0
      %1335 = vmatpush1.bf16.xpose.msra.mxu0 0
      %1336 = vmatprep.subr.bf16.mxu0 0
      %1337 = vmatpush1.bf16.xpose.msra.mxu0 0
      %1338 = vmatprep.subr.bf16.mxu0 0
      %1339 = vmatpush1.bf16.xpose.msra.mxu0 0
      %1340 = vmatprep.subr.bf16.mxu0 0
      %1341 = vmatpush1.bf16.xpose.msra.mxu0 0
      %1342 = vmatprep.subr.bf16.mxu0 0
      %1343 = vmatpush1.bf16.xpose.msra.mxu0 0
      %1344 = vmatprep.subr.bf16.mxu0 0
      %1345 = vmatpush1.bf16.xpose.msra.mxu0 0
      %1346 = vmatprep.subr.bf16.mxu0 0
      %1347 = vmatpush1.bf16.xpose.msra.mxu0 0
      %1348 = vmatprep.subr.bf16.mxu0 0
      %1349 = vmatpush1.bf16.xpose.msra.mxu0 0
      %1350 = vmatprep.subr.bf16.mxu0 0
      %1351 = vmatpush1.bf16.xpose.msra.mxu0 0
      %1352 = vmatprep.mubr.bf16.mxu0 0
      %1353 = vmatmul.mubr.bf16.gmra.mrb[0].mxu0 %v1315
      %v1354 = vpop.f32.mrb[0].mxu0
      %v1355 = vadd.f32 %v1219, %v1354
      %v1356 = vpop.f32.mrb[0].mxu0
      %v1357 = vpop.f32.mrb[0].mxu0
      %v1358 = vpop.f32.mrb[0].mxu0
      %1359 = vdwg.mxu0
      %v1361 = vsel %vm1221, %v912, 0
      %v1364 = vsel %vm1221, %v1062, 0
      %1366 = vmatprep.subr.bf16.mxu0 0
      %1367 = vmatpush1.bf16.xpose.msra.mxu0 %v1364
      %1368 = vmatprep.subr.bf16.mxu0 0
      %1369 = vmatpush1.bf16.xpose.msra.mxu0 0
      %1370 = vmatprep.subr.bf16.mxu0 0
      %1371 = vmatpush1.bf16.xpose.msra.mxu0 0
      %1372 = vmatprep.subr.bf16.mxu0 0
      %1373 = vmatpush1.bf16.xpose.msra.mxu0 0
      %1374 = vmatprep.subr.bf16.mxu0 0
      %1375 = vmatpush1.bf16.xpose.msra.mxu0 0
      %1376 = vmatprep.subr.bf16.mxu0 0
      %1377 = vmatpush1.bf16.xpose.msra.mxu0 0
      %1378 = vmatprep.subr.bf16.mxu0 0
      %1379 = vmatpush1.bf16.xpose.msra.mxu0 0
      %1380 = vmatprep.subr.bf16.mxu0 0
      %1381 = vmatpush1.bf16.xpose.msra.mxu0 0
      %1382 = vmatprep.subr.bf16.mxu0 0
      %1383 = vmatpush1.bf16.xpose.msra.mxu0 0
      %1384 = vmatprep.subr.bf16.mxu0 0
      %1385 = vmatpush1.bf16.xpose.msra.mxu0 0
      %1386 = vmatprep.subr.bf16.mxu0 0
      %1387 = vmatpush1.bf16.xpose.msra.mxu0 0
      %1388 = vmatprep.subr.bf16.mxu0 0
      %1389 = vmatpush1.bf16.xpose.msra.mxu0 0
      %1390 = vmatprep.subr.bf16.mxu0 0
      %1391 = vmatpush1.bf16.xpose.msra.mxu0 0
      %1392 = vmatprep.subr.bf16.mxu0 0
      %1393 = vmatpush1.bf16.xpose.msra.mxu0 0
      %1394 = vmatprep.subr.bf16.mxu0 0
      %1395 = vmatpush1.bf16.xpose.msra.mxu0 0
      %1396 = vmatprep.subr.bf16.mxu0 0
      %1397 = vmatpush1.bf16.xpose.msra.mxu0 0
      %1398 = vmatprep.mubr.bf16.mxu0 0
      %1399 = vmatmul.mubr.bf16.gmra.mrb[0].mxu0 %v1361
      %v1400 = vpop.f32.mrb[0].mxu0
      %v1401 = vadd.f32 %v1219, %v1400
      %v1402 = vpop.f32.mrb[0].mxu0
      %v1403 = vpop.f32.mrb[0].mxu0
      %v1404 = vpop.f32.mrb[0].mxu0
      %1405 = vdwg.mxu0
      %vm1406 = vcmask 64512
      %v1407 = vsel %vm1406, %v1263, -inf
      %1408 = vmax.xlane.f32.xlu0 %v1407
      %v1409 = vpop.xlane.xlu0 %1408
      %v1410 = vsel %vm1406, %v1309, -inf
      %1411 = vmax.xlane.f32.xlu0 %v1410
      %v1412 = vpop.xlane.xlu0 %1411
      %v1413 = vsel %vm1406, %v1355, -inf
      %1414 = vmax.xlane.f32.xlu0 %v1413
      %v1415 = vpop.xlane.xlu0 %1414
      %v1416 = vsel %vm1406, %v1401, -inf
      %1417 = vmax.xlane.f32.xlu0 %v1416
      %v1418 = vpop.xlane.xlu0 %1417
      %v1419 = vsub.f32 %v1263, %v1409
      %v1420 = vsub.f32 %v1309, %v1412
      %v1421 = vsub.f32 %v1355, %v1415
      %v1422 = vsub.f32 %v1401, %v1418
      %v1423 = vmul.f32 %v1419, 1.442695
      %v1424 = vpow.pop %v1423
      %v1425 = vmul.f32 %v1420, 1.442695
      %v1426 = vpow.pop %v1425
      %v1427 = vmul.f32 %v1421, 1.442695
      %v1428 = vpow.pop %v1427
      %v1429 = vmul.f32 %v1422, 1.442695
      %v1430 = vpow.pop %v1429
      %v1431 = vsel %vm1406, %v1424, 0.0
      %1432 = vadd.xlane.f32.xlu0 %v1431
      %v1433 = vpop.xlane.xlu0 %1432
      %v1434 = vsel %vm1406, %v1426, 0.0
      %1435 = vadd.xlane.f32.xlu0 %v1434
      %v1436 = vpop.xlane.xlu0 %1435
      %v1437 = vsel %vm1406, %v1428, 0.0
      %1438 = vadd.xlane.f32.xlu0 %v1437
      %v1439 = vpop.xlane.xlu0 %1438
      %v1440 = vsel %vm1406, %v1430, 0.0
      %1441 = vadd.xlane.f32.xlu0 %v1440
      %v1442 = vpop.xlane.xlu0 %1441
      %v1443 = vrcp.pop %v1433
      %v1444 = vrcp.pop %v1436
      %v1445 = vrcp.pop %v1439
      %v1446 = vrcp.pop %v1442
      %v1447 = vmul.f32 %v1424, %v1443
      %v1448 = vmul.f32 %v1426, %v1444
      %v1449 = vmul.f32 %v1428, %v1445
      %v1450 = vmul.f32 %v1430, %v1446
      %v1451 = vpack.c.bf16 %v1447, %v1447
      %v1452 = vpack.c.bf16 %v1448, %v1448
      %v1453 = vpack.c.bf16 %v1449, %v1449
      %v1454 = vpack.c.bf16 %v1450, %v1450
      %v1456 = vsel %vm1406, %v1451, 0
      %vm1458 = vcmask 1043456
      %v1460 = vsel %vm1458, %v1209, 0
      %1462 = vmatprep.subr.bf16.mxu0 0
      %1463 = vmatpush1.bf16.msra.mxu0 %v1460
      %1464 = vmatprep.subr.bf16.mxu0 0
      %1465 = vmatpush1.bf16.msra.mxu0 0
      %1466 = vmatprep.subr.bf16.mxu0 0
      %1467 = vmatpush1.bf16.msra.mxu0 0
      %1468 = vmatprep.subr.bf16.mxu0 0
      %1469 = vmatpush1.bf16.msra.mxu0 0
      %1470 = vmatprep.subr.bf16.mxu0 0
      %1471 = vmatpush1.bf16.msra.mxu0 0
      %1472 = vmatprep.subr.bf16.mxu0 0
      %1473 = vmatpush1.bf16.msra.mxu0 0
      %1474 = vmatprep.subr.bf16.mxu0 0
      %1475 = vmatpush1.bf16.msra.mxu0 0
      %1476 = vmatprep.subr.bf16.mxu0 0
      %1477 = vmatpush1.bf16.msra.mxu0 0
      %1478 = vmatprep.subr.bf16.mxu0 0
      %1479 = vmatpush1.bf16.msra.mxu0 0
      %1480 = vmatprep.subr.bf16.mxu0 0
      %1481 = vmatpush1.bf16.msra.mxu0 0
      %1482 = vmatprep.subr.bf16.mxu0 0
      %1483 = vmatpush1.bf16.msra.mxu0 0
      %1484 = vmatprep.subr.bf16.mxu0 0
      %1485 = vmatpush1.bf16.msra.mxu0 0
      %1486 = vmatprep.subr.bf16.mxu0 0
      %1487 = vmatpush1.bf16.msra.mxu0 0
      %1488 = vmatprep.subr.bf16.mxu0 0
      %1489 = vmatpush1.bf16.msra.mxu0 0
      %1490 = vmatprep.subr.bf16.mxu0 0
      %1491 = vmatpush1.bf16.msra.mxu0 0
      %1492 = vmatprep.subr.bf16.mxu0 0
      %1493 = vmatpush1.bf16.msra.mxu0 0
      %1494 = vmatprep.mubr.bf16.mxu0 0
      %1495 = vmatmul.mubr.bf16.gmra.mrb[0].mxu0 %v1456
      %v1496 = vpop.f32.mrb[0].mxu0
      %v1497 = vadd.f32 0.0, %v1496
      %v1498 = vpop.f32.mrb[0].mxu0
      %v1499 = vpop.f32.mrb[0].mxu0
      %v1500 = vpop.f32.mrb[0].mxu0
      %1501 = vdwg.mxu0
      %v1503 = vsel %vm1406, %v1452, 0
      %v1506 = vsel %vm1458, %v1210, 0
      %1508 = vmatprep.subr.bf16.mxu0 0
      %1509 = vmatpush1.bf16.msra.mxu0 %v1506
      %1510 = vmatprep.subr.bf16.mxu0 0
      %1511 = vmatpush1.bf16.msra.mxu0 0
      %1512 = vmatprep.subr.bf16.mxu0 0
      %1513 = vmatpush1.bf16.msra.mxu0 0
      %1514 = vmatprep.subr.bf16.mxu0 0
      %1515 = vmatpush1.bf16.msra.mxu0 0
      %1516 = vmatprep.subr.bf16.mxu0 0
      %1517 = vmatpush1.bf16.msra.mxu0 0
      %1518 = vmatprep.subr.bf16.mxu0 0
      %1519 = vmatpush1.bf16.msra.mxu0 0
      %1520 = vmatprep.subr.bf16.mxu0 0
      %1521 = vmatpush1.bf16.msra.mxu0 0
      %1522 = vmatprep.subr.bf16.mxu0 0
      %1523 = vmatpush1.bf16.msra.mxu0 0
      %1524 = vmatprep.subr.bf16.mxu0 0
      %1525 = vmatpush1.bf16.msra.mxu0 0
      %1526 = vmatprep.subr.bf16.mxu0 0
      %1527 = vmatpush1.bf16.msra.mxu0 0
      %1528 = vmatprep.subr.bf16.mxu0 0
      %1529 = vmatpush1.bf16.msra.mxu0 0
      %1530 = vmatprep.subr.bf16.mxu0 0
      %1531 = vmatpush1.bf16.msra.mxu0 0
      %1532 = vmatprep.subr.bf16.mxu0 0
      %1533 = vmatpush1.bf16.msra.mxu0 0
      %1534 = vmatprep.subr.bf16.mxu0 0
      %1535 = vmatpush1.bf16.msra.mxu0 0
      %1536 = vmatprep.subr.bf16.mxu0 0
      %1537 = vmatpush1.bf16.msra.mxu0 0
      %1538 = vmatprep.subr.bf16.mxu0 0
      %1539 = vmatpush1.bf16.msra.mxu0 0
      %1540 = vmatprep.mubr.bf16.mxu0 0
      %1541 = vmatmul.mubr.bf16.gmra.mrb[0].mxu0 %v1503
      %v1542 = vpop.f32.mrb[0].mxu0
      %v1543 = vadd.f32 0.0, %v1542
      %v1544 = vpop.f32.mrb[0].mxu0
      %v1545 = vpop.f32.mrb[0].mxu0
      %v1546 = vpop.f32.mrb[0].mxu0
      %1547 = vdwg.mxu0
      %v1549 = vsel %vm1406, %v1453, 0
      %v1552 = vsel %vm1458, %v1211, 0
      %1554 = vmatprep.subr.bf16.mxu0 0
      %1555 = vmatpush1.bf16.msra.mxu0 %v1552
      %1556 = vmatprep.subr.bf16.mxu0 0
      %1557 = vmatpush1.bf16.msra.mxu0 0
      %1558 = vmatprep.subr.bf16.mxu0 0
      %1559 = vmatpush1.bf16.msra.mxu0 0
      %1560 = vmatprep.subr.bf16.mxu0 0
      %1561 = vmatpush1.bf16.msra.mxu0 0
      %1562 = vmatprep.subr.bf16.mxu0 0
      %1563 = vmatpush1.bf16.msra.mxu0 0
      %1564 = vmatprep.subr.bf16.mxu0 0
      %1565 = vmatpush1.bf16.msra.mxu0 0
      %1566 = vmatprep.subr.bf16.mxu0 0
      %1567 = vmatpush1.bf16.msra.mxu0 0
      %1568 = vmatprep.subr.bf16.mxu0 0
      %1569 = vmatpush1.bf16.msra.mxu0 0
      %1570 = vmatprep.subr.bf16.mxu0 0
      %1571 = vmatpush1.bf16.msra.mxu0 0
      %1572 = vmatprep.subr.bf16.mxu0 0
      %1573 = vmatpush1.bf16.msra.mxu0 0
      %1574 = vmatprep.subr.bf16.mxu0 0
      %1575 = vmatpush1.bf16.msra.mxu0 0
      %1576 = vmatprep.subr.bf16.mxu0 0
      %1577 = vmatpush1.bf16.msra.mxu0 0
      %1578 = vmatprep.subr.bf16.mxu0 0
      %1579 = vmatpush1.bf16.msra.mxu0 0
      %1580 = vmatprep.subr.bf16.mxu0 0
      %1581 = vmatpush1.bf16.msra.mxu0 0
      %1582 = vmatprep.subr.bf16.mxu0 0
      %1583 = vmatpush1.bf16.msra.mxu0 0
      %1584 = vmatprep.subr.bf16.mxu0 0
      %1585 = vmatpush1.bf16.msra.mxu0 0
      %1586 = vmatprep.mubr.bf16.mxu0 0
      %1587 = vmatmul.mubr.bf16.gmra.mrb[0].mxu0 %v1549
      %v1588 = vpop.f32.mrb[0].mxu0
      %v1589 = vadd.f32 0.0, %v1588
      %v1590 = vpop.f32.mrb[0].mxu0
      %v1591 = vpop.f32.mrb[0].mxu0
      %v1592 = vpop.f32.mrb[0].mxu0
      %1593 = vdwg.mxu0
      %v1595 = vsel %vm1406, %v1454, 0
      %v1598 = vsel %vm1458, %v1212, 0
      %1600 = vmatprep.subr.bf16.mxu0 0
      %1601 = vmatpush1.bf16.msra.mxu0 %v1598
      %1602 = vmatprep.subr.bf16.mxu0 0
      %1603 = vmatpush1.bf16.msra.mxu0 0
      %1604 = vmatprep.subr.bf16.mxu0 0
      %1605 = vmatpush1.bf16.msra.mxu0 0
      %1606 = vmatprep.subr.bf16.mxu0 0
      %1607 = vmatpush1.bf16.msra.mxu0 0
      %1608 = vmatprep.subr.bf16.mxu0 0
      %1609 = vmatpush1.bf16.msra.mxu0 0
      %1610 = vmatprep.subr.bf16.mxu0 0
      %1611 = vmatpush1.bf16.msra.mxu0 0
      %1612 = vmatprep.subr.bf16.mxu0 0
      %1613 = vmatpush1.bf16.msra.mxu0 0
      %1614 = vmatprep.subr.bf16.mxu0 0
      %1615 = vmatpush1.bf16.msra.mxu0 0
      %1616 = vmatprep.subr.bf16.mxu0 0
      %1617 = vmatpush1.bf16.msra.mxu0 0
      %1618 = vmatprep.subr.bf16.mxu0 0
      %1619 = vmatpush1.bf16.msra.mxu0 0
      %1620 = vmatprep.subr.bf16.mxu0 0
      %1621 = vmatpush1.bf16.msra.mxu0 0
      %1622 = vmatprep.subr.bf16.mxu0 0
      %1623 = vmatpush1.bf16.msra.mxu0 0
      %1624 = vmatprep.subr.bf16.mxu0 0
      %1625 = vmatpush1.bf16.msra.mxu0 0
      %1626 = vmatprep.subr.bf16.mxu0 0
      %1627 = vmatpush1.bf16.msra.mxu0 0
      %1628 = vmatprep.subr.bf16.mxu0 0
      %1629 = vmatpush1.bf16.msra.mxu0 0
      %1630 = vmatprep.subr.bf16.mxu0 0
      %1631 = vmatpush1.bf16.msra.mxu0 0
      %1632 = vmatprep.mubr.bf16.mxu0 0
      %1633 = vmatmul.mubr.bf16.gmra.mrb[0].mxu0 %v1595
      %v1634 = vpop.f32.mrb[0].mxu0
      %v1635 = vadd.f32 0.0, %v1634
      %v1636 = vpop.f32.mrb[0].mxu0
      %v1637 = vpop.f32.mrb[0].mxu0
      %v1638 = vpop.f32.mrb[0].mxu0
      %1639 = vdwg.mxu0
      %v1640 = vcombine.low %v1497, %v1589
      %v1641 = vcombine.high %v1497, %v1589
      %v1643 = vunpack.c.l.s4 1983009808
      %v1644 = vunpack.c.0.s8 %v1643
      %v1645 = vlaneseq
      %v1646 = vshrl.u32 %v1645, 7
      %v1647 = vsub.s32 %v1644, %v1646
      %v1648 = vrot.slane %v1640, %v1647
      %v1650 = vunpack.c.l.s4 1983009808
      %v1651 = vunpack.c.0.s8 %v1650
      %v1652 = vlaneseq
      %v1653 = vshrl.u32 %v1652, 7
      %v1654 = vsub.s32 %v1651, %v1653
      %v1655 = vrot.slane %v1641, %v1654
      %v1656 = vcombine.low %v1543, %v1635
      %v1657 = vcombine.high %v1543, %v1635
      %v1659 = vunpack.c.l.s4 1983009808
      %v1660 = vunpack.c.0.s8 %v1659
      %v1661 = vlaneseq
      %v1662 = vshrl.u32 %v1661, 7
      %v1663 = vsub.s32 %v1660, %v1662
      %v1664 = vrot.slane %v1656, %v1663
      %v1666 = vunpack.c.l.s4 1983009808
      %v1667 = vunpack.c.0.s8 %v1666
      %v1668 = vlaneseq
      %v1669 = vshrl.u32 %v1668, 7
      %v1670 = vsub.s32 %v1667, %v1669
      %v1671 = vrot.slane %v1657, %v1670
      %v1672 = vcombine.low %v1648, %v1664
      %v1673 = vcombine.high %v1648, %v1664
      %v1675 = vunpack.c.l.s4 1934713408
      %v1676 = vunpack.c.0.s8 %v1675
      %v1677 = vlaneseq
      %v1678 = vshrl.u32 %v1677, 7
      %v1679 = vsub.s32 %v1676, %v1678
      %v1680 = vrot.slane %v1672, %v1679
      %v1682 = vunpack.c.l.s4 1934713408
      %v1683 = vunpack.c.0.s8 %v1682
      %v1684 = vlaneseq
      %v1685 = vshrl.u32 %v1684, 7
      %v1686 = vsub.s32 %v1683, %v1685
      %v1687 = vrot.slane %v1673, %v1686
      %v1688 = vcombine.low %v1655, %v1671
      %v1689 = vcombine.high %v1655, %v1671
      %v1691 = vunpack.c.l.s4 1934713408
      %v1692 = vunpack.c.0.s8 %v1691
      %v1693 = vlaneseq
      %v1694 = vshrl.u32 %v1693, 7
      %v1695 = vsub.s32 %v1692, %v1694
      %v1696 = vrot.slane %v1688, %v1695
      %v1698 = vunpack.c.l.s4 1934713408
      %v1699 = vunpack.c.0.s8 %v1698
      %v1700 = vlaneseq
      %v1701 = vshrl.u32 %v1700, 7
      %v1702 = vsub.s32 %v1699, %v1701
      %v1703 = vrot.slane %v1689, %v1702
      %v1704 = vcombine.high %v1680, 0.0
      %v1705 = vcombine.high %v1687, 0.0
      %v1706 = vcombine.high %v1696, 0.0
      %v1707 = vcombine.high %v1703, 0.0
      %v1708 = vcombine.low %v1680, %v1687
      %v1710 = vunpack.c.l.s4 1983009808
      %v1711 = vunpack.c.0.s8 %v1710
      %v1712 = vlaneseq
      %v1713 = vshrl.u32 %v1712, 7
      %v1714 = vsub.s32 %v1711, %v1713
      %v1715 = vrot.slane %v1708, %v1714
      %v1716 = vcombine.low %v1704, %v1705
      %v1718 = vunpack.c.l.s4 1983009808
      %v1719 = vunpack.c.0.s8 %v1718
      %v1720 = vlaneseq
      %v1721 = vshrl.u32 %v1720, 7
      %v1722 = vsub.s32 %v1719, %v1721
      %v1723 = vrot.slane %v1716, %v1722
      %v1724 = vcombine.low %v1696, %v1703
      %v1726 = vunpack.c.l.s4 1983009808
      %v1727 = vunpack.c.0.s8 %v1726
      %v1728 = vlaneseq
      %v1729 = vshrl.u32 %v1728, 7
      %v1730 = vsub.s32 %v1727, %v1729
      %v1731 = vrot.slane %v1724, %v1730
      %v1732 = vcombine.low %v1706, %v1707
      %v1734 = vunpack.c.l.s4 1983009808
      %v1735 = vunpack.c.0.s8 %v1734
      %v1736 = vlaneseq
      %v1737 = vshrl.u32 %v1736, 7
      %v1738 = vsub.s32 %v1735, %v1737
      %v1739 = vrot.slane %v1732, %v1738
      %v1740 = vcombine.low %v1715, %v1723
      %v1741 = vcombine.high %v1715, %v1723
      %v1743 = vunpack.c.l.s4 1934713408
      %v1744 = vunpack.c.0.s8 %v1743
      %v1745 = vlaneseq
      %v1746 = vshrl.u32 %v1745, 7
      %v1747 = vsub.s32 %v1744, %v1746
      %v1748 = vrot.slane %v1740, %v1747
      %v1750 = vunpack.c.l.s4 1934713408
      %v1751 = vunpack.c.0.s8 %v1750
      %v1752 = vlaneseq
      %v1753 = vshrl.u32 %v1752, 7
      %v1754 = vsub.s32 %v1751, %v1753
      %v1755 = vrot.slane %v1741, %v1754
      %v1756 = vcombine.low %v1731, %v1739
      %v1757 = vcombine.high %v1731, %v1739
      %v1759 = vunpack.c.l.s4 1934713408
      %v1760 = vunpack.c.0.s8 %v1759
      %v1761 = vlaneseq
      %v1762 = vshrl.u32 %v1761, 7
      %v1763 = vsub.s32 %v1760, %v1762
      %v1764 = vrot.slane %v1756, %v1763
      %v1766 = vunpack.c.l.s4 1934713408
      %v1767 = vunpack.c.0.s8 %v1766
      %v1768 = vlaneseq
      %v1769 = vshrl.u32 %v1768, 7
      %v1770 = vsub.s32 %v1767, %v1769
      %v1771 = vrot.slane %v1757, %v1770
      %v1772 = vcombine.low %v1748, %v1764
      %v1773 = vcombine.high %v1748, %v1764
      %v1774 = vcombine.low %v1755, %v1771
      %v1775 = vcombine.high %v1755, %v1771
      %1777 = vrot.lane.b32.xlu0 %v1773, 32
      %v1778 = vpop.permute.xlu0 %1777
      %1781 = vrot.lane.b32.xlu0 %v1774, 64
      %v1782 = vpop.permute.xlu0 %1781
      %1785 = vrot.lane.b32.xlu0 %v1775, 96
      %v1786 = vpop.permute.xlu0 %1785
      %v1788 = vsel %vm1221, %v1772, %v1778
      %vm1789 = vcmask 523264
      %v1790 = vsel %vm1789, %v1788, %v1782
      %vm1791 = vcmask 785408
      %v1792 = vsel %vm1791, %v1790, %v1786
      %v1793 = vpack.c.bf16 %v1792, %v1792
      %v1794 = vld [vmem:[%s8] sm:$0xf]
      %v1795 = vld [vmem:[%s8 + $0x4] sm:$0xf]
      %v1796 = vld [vmem:[%s8 + $0x8] sm:$0xf]
      %v1797 = vld [vmem:[%s8 + $0xc] sm:$0xf]
      %v1798 = vld [vmem:[%s8 + $0x10] sm:$0xf]
      %v1799 = vld [vmem:[%s8 + $0x14] sm:$0xf]
      %v1800 = vld [vmem:[%s8 + $0x18] sm:$0xf]
      %v1801 = vld [vmem:[%s8 + $0x1c] sm:$0xf]
      %v1802 = vld [vmem:[%s8 + $0x20] sm:$0xf]
      %v1803 = vld [vmem:[%s8 + $0x24] sm:$0xf]
      %v1804 = vld [vmem:[%s8 + $0x28] sm:$0xf]
      %v1805 = vld [vmem:[%s8 + $0x2c] sm:$0xf]
      %v1806 = vld [vmem:[%s8 + $0x30] sm:$0xf]
      %v1807 = vld [vmem:[%s8 + $0x34] sm:$0xf]
      %v1808 = vld [vmem:[%s8 + $0x38] sm:$0xf]
      %v1809 = vld [vmem:[%s8 + $0x3c] sm:$0xf]
      %v1810 = vld [vmem:[%s9] sm:$0x1]
      %v1812 = vlaneseq
      %v1813 = vshrl.u32 %v1812, 7
      %v1814 = vsub.s32 0, %v1813
      %v1815 = vrot.slane %v1810, %v1814
      %v1833 = vunpack.c.l.b16 %v1794
      %v1834 = vunpack.c.l.b16 %v1795
      %v1835 = vunpack.c.l.b16 %v1796
      %v1836 = vunpack.c.l.b16 %v1797
      %v1837 = vunpack.c.l.b16 %v1798
      %v1838 = vunpack.c.l.b16 %v1799
      %v1839 = vunpack.c.l.b16 %v1800
      %v1840 = vunpack.c.l.b16 %v1801
      %v1841 = vunpack.c.l.b16 %v1802
      %v1842 = vunpack.c.l.b16 %v1803
      %v1843 = vunpack.c.l.b16 %v1804
      %v1844 = vunpack.c.l.b16 %v1805
      %v1845 = vunpack.c.l.b16 %v1806
      %v1846 = vunpack.c.l.b16 %v1807
      %v1847 = vunpack.c.l.b16 %v1808
      %v1848 = vunpack.c.l.b16 %v1809
      %v1849 = vpack.c.b16 %v1834, %v1833
      %v1850 = vpack.c.b16 %v1836, %v1835
      %v1851 = vpack.c.b16 %v1838, %v1837
      %v1852 = vpack.c.b16 %v1840, %v1839
      %v1853 = vpack.c.b16 %v1842, %v1841
      %v1854 = vpack.c.b16 %v1844, %v1843
      %v1855 = vpack.c.b16 %v1846, %v1845
      %v1856 = vpack.c.b16 %v1848, %v1847
      %1865 = vmatprep.subr.bf16.mxu0 0
      %1866 = vmatpush1.bf16.msra.mxu0 %v1849
      %1867 = vmatprep.subr.bf16.mxu0 0
      %1868 = vmatpush1.bf16.msra.mxu0 %v1850
      %1869 = vmatprep.subr.bf16.mxu0 0
      %1870 = vmatpush1.bf16.msra.mxu0 %v1851
      %1871 = vmatprep.subr.bf16.mxu0 0
      %1872 = vmatpush1.bf16.msra.mxu0 %v1852
      %1873 = vmatprep.subr.bf16.mxu0 0
      %1874 = vmatpush1.bf16.msra.mxu0 %v1853
      %1875 = vmatprep.subr.bf16.mxu0 0
      %1876 = vmatpush1.bf16.msra.mxu0 %v1854
      %1877 = vmatprep.subr.bf16.mxu0 0
      %1878 = vmatpush1.bf16.msra.mxu0 %v1855
      %1879 = vmatprep.subr.bf16.mxu0 0
      %1880 = vmatpush1.bf16.msra.mxu0 %v1856
      %1881 = vmatprep.subr.bf16.mxu0 0
      %1882 = vmatpush1.bf16.msra.mxu0 0
      %1883 = vmatprep.subr.bf16.mxu0 0
      %1884 = vmatpush1.bf16.msra.mxu0 0
      %1885 = vmatprep.subr.bf16.mxu0 0
      %1886 = vmatpush1.bf16.msra.mxu0 0
      %1887 = vmatprep.subr.bf16.mxu0 0
      %1888 = vmatpush1.bf16.msra.mxu0 0
      %1889 = vmatprep.subr.bf16.mxu0 0
      %1890 = vmatpush1.bf16.msra.mxu0 0
      %1891 = vmatprep.subr.bf16.mxu0 0
      %1892 = vmatpush1.bf16.msra.mxu0 0
      %1893 = vmatprep.subr.bf16.mxu0 0
      %1894 = vmatpush1.bf16.msra.mxu0 0
      %1895 = vmatprep.subr.bf16.mxu0 0
      %1896 = vmatpush1.bf16.msra.mxu0 0
      %1897 = vmatprep.mubr.bf16.mxu0 0
      %1898 = vmatmul.mubr.bf16.gmra.mrb[0].mxu0 %v1793
      %v1899 = vpop.f32.mrb[0].mxu0
      %v1900 = vadd.f32 %v1815, %v1899
      %v1901 = vpop.f32.mrb[0].mxu0
      %v1902 = vpop.f32.mrb[0].mxu0
      %v1903 = vpop.f32.mrb[0].mxu0
      %1904 = vdwg.mxu0
      %v1905 = vadd.f32 %v1900, %v502
      %1906 = vadd.xlane.f32.xlu0 %v1905
      %v1907 = vpop.xlane.xlu0 %1906
      %v1908 = vrcp.pop 128.0
      %v1909 = vmul.f32 %v1907, %v1908
      %v1910 = vsub.f32 %v1905, %v1909
      %v1911 = vmul.f32 %v1910, %v1910
      %1912 = vadd.xlane.f32.xlu0 %v1911
      %v1913 = vpop.xlane.xlu0 %1912
      %v1914 = vmul.f32 %v1913, %v1908
      %v1915 = vadd.f32 %v1914, 1e-05
      %v1916 = vrsqrt.pop %v1915
      %v1917 = vmul.f32 %v1910, %v1916
      %v1918 = vld [vmem:[%s10] sm:$0x1]
      %v1920 = vlaneseq
      %v1921 = vshrl.u32 %v1920, 7
      %v1922 = vsub.s32 0, %v1921
      %v1923 = vrot.slane %v1918, %v1922
      %v1925 = vmul.f32 %v1917, %v1923
      %v1926 = vld [vmem:[%s11] sm:$0x1]
      %v1928 = vlaneseq
      %v1929 = vshrl.u32 %v1928, 7
      %v1930 = vsub.s32 0, %v1929
      %v1931 = vrot.slane %v1926, %v1930
      %v1933 = vadd.f32 %v1925, %v1931
      %v1934 = vld [vmem:[%s491] sm:$0xff]
      %1936 = vset.pattern.permute.xlu0 0
      %1937 = vperm.xlu0 %1936, %v1934
      %v1938 = vpop.permute.xlu0 %1937
      %v1940 = vmul.f32 %v1933, %v1938
      %v1941 = vpack.c.bf16 %v1940, %v1940
      %1942 = vst [vmem:[%s498] sm:$0xf] %v1941
      %p1943 = scmp.lt.s32.totalorder %s27, 1
      %s1944 = scalar_select %p1943, %s27, 1
      %p1945 = scmp.lt.s32.totalorder %s28, 0
      %s1946 = scalar_select %p1945, %s28, 0
      %s1947 = sadd.s32 %s1946, %s1944
      %s1948 = smul.addr %s1947, 4
      %s1949 = scalar_lea.vmem %s12, %s1948
      // Predicated region
      $region69: #{transformer_decoder_forward.14} parent=67 // pred_check
        %p1950 = pneg %p331
      $region70: #{transformer_decoder_forward.14} parent=67 // pred_check_branch
        %1952 = sbr.rel (%p1950) target = $region72
      $region71: #{transformer_decoder_forward.14} parent=67 // pred_region
        _
      $region72: #{transformer_decoder_forward.14} parent=67 // pred_fallthru
        _
    $region68: #{transformer_decoder_forward.14} parent=5 // pred_fallthru
      _
    %p1953 = scmp.le.s32.totalorder 2, %s18
    // Predicated region
    $region73: #{transformer_decoder_forward.14} parent=5 // pred_check
      %p1954 = pneg %p1953
    $region74: #{transformer_decoder_forward.14} parent=5 // pred_check_branch
      %1956 = sbr.rel (%p1954) target = $region76
    $region75: #{transformer_decoder_forward.14} parent=5 // pred_region
      %s1957 = ssub.s32 %s18, 2
      // Predicated region
      $region77: #{transformer_decoder_forward.14} parent=75 // pred_check
        %p1958 = pneg %p337
      $region78: #{transformer_decoder_forward.14} parent=75 // pred_check_branch
        %1960 = sbr.rel (%p1958) target = $region80
      $region79: #{transformer_decoder_forward.14} parent=75 // pred_region
        %p1961 = scmp.lt.s32.totalorder %s29, 1
        %s1962 = scalar_select %p1961, %s29, 1
        %p1963 = scmp.lt.s32.totalorder %s30, 0
        %s1964 = scalar_select %p1963, %s30, 0
        %s1965 = sadd.s32 %s1964, %s1962
        %s1966 = smul.addr %s1965, 4
        %s1967 = scalar_lea.vmem %s12, %s1966
      $region80: #{transformer_decoder_forward.14} parent=75 // pred_fallthru
        _
    $region76: #{transformer_decoder_forward.14} parent=5 // pred_fallthru
      _
  $region6: #{transformer_decoder_forward.14} parent=0 // loop_footer
    %s22 = sadd.s32 1, %s18
  $region7: #{transformer_decoder_forward.14} parent=0 // loop_footer_branch
    %17 = sbr.rel target = $region3
  $region8: #{transformer_decoder_forward.14} parent=0 // loop_exit
    _

// kernel: transformer_decoder_forward.15
$region0: #{transformer_decoder_forward.15}
  #allocation0 [shape = 'u32[]', space=smem, size = 0x4, offset = 0x4, fixed_abs, tag = 'smem constant byte address 0x4 - core index']
  #allocation1 [shape = 'u32[144,128]{1,0:T(1,128)}', space=vmem, size = 0x12000, scoped, tag = 'internal scratch']
  %s0 = inlined_call_operand.vmem [shape: bf16[2,8,128], index: 0, kind: input, shape index: {}]
  %s1 = inlined_call_operand.vmem [shape: f32[2,8,1], index: 1, kind: input, shape index: {}]
  %s2 = inlined_call_operand.vmem [shape: bf16[128,512], index: 2, kind: input, shape index: {}]
  %s3 = inlined_call_operand.vmem [shape: f32[1,512], index: 3, kind: input, shape index: {}]
  %s4 = inlined_call_operand.vmem [shape: bf16[512,128], index: 4, kind: input, shape index: {}]
  %s5 = inlined_call_operand.vmem [shape: f32[1,128], index: 5, kind: input, shape index: {}]
  %s6 = inlined_call_operand.vmem [shape: f32[1,128], index: 6, kind: input, shape index: {}]
  %s7 = inlined_call_operand.vmem [shape: f32[1,128], index: 7, kind: input, shape index: {}]
  %s8 = inlined_call_operand.vmem [shape: bf16[2,8,128], index: 8, kind: output, shape index: {}]
  %s9 = sld [smem:[#allocation0]]
  $region65: #{transformer_decoder_forward.15} parent=0
    _
  %s11 = ssub.s32 1, %s9
  %s12 = scalar_select 0, %s11, %s9
  loop: start=0, step=1, limit=4
  $region2: #{transformer_decoder_forward.15} parent=0 // loop_pre_header
    _
  $region3: #{transformer_decoder_forward.15} parent=0 // loop_header
    %s14 = sphi 0, %s18
    %p15 = scmp.ge.s32.totalorder %s14, 4
    %s21 = sphi 0, %s33
    %s22 = sphi 0, %s29
    %s23 = sphi 0, %s21
    %s24 = sphi 0, %s22
    %s25 = sphi 0, %s23
    %s26 = sphi 0, %s24
    %s38 = sphi 0, %s40
    %s41 = sphi 0, %s38
    %s42 = sphi 0, %s41
    %s58 = sphi 0, %s42
    %s66 = sphi 0, %s68
    %s69 = sphi 0, %s66
    %s70 = sphi 0, %s69
    %s86 = sphi 0, %s70
    %s90 = sphi 0, %s90
    %s92 = sphi 0, %s90
    %s93 = sphi 0, %s92
    %s107 = sphi 0, %s93
    %s111 = sphi 0, %s111
    %s113 = sphi 0, %s111
    %s114 = sphi 0, %s113
    %s128 = sphi 0, %s114
    %s132 = sphi 0, %s132
    %s134 = sphi 0, %s132
    %s135 = sphi 0, %s134
    %s149 = sphi 0, %s135
    %s153 = sphi 0, %s153
    %s155 = sphi 0, %s153
    %s156 = sphi 0, %s155
    %s170 = sphi 0, %s156
    %s174 = sphi 0, %s174
    %s176 = sphi 0, %s174
    %s177 = sphi 0, %s176
    %s191 = sphi 0, %s177
    %s195 = sphi 0, %s195
    %s197 = sphi 0, %s195
    %s198 = sphi 0, %s197
    %s212 = sphi 0, %s198
    %s220 = sphi 0, %s222
    %s223 = sphi 0, %s220
    %s224 = sphi 0, %s223
    %s240 = sphi 0, %s224
  $region4: #{transformer_decoder_forward.15} parent=0 // loop_header_branch
    %17 = sbr.rel (%p15) target = $region8
  $region5: #{transformer_decoder_forward.15} parent=0 // loop_body
    %s19 = ssub.s32 %s14, 1
    %s20 = ssub.s32 %s14, 2
    %s27 = sadd.s32 1, %s22
    %p28 = scmp.ge.s32.totalorder %s27, 1
    %s29 = scalar_select %p28, 0, %s27
    %s30 = sadd.s32 1, %s21
    %s31 = scalar_select %p28, %s30, %s21
    %p32 = scmp.ge.s32.totalorder %s31, 2
    %s33 = scalar_select %p32, 0, %s31
    %s34 = ssub.s32 %s21, %s33
    %s35 = ssub.s32 %s22, %s29
    %s36 = sor.u32 %s34, %s35
    %p37 = scmp.eq.s32.totalorder %s36, 0
    %s39 = sadd.s32 %s38, 1
    %s40 = scalar_select %p37, %s38, %s39
    %p43 = pneg %p37
    %p44 = scmp.eq.s32.totalorder %s14, 1
    %p45 = por %p43, %p44
    %p46 = scmp.ne.s32.totalorder %s38, %s41
    %p47 = scmp.eq.s32.totalorder %s14, 0
    %p48 = por %p46, %p47
    %p49 = scmp.ne.s32.totalorder %s38, %s41
    %p50 = scmp.eq.s32.totalorder %s19, 1
    %p51 = por %p49, %p50
    %p52 = scmp.ne.s32.totalorder %s41, %s42
    %p53 = scmp.eq.s32.totalorder %s19, 0
    %p54 = por %p52, %p53
    %p55 = scmp.ne.s32.totalorder %s41, %s42
    %p56 = scmp.eq.s32.totalorder %s20, 1
    %p57 = por %p55, %p56
    %p59 = scmp.ne.s32.totalorder %s42, %s58
    %p60 = scmp.eq.s32.totalorder %s20, 0
    %p61 = por %p59, %p60
    %s62 = ssub.s32 %s21, %s33
    %s63 = ssub.s32 %s22, %s29
    %s64 = sor.u32 %s62, %s63
    %p65 = scmp.eq.s32.totalorder %s64, 0
    %s67 = sadd.s32 %s66, 1
    %s68 = scalar_select %p65, %s66, %s67
    %p71 = pneg %p65
    %p72 = scmp.eq.s32.totalorder %s14, 1
    %p73 = por %p71, %p72
    %p74 = scmp.ne.s32.totalorder %s66, %s69
    %p75 = scmp.eq.s32.totalorder %s14, 0
    %p76 = por %p74, %p75
    %p77 = scmp.ne.s32.totalorder %s66, %s69
    %p78 = scmp.eq.s32.totalorder %s19, 1
    %p79 = por %p77, %p78
    %p80 = scmp.ne.s32.totalorder %s69, %s70
    %p81 = scmp.eq.s32.totalorder %s19, 0
    %p82 = por %p80, %p81
    %p83 = scmp.ne.s32.totalorder %s69, %s70
    %p84 = scmp.eq.s32.totalorder %s20, 1
    %p85 = por %p83, %p84
    %p87 = scmp.ne.s32.totalorder %s70, %s86
    %p88 = scmp.eq.s32.totalorder %s20, 0
    %p89 = por %p87, %p88
    %s91 = sadd.s32 %s90, 1
    %p94 = scmp.eq.s32.totalorder %s14, 1
    %p95 = scmp.ne.s32.totalorder %s90, %s92
    %p96 = scmp.eq.s32.totalorder %s14, 0
    %p97 = por %p95, %p96
    %p98 = scmp.ne.s32.totalorder %s90, %s92
    %p99 = scmp.eq.s32.totalorder %s19, 1
    %p100 = por %p98, %p99
    %p101 = scmp.ne.s32.totalorder %s92, %s93
    %p102 = scmp.eq.s32.totalorder %s19, 0
    %p103 = por %p101, %p102
    %p104 = scmp.ne.s32.totalorder %s92, %s93
    %p105 = scmp.eq.s32.totalorder %s20, 1
    %p106 = por %p104, %p105
    %p108 = scmp.ne.s32.totalorder %s93, %s107
    %p109 = scmp.eq.s32.totalorder %s20, 0
    %p110 = por %p108, %p109
    %s112 = sadd.s32 %s111, 1
    %p115 = scmp.eq.s32.totalorder %s14, 1
    %p116 = scmp.ne.s32.totalorder %s111, %s113
    %p117 = scmp.eq.s32.totalorder %s14, 0
    %p118 = por %p116, %p117
    %p119 = scmp.ne.s32.totalorder %s111, %s113
    %p120 = scmp.eq.s32.totalorder %s19, 1
    %p121 = por %p119, %p120
    %p122 = scmp.ne.s32.totalorder %s113, %s114
    %p123 = scmp.eq.s32.totalorder %s19, 0
    %p124 = por %p122, %p123
    %p125 = scmp.ne.s32.totalorder %s113, %s114
    %p126 = scmp.eq.s32.totalorder %s20, 1
    %p127 = por %p125, %p126
    %p129 = scmp.ne.s32.totalorder %s114, %s128
    %p130 = scmp.eq.s32.totalorder %s20, 0
    %p131 = por %p129, %p130
    %s133 = sadd.s32 %s132, 1
    %p136 = scmp.eq.s32.totalorder %s14, 1
    %p137 = scmp.ne.s32.totalorder %s132, %s134
    %p138 = scmp.eq.s32.totalorder %s14, 0
    %p139 = por %p137, %p138
    %p140 = scmp.ne.s32.totalorder %s132, %s134
    %p141 = scmp.eq.s32.totalorder %s19, 1
    %p142 = por %p140, %p141
    %p143 = scmp.ne.s32.totalorder %s134, %s135
    %p144 = scmp.eq.s32.totalorder %s19, 0
    %p145 = por %p143, %p144
    %p146 = scmp.ne.s32.totalorder %s134, %s135
    %p147 = scmp.eq.s32.totalorder %s20, 1
    %p148 = por %p146, %p147
    %p150 = scmp.ne.s32.totalorder %s135, %s149
    %p151 = scmp.eq.s32.totalorder %s20, 0
    %p152 = por %p150, %p151
    %s154 = sadd.s32 %s153, 1
    %p157 = scmp.eq.s32.totalorder %s14, 1
    %p158 = scmp.ne.s32.totalorder %s153, %s155
    %p159 = scmp.eq.s32.totalorder %s14, 0
    %p160 = por %p158, %p159
    %p161 = scmp.ne.s32.totalorder %s153, %s155
    %p162 = scmp.eq.s32.totalorder %s19, 1
    %p163 = por %p161, %p162
    %p164 = scmp.ne.s32.totalorder %s155, %s156
    %p165 = scmp.eq.s32.totalorder %s19, 0
    %p166 = por %p164, %p165
    %p167 = scmp.ne.s32.totalorder %s155, %s156
    %p168 = scmp.eq.s32.totalorder %s20, 1
    %p169 = por %p167, %p168
    %p171 = scmp.ne.s32.totalorder %s156, %s170
    %p172 = scmp.eq.s32.totalorder %s20, 0
    %p173 = por %p171, %p172
    %s175 = sadd.s32 %s174, 1
    %p178 = scmp.eq.s32.totalorder %s14, 1
    %p179 = scmp.ne.s32.totalorder %s174, %s176
    %p180 = scmp.eq.s32.totalorder %s14, 0
    %p181 = por %p179, %p180
    %p182 = scmp.ne.s32.totalorder %s174, %s176
    %p183 = scmp.eq.s32.totalorder %s19, 1
    %p184 = por %p182, %p183
    %p185 = scmp.ne.s32.totalorder %s176, %s177
    %p186 = scmp.eq.s32.totalorder %s19, 0
    %p187 = por %p185, %p186
    %p188 = scmp.ne.s32.totalorder %s176, %s177
    %p189 = scmp.eq.s32.totalorder %s20, 1
    %p190 = por %p188, %p189
    %p192 = scmp.ne.s32.totalorder %s177, %s191
    %p193 = scmp.eq.s32.totalorder %s20, 0
    %p194 = por %p192, %p193
    %s196 = sadd.s32 %s195, 1
    %p199 = scmp.eq.s32.totalorder %s14, 1
    %p200 = scmp.ne.s32.totalorder %s195, %s197
    %p201 = scmp.eq.s32.totalorder %s14, 0
    %p202 = por %p200, %p201
    %p203 = scmp.ne.s32.totalorder %s195, %s197
    %p204 = scmp.eq.s32.totalorder %s19, 1
    %p205 = por %p203, %p204
    %p206 = scmp.ne.s32.totalorder %s197, %s198
    %p207 = scmp.eq.s32.totalorder %s19, 0
    %p208 = por %p206, %p207
    %p209 = scmp.ne.s32.totalorder %s197, %s198
    %p210 = scmp.eq.s32.totalorder %s20, 1
    %p211 = por %p209, %p210
    %p213 = scmp.ne.s32.totalorder %s198, %s212
    %p214 = scmp.eq.s32.totalorder %s20, 0
    %p215 = por %p213, %p214
    %s216 = ssub.s32 %s21, %s33
    %s217 = ssub.s32 %s22, %s29
    %s218 = sor.u32 %s216, %s217
    %p219 = scmp.eq.s32.totalorder %s218, 0
    %s221 = sadd.s32 %s220, 1
    %s222 = scalar_select %p219, %s220, %s221
    %p225 = pneg %p219
    %p226 = scmp.eq.s32.totalorder %s14, 1
    %p227 = por %p225, %p226
    %p228 = scmp.ne.s32.totalorder %s220, %s223
    %p229 = scmp.eq.s32.totalorder %s14, 0
    %p230 = por %p228, %p229
    %p231 = scmp.ne.s32.totalorder %s220, %s223
    %p232 = scmp.eq.s32.totalorder %s19, 1
    %p233 = por %p231, %p232
    %p234 = scmp.ne.s32.totalorder %s223, %s224
    %p235 = scmp.eq.s32.totalorder %s19, 0
    %p236 = por %p234, %p235
    %p237 = scmp.ne.s32.totalorder %s223, %s224
    %p238 = scmp.eq.s32.totalorder %s20, 1
    %p239 = por %p237, %p238
    %p241 = scmp.ne.s32.totalorder %s224, %s240
    %p242 = scmp.eq.s32.totalorder %s20, 0
    %p243 = por %p241, %p242
    %p244 = scmp.le.s32.totalorder 1, %s14
    %p245 = scmp.lt.s32.totalorder %s14, 3
    %p246 = pnand %p244, %p245
    %p247 = pneg %p246
    // Predicated region
    $region9: #{transformer_decoder_forward.15} parent=5 // pred_check
      _
    $region10: #{transformer_decoder_forward.15} parent=5 // pred_check_branch
      %249 = sbr.rel (%p246) target = $region12
    $region11: #{transformer_decoder_forward.15} parent=5 // pred_region
      %s250 = ssub.s32 %s14, 1
      // Predicated region
      $region13: #{transformer_decoder_forward.15} parent=11 // pred_check
        %p251 = pneg %p103
      $region14: #{transformer_decoder_forward.15} parent=11 // pred_check_branch
        %253 = sbr.rel (%p251) target = $region16
      $region15: #{transformer_decoder_forward.15} parent=11 // pred_region
        _
      $region16: #{transformer_decoder_forward.15} parent=11 // pred_fallthru
        _
      // Predicated region
      $region17: #{transformer_decoder_forward.15} parent=11 // pred_check
        %p254 = pneg %p124
      $region18: #{transformer_decoder_forward.15} parent=11 // pred_check_branch
        %256 = sbr.rel (%p254) target = $region20
      $region19: #{transformer_decoder_forward.15} parent=11 // pred_region
        _
      $region20: #{transformer_decoder_forward.15} parent=11 // pred_fallthru
        _
      // Predicated region
      $region21: #{transformer_decoder_forward.15} parent=11 // pred_check
        %p257 = pneg %p145
      $region22: #{transformer_decoder_forward.15} parent=11 // pred_check_branch
        %259 = sbr.rel (%p257) target = $region24
      $region23: #{transformer_decoder_forward.15} parent=11 // pred_region
        _
      $region24: #{transformer_decoder_forward.15} parent=11 // pred_fallthru
        _
      // Predicated region
      $region25: #{transformer_decoder_forward.15} parent=11 // pred_check
        %p260 = pneg %p166
      $region26: #{transformer_decoder_forward.15} parent=11 // pred_check_branch
        %262 = sbr.rel (%p260) target = $region28
      $region27: #{transformer_decoder_forward.15} parent=11 // pred_region
        _
      $region28: #{transformer_decoder_forward.15} parent=11 // pred_fallthru
        _
      // Predicated region
      $region29: #{transformer_decoder_forward.15} parent=11 // pred_check
        %p263 = pneg %p187
      $region30: #{transformer_decoder_forward.15} parent=11 // pred_check_branch
        %265 = sbr.rel (%p263) target = $region32
      $region31: #{transformer_decoder_forward.15} parent=11 // pred_region
        _
      $region32: #{transformer_decoder_forward.15} parent=11 // pred_fallthru
        _
      // Predicated region
      $region33: #{transformer_decoder_forward.15} parent=11 // pred_check
        %p266 = pneg %p208
      $region34: #{transformer_decoder_forward.15} parent=11 // pred_check_branch
        %268 = sbr.rel (%p266) target = $region36
      $region35: #{transformer_decoder_forward.15} parent=11 // pred_region
        _
      $region36: #{transformer_decoder_forward.15} parent=11 // pred_fallthru
        _
    $region12: #{transformer_decoder_forward.15} parent=5 // pred_fallthru
      _
    %p269 = scmp.lt.s32.totalorder %s14, 2
    // Predicated region
    $region37: #{transformer_decoder_forward.15} parent=5 // pred_check
      %p270 = pneg %p269
    $region38: #{transformer_decoder_forward.15} parent=5 // pred_check_branch
      %272 = sbr.rel (%p270) target = $region40
    $region39: #{transformer_decoder_forward.15} parent=5 // pred_region
      // Predicated region
      $region41: #{transformer_decoder_forward.15} parent=39 // pred_check
        %p273 = pneg %p48
      $region42: #{transformer_decoder_forward.15} parent=39 // pred_check_branch
        %275 = sbr.rel (%p273) target = $region44
      $region43: #{transformer_decoder_forward.15} parent=39 // pred_region
        %p276 = scmp.lt.s32.totalorder %s21, 1
        %s277 = scalar_select %p276, %s21, 1
        %p278 = scmp.lt.s32.totalorder %s22, 0
        %s279 = scalar_select %p278, %s22, 0
        %s280 = sadd.s32 %s279, %s277
        %s281 = smul.addr %s280, 4
        %s282 = scalar_lea.vmem %s0, %s281
      $region44: #{transformer_decoder_forward.15} parent=39 // pred_fallthru
        _
      // Predicated region
      $region45: #{transformer_decoder_forward.15} parent=39 // pred_check
        %p283 = pneg %p76
      $region46: #{transformer_decoder_forward.15} parent=39 // pred_check_branch
        %285 = sbr.rel (%p283) target = $region48
      $region47: #{transformer_decoder_forward.15} parent=39 // pred_region
        %p286 = scmp.lt.s32.totalorder %s21, 1
        %s287 = scalar_select %p286, %s21, 1
        %p288 = scmp.lt.s32.totalorder %s22, 0
        %s289 = scalar_select %p288, %s22, 0
        %s290 = sadd.s32 %s289, %s287
        %s291 = smul.addr %s290, 8
        %s292 = scalar_lea.vmem %s1, %s291
      $region48: #{transformer_decoder_forward.15} parent=39 // pred_fallthru
        _
    $region40: #{transformer_decoder_forward.15} parent=5 // pred_fallthru
      _
    %p293 = scmp.le.s32.totalorder 1, %s14
    %p294 = scmp.lt.s32.totalorder %s14, 3
    %p295 = pnand %p293, %p294
    %p296 = pneg %p295
    // Predicated region
    $region49: #{transformer_decoder_forward.15} parent=5 // pred_check
      _
    $region50: #{transformer_decoder_forward.15} parent=5 // pred_check_branch
      %298 = sbr.rel (%p295) target = $region52
    $region51: #{transformer_decoder_forward.15} parent=5 // pred_region
      %s299 = ssub.s32 %s14, 1
      %p300 = scmp.lt.s32.totalorder %s23, 1
      %s301 = scalar_select %p300, %s23, 1
      %p302 = scmp.lt.s32.totalorder %s24, 0
      %s303 = scalar_select %p302, %s24, 0
      %s304 = sadd.s32 %s303, %s301
      %s305 = smul.addr %s304, 4
      %s306 = scalar_lea.vmem %s0, %s305
      %p307 = pneg %p54
      %p308 = pneg %p51
      %p309 = scmp.lt.s32.totalorder %s23, 1
      %s310 = scalar_select %p309, %s23, 1
      %p311 = scmp.lt.s32.totalorder %s24, 0
      %s312 = scalar_select %p311, %s24, 0
      %s313 = sadd.s32 %s312, %s310
      %s314 = smul.addr %s313, 8
      %s315 = scalar_lea.vmem %s1, %s314
      %p316 = pneg %p82
      %p317 = pneg %p79
      %p318 = pneg %p103
      %p319 = pneg %p100
      %p320 = pneg %p124
      %p321 = pneg %p121
      %p322 = pneg %p145
      %p323 = pneg %p142
      %p324 = pneg %p166
      %p325 = pneg %p163
      %p326 = pneg %p187
      %p327 = pneg %p184
      %p328 = pneg %p208
      %p329 = pneg %p205
      %p330 = pneg %p236
      %p331 = pneg %p233
      %p332 = scmp.lt.s32.totalorder %s23, 1
      %s333 = scalar_select %p332, %s23, 1
      %p334 = scmp.lt.s32.totalorder %s24, 0
      %s335 = scalar_select %p334, %s24, 0
      %s336 = sadd.s32 %s335, %s333
      %s337 = smul.addr %s336, 4
      %s338 = scalar_lea.vmem %s8, %s337
      %p339 = scmp.lt.s32.totalorder %s23, 1
      %s340 = scalar_select %p339, %s23, 1
      %p341 = scmp.lt.s32.totalorder %s24, 0
      %s342 = scalar_select %p341, %s24, 0
      %s343 = sadd.s32 %s342, %s340
      %s344 = smul.addr %s343, 4
      %s345 = scalar_lea.vmem %s0, %s344
      %p346 = scmp.lt.s32.totalorder %s23, 1
      %s347 = scalar_select %p346, %s23, 1
      %p348 = scmp.lt.s32.totalorder %s24, 0
      %s349 = scalar_select %p348, %s24, 0
      %s350 = sadd.s32 %s349, %s347
      %s351 = smul.addr %s350, 8
      %s352 = scalar_lea.vmem %s1, %s351
      %p353 = scmp.lt.s32.totalorder %s23, 1
      %s354 = scalar_select %p353, %s23, 1
      %p355 = scmp.lt.s32.totalorder %s24, 0
      %s356 = scalar_select %p355, %s24, 0
      %s357 = sadd.s32 %s356, %s354
      %s358 = smul.addr %s357, 4
      %s359 = scalar_lea.vmem %s8, %s358
      %v361 = vld [vmem:[%s345] sm:$0xf]
      %v362 = vunpack.c.l.bf16 %v361
      %v363 = vld [vmem:[%s2] sm:$0xff]
      %v364 = vld [vmem:[%s2 + $0x8] sm:$0xff]
      %v365 = vld [vmem:[%s2 + $0x10] sm:$0xff]
      %v366 = vld [vmem:[%s2 + $0x18] sm:$0xff]
      %v367 = vld [vmem:[%s2 + $0x20] sm:$0xff]
      %v368 = vld [vmem:[%s2 + $0x28] sm:$0xff]
      %v369 = vld [vmem:[%s2 + $0x30] sm:$0xff]
      %v370 = vld [vmem:[%s2 + $0x38] sm:$0xff]
      %v371 = vld [vmem:[%s2 + $0x40] sm:$0xff]
      %v372 = vld [vmem:[%s2 + $0x48] sm:$0xff]
      %v373 = vld [vmem:[%s2 + $0x50] sm:$0xff]
      %v374 = vld [vmem:[%s2 + $0x58] sm:$0xff]
      %v375 = vld [vmem:[%s2 + $0x60] sm:$0xff]
      %v376 = vld [vmem:[%s2 + $0x68] sm:$0xff]
      %v377 = vld [vmem:[%s2 + $0x70] sm:$0xff]
      %v378 = vld [vmem:[%s2 + $0x78] sm:$0xff]
      %v379 = vld [vmem:[%s2 + $0x80] sm:$0xff]
      %v380 = vld [vmem:[%s2 + $0x88] sm:$0xff]
      %v381 = vld [vmem:[%s2 + $0x90] sm:$0xff]
      %v382 = vld [vmem:[%s2 + $0x98] sm:$0xff]
      %v383 = vld [vmem:[%s2 + $0xa0] sm:$0xff]
      %v384 = vld [vmem:[%s2 + $0xa8] sm:$0xff]
      %v385 = vld [vmem:[%s2 + $0xb0] sm:$0xff]
      %v386 = vld [vmem:[%s2 + $0xb8] sm:$0xff]
      %v387 = vld [vmem:[%s2 + $0xc0] sm:$0xff]
      %v388 = vld [vmem:[%s2 + $0xc8] sm:$0xff]
      %v389 = vld [vmem:[%s2 + $0xd0] sm:$0xff]
      %v390 = vld [vmem:[%s2 + $0xd8] sm:$0xff]
      %v391 = vld [vmem:[%s2 + $0xe0] sm:$0xff]
      %v392 = vld [vmem:[%s2 + $0xe8] sm:$0xff]
      %v393 = vld [vmem:[%s2 + $0xf0] sm:$0xff]
      %v394 = vld [vmem:[%s2 + $0xf8] sm:$0xff]
      %v395 = vld [vmem:[%s3] sm:$0xf]
      %v397 = vlaneseq
      %v398 = vshrl.u32 %v397, 7
      %v399 = vsub.s32 0, %v398
      %v400 = vrot.slane %v395, %v399
      %v401 = vlaneseq
      %v402 = vshrl.u32 %v401, 7
      %v403 = vsub.s32 1, %v402
      %v404 = vrot.slane %v395, %v403
      %v405 = vlaneseq
      %v406 = vshrl.u32 %v405, 7
      %v407 = vsub.s32 2, %v406
      %v408 = vrot.slane %v395, %v407
      %v409 = vlaneseq
      %v410 = vshrl.u32 %v409, 7
      %v411 = vsub.s32 3, %v410
      %v412 = vrot.slane %v395, %v411
      %v449 = vunpack.c.l.b16 %v363
      %v450 = vunpack.c.h.b16 %v363
      %v451 = vunpack.c.l.b16 %v364
      %v452 = vunpack.c.h.b16 %v364
      %v453 = vunpack.c.l.b16 %v365
      %v454 = vunpack.c.h.b16 %v365
      %v455 = vunpack.c.l.b16 %v366
      %v456 = vunpack.c.h.b16 %v366
      %v457 = vunpack.c.l.b16 %v367
      %v458 = vunpack.c.h.b16 %v367
      %v459 = vunpack.c.l.b16 %v368
      %v460 = vunpack.c.h.b16 %v368
      %v461 = vunpack.c.l.b16 %v369
      %v462 = vunpack.c.h.b16 %v369
      %v463 = vunpack.c.l.b16 %v370
      %v464 = vunpack.c.h.b16 %v370
      %v465 = vunpack.c.l.b16 %v371
      %v466 = vunpack.c.h.b16 %v371
      %v467 = vunpack.c.l.b16 %v372
      %v468 = vunpack.c.h.b16 %v372
      %v469 = vunpack.c.l.b16 %v373
      %v470 = vunpack.c.h.b16 %v373
      %v471 = vunpack.c.l.b16 %v374
      %v472 = vunpack.c.h.b16 %v374
      %v473 = vunpack.c.l.b16 %v375
      %v474 = vunpack.c.h.b16 %v375
      %v475 = vunpack.c.l.b16 %v376
      %v476 = vunpack.c.h.b16 %v376
      %v477 = vunpack.c.l.b16 %v377
      %v478 = vunpack.c.h.b16 %v377
      %v479 = vunpack.c.l.b16 %v378
      %v480 = vunpack.c.h.b16 %v378
      %v481 = vunpack.c.l.b16 %v379
      %v482 = vunpack.c.h.b16 %v379
      %v483 = vunpack.c.l.b16 %v380
      %v484 = vunpack.c.h.b16 %v380
      %v485 = vunpack.c.l.b16 %v381
      %v486 = vunpack.c.h.b16 %v381
      %v487 = vunpack.c.l.b16 %v382
      %v488 = vunpack.c.h.b16 %v382
      %v489 = vunpack.c.l.b16 %v383
      %v490 = vunpack.c.h.b16 %v383
      %v491 = vunpack.c.l.b16 %v384
      %v492 = vunpack.c.h.b16 %v384
      %v493 = vunpack.c.l.b16 %v385
      %v494 = vunpack.c.h.b16 %v385
      %v495 = vunpack.c.l.b16 %v386
      %v496 = vunpack.c.h.b16 %v386
      %v497 = vunpack.c.l.b16 %v387
      %v498 = vunpack.c.h.b16 %v387
      %v499 = vunpack.c.l.b16 %v388
      %v500 = vunpack.c.h.b16 %v388
      %v501 = vunpack.c.l.b16 %v389
      %v502 = vunpack.c.h.b16 %v389
      %v503 = vunpack.c.l.b16 %v390
      %v504 = vunpack.c.h.b16 %v390
      %v505 = vunpack.c.l.b16 %v391
      %v506 = vunpack.c.h.b16 %v391
      %v507 = vunpack.c.l.b16 %v392
      %v508 = vunpack.c.h.b16 %v392
      %v509 = vunpack.c.l.b16 %v393
      %v510 = vunpack.c.h.b16 %v393
      %v511 = vunpack.c.l.b16 %v394
      %v512 = vunpack.c.h.b16 %v394
      %v513 = vpack.c.b16 %v453, %v449
      %v514 = vpack.c.b16 %v454, %v450
      %v515 = vpack.c.b16 %v455, %v451
      %v516 = vpack.c.b16 %v456, %v452
      %v517 = vpack.c.b16 %v461, %v457
      %v518 = vpack.c.b16 %v462, %v458
      %v519 = vpack.c.b16 %v463, %v459
      %v520 = vpack.c.b16 %v464, %v460
      %v521 = vpack.c.b16 %v469, %v465
      %v522 = vpack.c.b16 %v470, %v466
      %v523 = vpack.c.b16 %v471, %v467
      %v524 = vpack.c.b16 %v472, %v468
      %v525 = vpack.c.b16 %v477, %v473
      %v526 = vpack.c.b16 %v478, %v474
      %v527 = vpack.c.b16 %v479, %v475
      %v528 = vpack.c.b16 %v480, %v476
      %v529 = vpack.c.b16 %v485, %v481
      %v530 = vpack.c.b16 %v486, %v482
      %v531 = vpack.c.b16 %v487, %v483
      %v532 = vpack.c.b16 %v488, %v484
      %v533 = vpack.c.b16 %v493, %v489
      %v534 = vpack.c.b16 %v494, %v490
      %v535 = vpack.c.b16 %v495, %v491
      %v536 = vpack.c.b16 %v496, %v492
      %v537 = vpack.c.b16 %v501, %v497
      %v538 = vpack.c.b16 %v502, %v498
      %v539 = vpack.c.b16 %v503, %v499
      %v540 = vpack.c.b16 %v504, %v500
      %v541 = vpack.c.b16 %v509, %v505
      %v542 = vpack.c.b16 %v510, %v506
      %v543 = vpack.c.b16 %v511, %v507
      %v544 = vpack.c.b16 %v512, %v508
      %577 = vmatprep.subr.bf16.mxu0 %v514
      %578 = vmatpush1.bf16.msra.mxu0 %v513
      %579 = vmatprep.subr.bf16.mxu0 %v518
      %580 = vmatpush1.bf16.msra.mxu0 %v517
      %581 = vmatprep.subr.bf16.mxu0 %v522
      %582 = vmatpush1.bf16.msra.mxu0 %v521
      %583 = vmatprep.subr.bf16.mxu0 %v526
      %584 = vmatpush1.bf16.msra.mxu0 %v525
      %585 = vmatprep.subr.bf16.mxu0 %v530
      %586 = vmatpush1.bf16.msra.mxu0 %v529
      %587 = vmatprep.subr.bf16.mxu0 %v534
      %588 = vmatpush1.bf16.msra.mxu0 %v533
      %589 = vmatprep.subr.bf16.mxu0 %v538
      %590 = vmatpush1.bf16.msra.mxu0 %v537
      %591 = vmatprep.subr.bf16.mxu0 %v542
      %592 = vmatpush1.bf16.msra.mxu0 %v541
      %593 = vmatprep.subr.bf16.mxu0 0
      %594 = vmatpush1.bf16.msra.mxu0 0
      %595 = vmatprep.subr.bf16.mxu0 0
      %596 = vmatpush1.bf16.msra.mxu0 0
      %597 = vmatprep.subr.bf16.mxu0 0
      %598 = vmatpush1.bf16.msra.mxu0 0
      %599 = vmatprep.subr.bf16.mxu0 0
      %600 = vmatpush1.bf16.msra.mxu0 0
      %601 = vmatprep.subr.bf16.mxu0 0
      %602 = vmatpush1.bf16.msra.mxu0 0
      %603 = vmatprep.subr.bf16.mxu0 0
      %604 = vmatpush1.bf16.msra.mxu0 0
      %605 = vmatprep.subr.bf16.mxu0 0
      %606 = vmatpush1.bf16.msra.mxu0 0
      %607 = vmatprep.subr.bf16.mxu0 0
      %608 = vmatpush1.bf16.msra.mxu0 0
      %609 = vmatprep.mubr.bf16.mxu0 0
      %610 = vmatmul.mubr.bf16.gmra.mrb[0].mxu0 %v361
      %v611 = vpop.f32.mrb[0].mxu0
      %v612 = vadd.f32 %v400, %v611
      %v613 = vpop.f32.mrb[0].mxu0
      %v614 = vadd.f32 %v404, %v613
      %v615 = vpop.f32.mrb[0].mxu0
      %v616 = vpop.f32.mrb[0].mxu0
      %617 = vdwg.mxu0
      %618 = vmatprep.subr.bf16.mxu0 %v516
      %619 = vmatpush1.bf16.msra.mxu0 %v515
      %620 = vmatprep.subr.bf16.mxu0 %v520
      %621 = vmatpush1.bf16.msra.mxu0 %v519
      %622 = vmatprep.subr.bf16.mxu0 %v524
      %623 = vmatpush1.bf16.msra.mxu0 %v523
      %624 = vmatprep.subr.bf16.mxu0 %v528
      %625 = vmatpush1.bf16.msra.mxu0 %v527
      %626 = vmatprep.subr.bf16.mxu0 %v532
      %627 = vmatpush1.bf16.msra.mxu0 %v531
      %628 = vmatprep.subr.bf16.mxu0 %v536
      %629 = vmatpush1.bf16.msra.mxu0 %v535
      %630 = vmatprep.subr.bf16.mxu0 %v540
      %631 = vmatpush1.bf16.msra.mxu0 %v539
      %632 = vmatprep.subr.bf16.mxu0 %v544
      %633 = vmatpush1.bf16.msra.mxu0 %v543
      %634 = vmatprep.subr.bf16.mxu0 0
      %635 = vmatpush1.bf16.msra.mxu0 0
      %636 = vmatprep.subr.bf16.mxu0 0
      %637 = vmatpush1.bf16.msra.mxu0 0
      %638 = vmatprep.subr.bf16.mxu0 0
      %639 = vmatpush1.bf16.msra.mxu0 0
      %640 = vmatprep.subr.bf16.mxu0 0
      %641 = vmatpush1.bf16.msra.mxu0 0
      %642 = vmatprep.subr.bf16.mxu0 0
      %643 = vmatpush1.bf16.msra.mxu0 0
      %644 = vmatprep.subr.bf16.mxu0 0
      %645 = vmatpush1.bf16.msra.mxu0 0
      %646 = vmatprep.subr.bf16.mxu0 0
      %647 = vmatpush1.bf16.msra.mxu0 0
      %648 = vmatprep.subr.bf16.mxu0 0
      %649 = vmatpush1.bf16.msra.mxu0 0
      %650 = vmatprep.mubr.bf16.mxu0 0
      %651 = vmatmul.mubr.bf16.gmra.mrb[0].mxu0 %v361
      %v652 = vpop.f32.mrb[0].mxu0
      %v653 = vadd.f32 %v408, %v652
      %v654 = vpop.f32.mrb[0].mxu0
      %v655 = vadd.f32 %v412, %v654
      %v656 = vpop.f32.mrb[0].mxu0
      %v657 = vpop.f32.mrb[0].mxu0
      %658 = vdwg.mxu0
      %v659 = vmax.f32 %v612, 0.0
      %v660 = vmax.f32 %v614, 0.0
      %v661 = vmax.f32 %v653, 0.0
      %v662 = vmax.f32 %v655, 0.0
      %v663 = vpack.c.bf16 %v659, %v659
      %v664 = vpack.c.bf16 %v660, %v660
      %v665 = vpack.c.bf16 %v661, %v661
      %v666 = vpack.c.bf16 %v662, %v662
      %v667 = vld [vmem:[%s4] sm:$0xf]
      %v668 = vld [vmem:[%s4 + $0x4] sm:$0xf]
      %v669 = vld [vmem:[%s4 + $0x8] sm:$0xf]
      %v670 = vld [vmem:[%s4 + $0xc] sm:$0xf]
      %v671 = vld [vmem:[%s4 + $0x10] sm:$0xf]
      %v672 = vld [vmem:[%s4 + $0x14] sm:$0xf]
      %v673 = vld [vmem:[%s4 + $0x18] sm:$0xf]
      %v674 = vld [vmem:[%s4 + $0x1c] sm:$0xf]
      %v675 = vld [vmem:[%s4 + $0x20] sm:$0xf]
      %v676 = vld [vmem:[%s4 + $0x24] sm:$0xf]
      %v677 = vld [vmem:[%s4 + $0x28] sm:$0xf]
      %v678 = vld [vmem:[%s4 + $0x2c] sm:$0xf]
      %v679 = vld [vmem:[%s4 + $0x30] sm:$0xf]
      %v680 = vld [vmem:[%s4 + $0x34] sm:$0xf]
      %v681 = vld [vmem:[%s4 + $0x38] sm:$0xf]
      %v682 = vld [vmem:[%s4 + $0x3c] sm:$0xf]
      %v683 = vld [vmem:[%s4 + $0x40] sm:$0xf]
      %v684 = vld [vmem:[%s4 + $0x44] sm:$0xf]
      %v685 = vld [vmem:[%s4 + $0x48] sm:$0xf]
      %v686 = vld [vmem:[%s4 + $0x4c] sm:$0xf]
      %v687 = vld [vmem:[%s4 + $0x50] sm:$0xf]
      %v688 = vld [vmem:[%s4 + $0x54] sm:$0xf]
      %v689 = vld [vmem:[%s4 + $0x58] sm:$0xf]
      %v690 = vld [vmem:[%s4 + $0x5c] sm:$0xf]
      %v691 = vld [vmem:[%s4 + $0x60] sm:$0xf]
      %v692 = vld [vmem:[%s4 + $0x64] sm:$0xf]
      %v693 = vld [vmem:[%s4 + $0x68] sm:$0xf]
      %v694 = vld [vmem:[%s4 + $0x6c] sm:$0xf]
      %v695 = vld [vmem:[%s4 + $0x70] sm:$0xf]
      %v696 = vld [vmem:[%s4 + $0x74] sm:$0xf]
      %v697 = vld [vmem:[%s4 + $0x78] sm:$0xf]
      %v698 = vld [vmem:[%s4 + $0x7c] sm:$0xf]
      %v699 = vld [vmem:[%s4 + $0x80] sm:$0xf]
      %v700 = vld [vmem:[%s4 + $0x84] sm:$0xf]
      %v701 = vld [vmem:[%s4 + $0x88] sm:$0xf]
      %v702 = vld [vmem:[%s4 + $0x8c] sm:$0xf]
      %v703 = vld [vmem:[%s4 + $0x90] sm:$0xf]
      %v704 = vld [vmem:[%s4 + $0x94] sm:$0xf]
      %v705 = vld [vmem:[%s4 + $0x98] sm:$0xf]
      %v706 = vld [vmem:[%s4 + $0x9c] sm:$0xf]
      %v707 = vld [vmem:[%s4 + $0xa0] sm:$0xf]
      %v708 = vld [vmem:[%s4 + $0xa4] sm:$0xf]
      %v709 = vld [vmem:[%s4 + $0xa8] sm:$0xf]
      %v710 = vld [vmem:[%s4 + $0xac] sm:$0xf]
      %v711 = vld [vmem:[%s4 + $0xb0] sm:$0xf]
      %v712 = vld [vmem:[%s4 + $0xb4] sm:$0xf]
      %v713 = vld [vmem:[%s4 + $0xb8] sm:$0xf]
      %v714 = vld [vmem:[%s4 + $0xbc] sm:$0xf]
      %v715 = vld [vmem:[%s4 + $0xc0] sm:$0xf]
      %v716 = vld [vmem:[%s4 + $0xc4] sm:$0xf]
      %v717 = vld [vmem:[%s4 + $0xc8] sm:$0xf]
      %v718 = vld [vmem:[%s4 + $0xcc] sm:$0xf]
      %v719 = vld [vmem:[%s4 + $0xd0] sm:$0xf]
      %v720 = vld [vmem:[%s4 + $0xd4] sm:$0xf]
      %v721 = vld [vmem:[%s4 + $0xd8] sm:$0xf]
      %v722 = vld [vmem:[%s4 + $0xdc] sm:$0xf]
      %v723 = vld [vmem:[%s4 + $0xe0] sm:$0xf]
      %v724 = vld [vmem:[%s4 + $0xe4] sm:$0xf]
      %v725 = vld [vmem:[%s4 + $0xe8] sm:$0xf]
      %v726 = vld [vmem:[%s4 + $0xec] sm:$0xf]
      %v727 = vld [vmem:[%s4 + $0xf0] sm:$0xf]
      %v728 = vld [vmem:[%s4 + $0xf4] sm:$0xf]
      %v729 = vld [vmem:[%s4 + $0xf8] sm:$0xf]
      %v730 = vld [vmem:[%s4 + $0xfc] sm:$0xf]
      %v731 = vld [vmem:[%s5] sm:$0x1]
      %v733 = vlaneseq
      %v734 = vshrl.u32 %v733, 7
      %v735 = vsub.s32 0, %v734
      %v736 = vrot.slane %v731, %v735
      %v802 = vunpack.c.l.b16 %v667
      %v803 = vunpack.c.l.b16 %v668
      %v804 = vunpack.c.l.b16 %v669
      %v805 = vunpack.c.l.b16 %v670
      %v806 = vunpack.c.l.b16 %v671
      %v807 = vunpack.c.l.b16 %v672
      %v808 = vunpack.c.l.b16 %v673
      %v809 = vunpack.c.l.b16 %v674
      %v810 = vunpack.c.l.b16 %v675
      %v811 = vunpack.c.l.b16 %v676
      %v812 = vunpack.c.l.b16 %v677
      %v813 = vunpack.c.l.b16 %v678
      %v814 = vunpack.c.l.b16 %v679
      %v815 = vunpack.c.l.b16 %v680
      %v816 = vunpack.c.l.b16 %v681
      %v817 = vunpack.c.l.b16 %v682
      %v818 = vunpack.c.l.b16 %v683
      %v819 = vunpack.c.l.b16 %v684
      %v820 = vunpack.c.l.b16 %v685
      %v821 = vunpack.c.l.b16 %v686
      %v822 = vunpack.c.l.b16 %v687
      %v823 = vunpack.c.l.b16 %v688
      %v824 = vunpack.c.l.b16 %v689
      %v825 = vunpack.c.l.b16 %v690
      %v826 = vunpack.c.l.b16 %v691
      %v827 = vunpack.c.l.b16 %v692
      %v828 = vunpack.c.l.b16 %v693
      %v829 = vunpack.c.l.b16 %v694
      %v830 = vunpack.c.l.b16 %v695
      %v831 = vunpack.c.l.b16 %v696
      %v832 = vunpack.c.l.b16 %v697
      %v833 = vunpack.c.l.b16 %v698
      %v834 = vunpack.c.l.b16 %v699
      %v835 = vunpack.c.l.b16 %v700
      %v836 = vunpack.c.l.b16 %v701
      %v837 = vunpack.c.l.b16 %v702
      %v838 = vunpack.c.l.b16 %v703
      %v839 = vunpack.c.l.b16 %v704
      %v840 = vunpack.c.l.b16 %v705
      %v841 = vunpack.c.l.b16 %v706
      %v842 = vunpack.c.l.b16 %v707
      %v843 = vunpack.c.l.b16 %v708
      %v844 = vunpack.c.l.b16 %v709
      %v845 = vunpack.c.l.b16 %v710
      %v846 = vunpack.c.l.b16 %v711
      %v847 = vunpack.c.l.b16 %v712
      %v848 = vunpack.c.l.b16 %v713
      %v849 = vunpack.c.l.b16 %v714
      %v850 = vunpack.c.l.b16 %v715
      %v851 = vunpack.c.l.b16 %v716
      %v852 = vunpack.c.l.b16 %v717
      %v853 = vunpack.c.l.b16 %v718
      %v854 = vunpack.c.l.b16 %v719
      %v855 = vunpack.c.l.b16 %v720
      %v856 = vunpack.c.l.b16 %v721
      %v857 = vunpack.c.l.b16 %v722
      %v858 = vunpack.c.l.b16 %v723
      %v859 = vunpack.c.l.b16 %v724
      %v860 = vunpack.c.l.b16 %v725
      %v861 = vunpack.c.l.b16 %v726
      %v862 = vunpack.c.l.b16 %v727
      %v863 = vunpack.c.l.b16 %v728
      %v864 = vunpack.c.l.b16 %v729
      %v865 = vunpack.c.l.b16 %v730
      %v866 = vpack.c.b16 %v803, %v802
      %v867 = vpack.c.b16 %v805, %v804
      %v868 = vpack.c.b16 %v807, %v806
      %v869 = vpack.c.b16 %v809, %v808
      %v870 = vpack.c.b16 %v811, %v810
      %v871 = vpack.c.b16 %v813, %v812
      %v872 = vpack.c.b16 %v815, %v814
      %v873 = vpack.c.b16 %v817, %v816
      %v874 = vpack.c.b16 %v819, %v818
      %v875 = vpack.c.b16 %v821, %v820
      %v876 = vpack.c.b16 %v823, %v822
      %v877 = vpack.c.b16 %v825, %v824
      %v878 = vpack.c.b16 %v827, %v826
      %v879 = vpack.c.b16 %v829, %v828
      %v880 = vpack.c.b16 %v831, %v830
      %v881 = vpack.c.b16 %v833, %v832
      %v882 = vpack.c.b16 %v835, %v834
      %v883 = vpack.c.b16 %v837, %v836
      %v884 = vpack.c.b16 %v839, %v838
      %v885 = vpack.c.b16 %v841, %v840
      %v886 = vpack.c.b16 %v843, %v842
      %v887 = vpack.c.b16 %v845, %v844
      %v888 = vpack.c.b16 %v847, %v846
      %v889 = vpack.c.b16 %v849, %v848
      %v890 = vpack.c.b16 %v851, %v850
      %v891 = vpack.c.b16 %v853, %v852
      %v892 = vpack.c.b16 %v855, %v854
      %v893 = vpack.c.b16 %v857, %v856
      %v894 = vpack.c.b16 %v859, %v858
      %v895 = vpack.c.b16 %v861, %v860
      %v896 = vpack.c.b16 %v863, %v862
      %v897 = vpack.c.b16 %v865, %v864
      %930 = vmatprep.subr.bf16.mxu0 0
      %931 = vmatpush1.bf16.msra.mxu0 %v866
      %932 = vmatprep.subr.bf16.mxu0 0
      %933 = vmatpush1.bf16.msra.mxu0 %v867
      %934 = vmatprep.subr.bf16.mxu0 0
      %935 = vmatpush1.bf16.msra.mxu0 %v868
      %936 = vmatprep.subr.bf16.mxu0 0
      %937 = vmatpush1.bf16.msra.mxu0 %v869
      %938 = vmatprep.subr.bf16.mxu0 0
      %939 = vmatpush1.bf16.msra.mxu0 %v870
      %940 = vmatprep.subr.bf16.mxu0 0
      %941 = vmatpush1.bf16.msra.mxu0 %v871
      %942 = vmatprep.subr.bf16.mxu0 0
      %943 = vmatpush1.bf16.msra.mxu0 %v872
      %944 = vmatprep.subr.bf16.mxu0 0
      %945 = vmatpush1.bf16.msra.mxu0 %v873
      %946 = vmatprep.subr.bf16.mxu0 0
      %947 = vmatpush1.bf16.msra.mxu0 %v874
      %948 = vmatprep.subr.bf16.mxu0 0
      %949 = vmatpush1.bf16.msra.mxu0 %v875
      %950 = vmatprep.subr.bf16.mxu0 0
      %951 = vmatpush1.bf16.msra.mxu0 %v876
      %952 = vmatprep.subr.bf16.mxu0 0
      %953 = vmatpush1.bf16.msra.mxu0 %v877
      %954 = vmatprep.subr.bf16.mxu0 0
      %955 = vmatpush1.bf16.msra.mxu0 %v878
      %956 = vmatprep.subr.bf16.mxu0 0
      %957 = vmatpush1.bf16.msra.mxu0 %v879
      %958 = vmatprep.subr.bf16.mxu0 0
      %959 = vmatpush1.bf16.msra.mxu0 %v880
      %960 = vmatprep.subr.bf16.mxu0 0
      %961 = vmatpush1.bf16.msra.mxu0 %v881
      %962 = vmatprep.mubr.bf16.mxu0 %v664
      %963 = vmatmul.mubr.bf16.gmra.mrb[0].mxu0 %v663
      %v964 = vpop.f32.mrb[0].mxu0
      %v965 = vadd.f32 %v736, %v964
      %v966 = vpop.f32.mrb[0].mxu0
      %v967 = vpop.f32.mrb[0].mxu0
      %v968 = vpop.f32.mrb[0].mxu0
      %969 = vdwg.mxu0
      %970 = vmatprep.subr.bf16.mxu0 0
      %971 = vmatpush1.bf16.msra.mxu0 %v882
      %972 = vmatprep.subr.bf16.mxu0 0
      %973 = vmatpush1.bf16.msra.mxu0 %v883
      %974 = vmatprep.subr.bf16.mxu0 0
      %975 = vmatpush1.bf16.msra.mxu0 %v884
      %976 = vmatprep.subr.bf16.mxu0 0
      %977 = vmatpush1.bf16.msra.mxu0 %v885
      %978 = vmatprep.subr.bf16.mxu0 0
      %979 = vmatpush1.bf16.msra.mxu0 %v886
      %980 = vmatprep.subr.bf16.mxu0 0
      %981 = vmatpush1.bf16.msra.mxu0 %v887
      %982 = vmatprep.subr.bf16.mxu0 0
      %983 = vmatpush1.bf16.msra.mxu0 %v888
      %984 = vmatprep.subr.bf16.mxu0 0
      %985 = vmatpush1.bf16.msra.mxu0 %v889
      %986 = vmatprep.subr.bf16.mxu0 0
      %987 = vmatpush1.bf16.msra.mxu0 %v890
      %988 = vmatprep.subr.bf16.mxu0 0
      %989 = vmatpush1.bf16.msra.mxu0 %v891
      %990 = vmatprep.subr.bf16.mxu0 0
      %991 = vmatpush1.bf16.msra.mxu0 %v892
      %992 = vmatprep.subr.bf16.mxu0 0
      %993 = vmatpush1.bf16.msra.mxu0 %v893
      %994 = vmatprep.subr.bf16.mxu0 0
      %995 = vmatpush1.bf16.msra.mxu0 %v894
      %996 = vmatprep.subr.bf16.mxu0 0
      %997 = vmatpush1.bf16.msra.mxu0 %v895
      %998 = vmatprep.subr.bf16.mxu0 0
      %999 = vmatpush1.bf16.msra.mxu0 %v896
      %1000 = vmatprep.subr.bf16.mxu0 0
      %1001 = vmatpush1.bf16.msra.mxu0 %v897
      %1002 = vmatprep.mubr.bf16.mxu0 %v666
      %1003 = vmatmul.mubr.bf16.gmra.mrb[0].mxu0 %v665
      %v1004 = vpop.f32.mrb[0].mxu0
      %v1005 = vadd.f32 %v965, %v1004
      %v1006 = vpop.f32.mrb[0].mxu0
      %v1007 = vpop.f32.mrb[0].mxu0
      %v1008 = vpop.f32.mrb[0].mxu0
      %1009 = vdwg.mxu0
      %v1010 = vadd.f32 %v1005, %v362
      %1011 = vadd.xlane.f32.xlu0 %v1010
      %v1012 = vpop.xlane.xlu0 %1011
      %v1013 = vrcp.pop 128.0
      %v1014 = vmul.f32 %v1012, %v1013
      %v1015 = vsub.f32 %v1010, %v1014
      %v1016 = vmul.f32 %v1015, %v1015
      %1017 = vadd.xlane.f32.xlu0 %v1016
      %v1018 = vpop.xlane.xlu0 %1017
      %v1019 = vmul.f32 %v1018, %v1013
      %v1020 = vadd.f32 %v1019, 1e-05
      %v1021 = vrsqrt.pop %v1020
      %v1022 = vmul.f32 %v1015, %v1021
      %v1023 = vld [vmem:[%s6] sm:$0x1]
      %v1025 = vlaneseq
      %v1026 = vshrl.u32 %v1025, 7
      %v1027 = vsub.s32 0, %v1026
      %v1028 = vrot.slane %v1023, %v1027
      %v1030 = vmul.f32 %v1022, %v1028
      %v1031 = vld [vmem:[%s7] sm:$0x1]
      %v1033 = vlaneseq
      %v1034 = vshrl.u32 %v1033, 7
      %v1035 = vsub.s32 0, %v1034
      %v1036 = vrot.slane %v1031, %v1035
      %v1038 = vadd.f32 %v1030, %v1036
      %v1039 = vld [vmem:[%s352] sm:$0xff]
      %1041 = vset.pattern.permute.xlu0 0
      %1042 = vperm.xlu0 %1041, %v1039
      %v1043 = vpop.permute.xlu0 %1042
      %v1045 = vmul.f32 %v1038, %v1043
      %v1046 = vpack.c.bf16 %v1045, %v1045
      %1047 = vst [vmem:[%s359] sm:$0xf] %v1046
      %p1048 = scmp.lt.s32.totalorder %s23, 1
      %s1049 = scalar_select %p1048, %s23, 1
      %p1050 = scmp.lt.s32.totalorder %s24, 0
      %s1051 = scalar_select %p1050, %s24, 0
      %s1052 = sadd.s32 %s1051, %s1049
      %s1053 = smul.addr %s1052, 4
      %s1054 = scalar_lea.vmem %s8, %s1053
      // Predicated region
      $region53: #{transformer_decoder_forward.15} parent=51 // pred_check
        %p1055 = pneg %p233
      $region54: #{transformer_decoder_forward.15} parent=51 // pred_check_branch
        %1057 = sbr.rel (%p1055) target = $region56
      $region55: #{transformer_decoder_forward.15} parent=51 // pred_region
        _
      $region56: #{transformer_decoder_forward.15} parent=51 // pred_fallthru
        _
    $region52: #{transformer_decoder_forward.15} parent=5 // pred_fallthru
      _
    %p1058 = scmp.le.s32.totalorder 2, %s14
    // Predicated region
    $region57: #{transformer_decoder_forward.15} parent=5 // pred_check
      %p1059 = pneg %p1058
    $region58: #{transformer_decoder_forward.15} parent=5 // pred_check_branch
      %1061 = sbr.rel (%p1059) target = $region60
    $region59: #{transformer_decoder_forward.15} parent=5 // pred_region
      %s1062 = ssub.s32 %s14, 2
      // Predicated region
      $region61: #{transformer_decoder_forward.15} parent=59 // pred_check
        %p1063 = pneg %p239
      $region62: #{transformer_decoder_forward.15} parent=59 // pred_check_branch
        %1065 = sbr.rel (%p1063) target = $region64
      $region63: #{transformer_decoder_forward.15} parent=59 // pred_region
        %p1066 = scmp.lt.s32.totalorder %s25, 1
        %s1067 = scalar_select %p1066, %s25, 1
        %p1068 = scmp.lt.s32.totalorder %s26, 0
        %s1069 = scalar_select %p1068, %s26, 0
        %s1070 = sadd.s32 %s1069, %s1067
        %s1071 = smul.addr %s1070, 4
        %s1072 = scalar_lea.vmem %s8, %s1071
      $region64: #{transformer_decoder_forward.15} parent=59 // pred_fallthru
        _
    $region60: #{transformer_decoder_forward.15} parent=5 // pred_fallthru
      _
  $region6: #{transformer_decoder_forward.15} parent=0 // loop_footer
    %s18 = sadd.s32 1, %s14
  $region7: #{transformer_decoder_forward.15} parent=0 // loop_footer_branch
    %13 = sbr.rel target = $region3
  $region8: #{transformer_decoder_forward.15} parent=0 // loop_exit
    _

// kernel: transformer_decoder_forward.25
$region0: #{transformer_decoder_forward.25}
  #allocation0 [shape = 'u32[]', space=smem, size = 0x4, offset = 0x4, fixed_abs, tag = 'smem constant byte address 0x4 - core index']
  #allocation1 [shape = 'u32[144,128]{1,0:T(1,128)}', space=vmem, size = 0x12000, scoped, tag = 'internal scratch']
  %s0 = inlined_call_operand.vmem [shape: bf16[2,8,128], index: 0, kind: input, shape index: {}]
  %s1 = inlined_call_operand.vmem [shape: bf16[128,64], index: 1, kind: input, shape index: {}]
  %s2 = inlined_call_operand.hbm [shape: f32[2,8,64], index: 2, kind: output, shape index: {}]
  %s3 = sld [smem:[#allocation0]]
  $region41: #{transformer_decoder_forward.25} parent=0
    _
  %s5 = ssub.s32 1, %s3
  %s6 = scalar_select 0, %s5, %s3
  $region1: #{transformer_decoder_forward.25} parent=0
    #allocation2 [shape = 'u8[8192]{0}', space=vmem, size = 0x2000, scoped, tag = 'output window, operand 0']
    #allocation3 [shape = 's32[2]{0}', space=sflag, size = 0x8, scoped, tag = 'scoped memory for transformer_decoder_forward.25']
    %7 = vsyncpa [#allocation3], 0
    %s8 = scalar_lea.sflag [#allocation3], 1
    %9 = vsyncpa %s8, 0
    loop: start=0, step=1, limit=4
    $region2: #{transformer_decoder_forward.25} parent=1 // loop_pre_header
      _
    $region3: #{transformer_decoder_forward.25} parent=1 // loop_header
      %s11 = sphi 0, %s15
      %p12 = scmp.ge.s32.totalorder %s11, 4
      %s18 = sphi 0, %s37
      %s19 = sphi 0, %s33
      %s20 = sphi 0, %s29
      %s21 = sphi 0, %s18
      %s22 = sphi 0, %s19
      %s23 = sphi 0, %s20
      %s24 = sphi 0, %s21
      %s25 = sphi 0, %s22
      %s26 = sphi 0, %s23
      %s42 = sphi 0, %s44
      %s45 = sphi 0, %s42
      %s46 = sphi 0, %s45
      %s62 = sphi 0, %s46
      %s68 = sphi 0, %s70
      %s71 = sphi 0, %s68
      %s72 = sphi 0, %s71
      %s88 = sphi 0, %s72
      %s98 = sphi 0, %s100
      %s101 = sphi 0, %s98
      %s102 = sphi 0, %s101
      %s118 = sphi 0, %s102
    $region4: #{transformer_decoder_forward.25} parent=1 // loop_header_branch
      %14 = sbr.rel (%p12) target = $region8
    $region5: #{transformer_decoder_forward.25} parent=1 // loop_body
      %s16 = ssub.s32 %s11, 1
      %s17 = ssub.s32 %s11, 2
      %s27 = sadd.s32 1, %s20
      %p28 = scmp.ge.s32.totalorder %s27, 1
      %s29 = scalar_select %p28, 0, %s27
      %s30 = sadd.s32 1, %s19
      %s31 = scalar_select %p28, %s30, %s19
      %p32 = scmp.ge.s32.totalorder %s31, 1
      %s33 = scalar_select %p32, 0, %s31
      %s34 = sadd.s32 1, %s18
      %s35 = scalar_select %p32, %s34, %s18
      %p36 = scmp.ge.s32.totalorder %s35, 2
      %s37 = scalar_select %p36, 0, %s35
      %s38 = ssub.s32 %s18, %s37
      %s39 = ssub.s32 %s19, %s33
      %s40 = sor.u32 %s38, %s39
      %p41 = scmp.eq.s32.totalorder %s40, 0
      %s43 = sadd.s32 %s42, 1
      %s44 = scalar_select %p41, %s42, %s43
      %p47 = pneg %p41
      %p48 = scmp.eq.s32.totalorder %s11, 1
      %p49 = por %p47, %p48
      %p50 = scmp.ne.s32.totalorder %s42, %s45
      %p51 = scmp.eq.s32.totalorder %s11, 0
      %p52 = por %p50, %p51
      %p53 = scmp.ne.s32.totalorder %s42, %s45
      %p54 = scmp.eq.s32.totalorder %s16, 1
      %p55 = por %p53, %p54
      %p56 = scmp.ne.s32.totalorder %s45, %s46
      %p57 = scmp.eq.s32.totalorder %s16, 0
      %p58 = por %p56, %p57
      %p59 = scmp.ne.s32.totalorder %s45, %s46
      %p60 = scmp.eq.s32.totalorder %s17, 1
      %p61 = por %p59, %p60
      %p63 = scmp.ne.s32.totalorder %s46, %s62
      %p64 = scmp.eq.s32.totalorder %s17, 0
      %p65 = por %p63, %p64
      %s66 = ssub.s32 %s20, %s29
      %p67 = scmp.eq.s32.totalorder %s66, 0
      %s69 = sadd.s32 %s68, 1
      %s70 = scalar_select %p67, %s68, %s69
      %p73 = pneg %p67
      %p74 = scmp.eq.s32.totalorder %s11, 1
      %p75 = por %p73, %p74
      %p76 = scmp.ne.s32.totalorder %s68, %s71
      %p77 = scmp.eq.s32.totalorder %s11, 0
      %p78 = por %p76, %p77
      %p79 = scmp.ne.s32.totalorder %s68, %s71
      %p80 = scmp.eq.s32.totalorder %s16, 1
      %p81 = por %p79, %p80
      %p82 = scmp.ne.s32.totalorder %s71, %s72
      %p83 = scmp.eq.s32.totalorder %s16, 0
      %p84 = por %p82, %p83
      %p85 = scmp.ne.s32.totalorder %s71, %s72
      %p86 = scmp.eq.s32.totalorder %s17, 1
      %p87 = por %p85, %p86
      %p89 = scmp.ne.s32.totalorder %s72, %s88
      %p90 = scmp.eq.s32.totalorder %s17, 0
      %p91 = por %p89, %p90
      %s92 = ssub.s32 %s18, %s37
      %s93 = ssub.s32 %s19, %s33
      %s94 = sor.u32 %s92, %s93
      %s95 = ssub.s32 %s20, %s29
      %s96 = sor.u32 %s94, %s95
      %p97 = scmp.eq.s32.totalorder %s96, 0
      %s99 = sadd.s32 %s98, 1
      %s100 = scalar_select %p97, %s98, %s99
      %p103 = pneg %p97
      %p104 = scmp.eq.s32.totalorder %s11, 1
      %p105 = por %p103, %p104
      %p106 = scmp.ne.s32.totalorder %s98, %s101
      %p107 = scmp.eq.s32.totalorder %s11, 0
      %p108 = por %p106, %p107
      %p109 = scmp.ne.s32.totalorder %s98, %s101
      %p110 = scmp.eq.s32.totalorder %s16, 1
      %p111 = por %p109, %p110
      %p112 = scmp.ne.s32.totalorder %s101, %s102
      %p113 = scmp.eq.s32.totalorder %s16, 0
      %p114 = por %p112, %p113
      %p115 = scmp.ne.s32.totalorder %s101, %s102
      %p116 = scmp.eq.s32.totalorder %s17, 1
      %p117 = por %p115, %p116
      %p119 = scmp.ne.s32.totalorder %s102, %s118
      %p120 = scmp.eq.s32.totalorder %s17, 0
      %p121 = por %p119, %p120
      %p122 = scmp.le.s32.totalorder 1, %s11
      %p123 = scmp.lt.s32.totalorder %s11, 3
      %p124 = pnand %p122, %p123
      %p125 = pneg %p124
      // Predicated region
      $region9: #{transformer_decoder_forward.25} parent=5 // pred_check
        _
      $region10: #{transformer_decoder_forward.25} parent=5 // pred_check_branch
        %127 = sbr.rel (%p124) target = $region12
      $region11: #{transformer_decoder_forward.25} parent=5 // pred_region
        %s128 = ssub.s32 %s11, 1
        // Predicated region
        $region13: #{transformer_decoder_forward.25} parent=11 // pred_check
          %p129 = pneg %p84
        $region14: #{transformer_decoder_forward.25} parent=11 // pred_check_branch
          %131 = sbr.rel (%p129) target = $region16
        $region15: #{transformer_decoder_forward.25} parent=11 // pred_region
          %p132 = scmp.lt.s32.totalorder %s23, 0
          %s133 = scalar_select %p132, %s23, 0
          %s134 = smul.addr %s133, 4
          %s135 = scalar_lea.vmem %s1, %s134
        $region16: #{transformer_decoder_forward.25} parent=11 // pred_fallthru
          _
      $region12: #{transformer_decoder_forward.25} parent=5 // pred_fallthru
        _
      %p136 = scmp.lt.s32.totalorder %s11, 2
      // Predicated region
      $region17: #{transformer_decoder_forward.25} parent=5 // pred_check
        %p137 = pneg %p136
      $region18: #{transformer_decoder_forward.25} parent=5 // pred_check_branch
        %139 = sbr.rel (%p137) target = $region20
      $region19: #{transformer_decoder_forward.25} parent=5 // pred_region
        // Predicated region
        $region21: #{transformer_decoder_forward.25} parent=19 // pred_check
          %p140 = pneg %p52
        $region22: #{transformer_decoder_forward.25} parent=19 // pred_check_branch
          %142 = sbr.rel (%p140) target = $region24
        $region23: #{transformer_decoder_forward.25} parent=19 // pred_region
          %p143 = scmp.lt.s32.totalorder %s18, 1
          %s144 = scalar_select %p143, %s18, 1
          %p145 = scmp.lt.s32.totalorder %s19, 0
          %s146 = scalar_select %p145, %s19, 0
          %s147 = sadd.s32 %s146, %s144
          %s148 = smul.addr %s147, 4
          %s149 = scalar_lea.vmem %s0, %s148
        $region24: #{transformer_decoder_forward.25} parent=19 // pred_fallthru
          _
      $region20: #{transformer_decoder_forward.25} parent=5 // pred_fallthru
        _
      %p150 = scmp.le.s32.totalorder 1, %s11
      %p151 = scmp.lt.s32.totalorder %s11, 3
      %p152 = pnand %p150, %p151
      %p153 = pneg %p152
      // Predicated region
      $region25: #{transformer_decoder_forward.25} parent=5 // pred_check
        _
      $region26: #{transformer_decoder_forward.25} parent=5 // pred_check_branch
        %155 = sbr.rel (%p152) target = $region28
      $region27: #{transformer_decoder_forward.25} parent=5 // pred_region
        %s156 = ssub.s32 %s11, 1
        %p157 = scmp.lt.s32.totalorder %s21, 1
        %s158 = scalar_select %p157, %s21, 1
        %p159 = scmp.lt.s32.totalorder %s22, 0
        %s160 = scalar_select %p159, %s22, 0
        %s161 = sadd.s32 %s160, %s158
        %s162 = smul.addr %s161, 4
        %s163 = scalar_lea.vmem %s0, %s162
        %p164 = pneg %p58
        %p165 = pneg %p55
        %p166 = scmp.lt.s32.totalorder %s23, 0
        %s167 = scalar_select %p166, %s23, 0
        %s168 = smul.addr %s167, 4
        %s169 = scalar_lea.vmem %s1, %s168
        %p170 = pneg %p84
        %p171 = pneg %p81
        %p172 = pneg %p114
        %p173 = pneg %p111
        %s174 = sand.u32 %s101, 1
        %s175 = scalar_lea.sflag [#allocation3], %s174
        %s176 = sand.u32 %s101, 1
        %s177 = smul.addr %s176, 8
        %s178 = scalar_lea.vmem [#allocation2], %s177
        %p179 = scmp.lt.s32.totalorder %s21, 1
        %s180 = scalar_select %p179, %s21, 1
        %p181 = scmp.lt.s32.totalorder %s22, 0
        %s182 = scalar_select %p181, %s22, 0
        %s183 = sadd.s32 %s182, %s180
        %s184 = smul.addr %s183, 4
        %s185 = scalar_lea.vmem %s0, %s184
        %p186 = scmp.lt.s32.totalorder %s23, 0
        %s187 = scalar_select %p186, %s23, 0
        %s188 = smul.addr %s187, 4
        %s189 = scalar_lea.vmem %s1, %s188
        %v191 = vld [vmem:[%s185] sm:$0xf]
        %v192 = vld [vmem:[%s189] sm:$0xf]
        %v193 = vld [vmem:[%s189 + $0x4] sm:$0xf]
        %v194 = vld [vmem:[%s189 + $0x8] sm:$0xf]
        %v195 = vld [vmem:[%s189 + $0xc] sm:$0xf]
        %v196 = vld [vmem:[%s189 + $0x10] sm:$0xf]
        %v197 = vld [vmem:[%s189 + $0x14] sm:$0xf]
        %v198 = vld [vmem:[%s189 + $0x18] sm:$0xf]
        %v199 = vld [vmem:[%s189 + $0x1c] sm:$0xf]
        %v200 = vld [vmem:[%s189 + $0x20] sm:$0xf]
        %v201 = vld [vmem:[%s189 + $0x24] sm:$0xf]
        %v202 = vld [vmem:[%s189 + $0x28] sm:$0xf]
        %v203 = vld [vmem:[%s189 + $0x2c] sm:$0xf]
        %v204 = vld [vmem:[%s189 + $0x30] sm:$0xf]
        %v205 = vld [vmem:[%s189 + $0x34] sm:$0xf]
        %v206 = vld [vmem:[%s189 + $0x38] sm:$0xf]
        %v207 = vld [vmem:[%s189 + $0x3c] sm:$0xf]
        %v224 = vunpack.c.l.b16 %v192
        %v225 = vunpack.c.l.b16 %v193
        %v226 = vunpack.c.l.b16 %v194
        %v227 = vunpack.c.l.b16 %v195
        %v228 = vunpack.c.l.b16 %v196
        %v229 = vunpack.c.l.b16 %v197
        %v230 = vunpack.c.l.b16 %v198
        %v231 = vunpack.c.l.b16 %v199
        %v232 = vunpack.c.l.b16 %v200
        %v233 = vunpack.c.l.b16 %v201
        %v234 = vunpack.c.l.b16 %v202
        %v235 = vunpack.c.l.b16 %v203
        %v236 = vunpack.c.l.b16 %v204
        %v237 = vunpack.c.l.b16 %v205
        %v238 = vunpack.c.l.b16 %v206
        %v239 = vunpack.c.l.b16 %v207
        %v240 = vpack.c.b16 %v225, %v224
        %v241 = vpack.c.b16 %v227, %v226
        %v242 = vpack.c.b16 %v229, %v228
        %v243 = vpack.c.b16 %v231, %v230
        %v244 = vpack.c.b16 %v233, %v232
        %v245 = vpack.c.b16 %v235, %v234
        %v246 = vpack.c.b16 %v237, %v236
        %v247 = vpack.c.b16 %v239, %v238
        %256 = vmatprep.subr.bf16.mxu0 0
        %257 = vmatpush1.bf16.msra.mxu0 %v240
        %258 = vmatprep.subr.bf16.mxu0 0
        %259 = vmatpush1.bf16.msra.mxu0 %v241
        %260 = vmatprep.subr.bf16.mxu0 0
        %261 = vmatpush1.bf16.msra.mxu0 %v242
        %262 = vmatprep.subr.bf16.mxu0 0
        %263 = vmatpush1.bf16.msra.mxu0 %v243
        %264 = vmatprep.subr.bf16.mxu0 0
        %265 = vmatpush1.bf16.msra.mxu0 %v244
        %266 = vmatprep.subr.bf16.mxu0 0
        %267 = vmatpush1.bf16.msra.mxu0 %v245
        %268 = vmatprep.subr.bf16.mxu0 0
        %269 = vmatpush1.bf16.msra.mxu0 %v246
        %270 = vmatprep.subr.bf16.mxu0 0
        %271 = vmatpush1.bf16.msra.mxu0 %v247
        %272 = vmatprep.subr.bf16.mxu0 0
        %273 = vmatpush1.bf16.msra.mxu0 0
        %274 = vmatprep.subr.bf16.mxu0 0
        %275 = vmatpush1.bf16.msra.mxu0 0
        %276 = vmatprep.subr.bf16.mxu0 0
        %277 = vmatpush1.bf16.msra.mxu0 0
        %278 = vmatprep.subr.bf16.mxu0 0
        %279 = vmatpush1.bf16.msra.mxu0 0
        %280 = vmatprep.subr.bf16.mxu0 0
        %281 = vmatpush1.bf16.msra.mxu0 0
        %282 = vmatprep.subr.bf16.mxu0 0
        %283 = vmatpush1.bf16.msra.mxu0 0
        %284 = vmatprep.subr.bf16.mxu0 0
        %285 = vmatpush1.bf16.msra.mxu0 0
        %286 = vmatprep.subr.bf16.mxu0 0
        %287 = vmatpush1.bf16.msra.mxu0 0
        %288 = vmatprep.mubr.bf16.mxu0 0
        %289 = vmatmul.mubr.bf16.gmra.mrb[0].mxu0 %v191
        %v290 = vpop.f32.mrb[0].mxu0
        %v291 = vadd.f32 0.0, %v290
        %v292 = vpop.f32.mrb[0].mxu0
        %v293 = vpop.f32.mrb[0].mxu0
        %v294 = vpop.f32.mrb[0].mxu0
        %295 = vdwg.mxu0
        %vm296 = vcmask 523264
        %297 = vst.msk [vmem:[%s178] sm:$0xff] %vm296, %v291
        %s298 = sand.u32 %s101, 1
        %s299 = scalar_lea.sflag [#allocation3], %s298
        %s300 = sand.u32 %s101, 1
        %s301 = smul.addr %s300, 8
        %s302 = scalar_lea.vmem [#allocation2], %s301
        // Predicated region
        $region29: #{transformer_decoder_forward.25} parent=27 // pred_check
          %p303 = pneg %p111
        $region30: #{transformer_decoder_forward.25} parent=27 // pred_check_branch
          %305 = sbr.rel (%p303) target = $region32
        $region31: #{transformer_decoder_forward.25} parent=27 // pred_region
          %s307 = ssub.s32 128, 128
          %308 = vsyncadd %s299, %s307
          %s309 = sadd.s32 %s23, %s22
          %s310 = sadd.s32 %s309, %s21
          %s311 = smul.addr %s310, 128
          %s312 = scalar_lea.hbm %s2, %s311
          %s314 = sshll.u32 %s302, 4
          %s315 = int_to_ptr.vmem [resolvable:$true] %s314
          %317 = dma.vmem_to_hbm [thread:$0]  %s315, 128, %s312, %s299
        $region32: #{transformer_decoder_forward.25} parent=27 // pred_fallthru
          _
      $region28: #{transformer_decoder_forward.25} parent=5 // pred_fallthru
        _
      %p318 = scmp.le.s32.totalorder 2, %s11
      // Predicated region
      $region33: #{transformer_decoder_forward.25} parent=5 // pred_check
        %p319 = pneg %p318
      $region34: #{transformer_decoder_forward.25} parent=5 // pred_check_branch
        %321 = sbr.rel (%p319) target = $region36
      $region35: #{transformer_decoder_forward.25} parent=5 // pred_region
        %s322 = ssub.s32 %s11, 2
        // Predicated region
        $region37: #{transformer_decoder_forward.25} parent=35 // pred_check
          %p323 = pneg %p117
        $region38: #{transformer_decoder_forward.25} parent=35 // pred_check_branch
          %325 = sbr.rel (%p323) target = $region40
        $region39: #{transformer_decoder_forward.25} parent=35 // pred_region
          %s326 = sand.u32 %s102, 1
          %s327 = scalar_lea.sflag [#allocation3], %s326
          %s328 = sand.u32 %s102, 1
          %s329 = smul.addr %s328, 8
          %s330 = scalar_lea.vmem [#allocation2], %s329
          %331 = dma.done %s327, 128
        $region40: #{transformer_decoder_forward.25} parent=35 // pred_fallthru
          _
      $region36: #{transformer_decoder_forward.25} parent=5 // pred_fallthru
        _
    $region6: #{transformer_decoder_forward.25} parent=1 // loop_footer
      %s15 = sadd.s32 1, %s11
    $region7: #{transformer_decoder_forward.25} parent=1 // loop_footer_branch
      %10 = sbr.rel target = $region3
    $region8: #{transformer_decoder_forward.25} parent=1 // loop_exit
      _
    %332 = vsyncpa [#allocation3], 1
    %s333 = scalar_lea.sflag [#allocation3], 1
    %334 = vsyncpa %s333, 1

// kernel: transformer_decoder_forward.19
$region0: #{transformer_decoder_forward.19}
  #allocation0 [shape = 'u32[]', space=smem, size = 0x4, offset = 0x4, fixed_abs, tag = 'smem constant byte address 0x4 - core index']
  #allocation1 [shape = 'u32[144,128]{1,0:T(1,128)}', space=vmem, size = 0x12000, scoped, tag = 'internal scratch']
  %s0 = inlined_call_operand.vmem [shape: bf16[2,8,128], index: 0, kind: input, shape index: {}, may-alias: {0,1}]
  %s1 = inlined_call_operand.vmem [shape: bf16[2,8,128], index: 1, kind: input, shape index: {}, may-alias: {0,1}]
  %s2 = inlined_call_operand.vmem [shape: f32[2,1,8], index: 2, kind: input, shape index: {}]
  %s3 = inlined_call_operand.vmem [shape: f32[2,8,1], index: 3, kind: input, shape index: {}]
  %s4 = inlined_call_operand.vmem [shape: bf16[128,128], index: 4, kind: input, shape index: {}]
  %s5 = inlined_call_operand.vmem [shape: f32[1,128], index: 5, kind: input, shape index: {}]
  %s6 = inlined_call_operand.vmem [shape: bf16[128,256], index: 6, kind: input, shape index: {}]
  %s7 = inlined_call_operand.vmem [shape: f32[1,256], index: 7, kind: input, shape index: {}]
  %s8 = inlined_call_operand.vmem [shape: bf16[128,128], index: 8, kind: input, shape index: {}]
  %s9 = inlined_call_operand.vmem [shape: f32[1,128], index: 9, kind: input, shape index: {}]
  %s10 = inlined_call_operand.vmem [shape: f32[1,128], index: 10, kind: input, shape index: {}]
  %s11 = inlined_call_operand.vmem [shape: f32[1,128], index: 11, kind: input, shape index: {}]
  %s12 = inlined_call_operand.vmem [shape: bf16[2,8,128], index: 12, kind: output, shape index: {}]
  %s13 = sld [smem:[#allocation0]]
  $region81: #{transformer_decoder_forward.19} parent=0
    _
  %s15 = ssub.s32 1, %s13
  %s16 = scalar_select 0, %s15, %s13
  loop: start=0, step=1, limit=4
  $region2: #{transformer_decoder_forward.19} parent=0 // loop_pre_header
    _
  $region3: #{transformer_decoder_forward.19} parent=0 // loop_header
    %s18 = sphi 0, %s22
    %p19 = scmp.ge.s32.totalorder %s18, 4
    %s25 = sphi 0, %s37
    %s26 = sphi 0, %s33
    %s27 = sphi 0, %s25
    %s28 = sphi 0, %s26
    %s29 = sphi 0, %s27
    %s30 = sphi 0, %s28
    %s42 = sphi 0, %s44
    %s45 = sphi 0, %s42
    %s46 = sphi 0, %s45
    %s62 = sphi 0, %s46
    %s68 = sphi 0, %s70
    %s71 = sphi 0, %s68
    %s72 = sphi 0, %s71
    %s88 = sphi 0, %s72
    %s94 = sphi 0, %s96
    %s97 = sphi 0, %s94
    %s98 = sphi 0, %s97
    %s114 = sphi 0, %s98
    %s122 = sphi 0, %s124
    %s125 = sphi 0, %s122
    %s126 = sphi 0, %s125
    %s142 = sphi 0, %s126
    %s146 = sphi 0, %s146
    %s148 = sphi 0, %s146
    %s149 = sphi 0, %s148
    %s163 = sphi 0, %s149
    %s167 = sphi 0, %s167
    %s169 = sphi 0, %s167
    %s170 = sphi 0, %s169
    %s184 = sphi 0, %s170
    %s188 = sphi 0, %s188
    %s190 = sphi 0, %s188
    %s191 = sphi 0, %s190
    %s205 = sphi 0, %s191
    %s209 = sphi 0, %s209
    %s211 = sphi 0, %s209
    %s212 = sphi 0, %s211
    %s226 = sphi 0, %s212
    %s230 = sphi 0, %s230
    %s232 = sphi 0, %s230
    %s233 = sphi 0, %s232
    %s247 = sphi 0, %s233
    %s251 = sphi 0, %s251
    %s253 = sphi 0, %s251
    %s254 = sphi 0, %s253
    %s268 = sphi 0, %s254
    %s272 = sphi 0, %s272
    %s274 = sphi 0, %s272
    %s275 = sphi 0, %s274
    %s289 = sphi 0, %s275
    %s293 = sphi 0, %s293
    %s295 = sphi 0, %s293
    %s296 = sphi 0, %s295
    %s310 = sphi 0, %s296
    %s318 = sphi 0, %s320
    %s321 = sphi 0, %s318
    %s322 = sphi 0, %s321
    %s338 = sphi 0, %s322
  $region4: #{transformer_decoder_forward.19} parent=0 // loop_header_branch
    %21 = sbr.rel (%p19) target = $region8
  $region5: #{transformer_decoder_forward.19} parent=0 // loop_body
    %s23 = ssub.s32 %s18, 1
    %s24 = ssub.s32 %s18, 2
    %s31 = sadd.s32 1, %s26
    %p32 = scmp.ge.s32.totalorder %s31, 1
    %s33 = scalar_select %p32, 0, %s31
    %s34 = sadd.s32 1, %s25
    %s35 = scalar_select %p32, %s34, %s25
    %p36 = scmp.ge.s32.totalorder %s35, 2
    %s37 = scalar_select %p36, 0, %s35
    %s38 = ssub.s32 %s25, %s37
    %s39 = ssub.s32 %s26, %s33
    %s40 = sor.u32 %s38, %s39
    %p41 = scmp.eq.s32.totalorder %s40, 0
    %s43 = sadd.s32 %s42, 1
    %s44 = scalar_select %p41, %s42, %s43
    %p47 = pneg %p41
    %p48 = scmp.eq.s32.totalorder %s18, 1
    %p49 = por %p47, %p48
    %p50 = scmp.ne.s32.totalorder %s42, %s45
    %p51 = scmp.eq.s32.totalorder %s18, 0
    %p52 = por %p50, %p51
    %p53 = scmp.ne.s32.totalorder %s42, %s45
    %p54 = scmp.eq.s32.totalorder %s23, 1
    %p55 = por %p53, %p54
    %p56 = scmp.ne.s32.totalorder %s45, %s46
    %p57 = scmp.eq.s32.totalorder %s23, 0
    %p58 = por %p56, %p57
    %p59 = scmp.ne.s32.totalorder %s45, %s46
    %p60 = scmp.eq.s32.totalorder %s24, 1
    %p61 = por %p59, %p60
    %p63 = scmp.ne.s32.totalorder %s46, %s62
    %p64 = scmp.eq.s32.totalorder %s24, 0
    %p65 = por %p63, %p64
    %s66 = ssub.s32 %s25, %s37
    %p67 = scmp.eq.s32.totalorder %s66, 0
    %s69 = sadd.s32 %s68, 1
    %s70 = scalar_select %p67, %s68, %s69
    %p73 = pneg %p67
    %p74 = scmp.eq.s32.totalorder %s18, 1
    %p75 = por %p73, %p74
    %p76 = scmp.ne.s32.totalorder %s68, %s71
    %p77 = scmp.eq.s32.totalorder %s18, 0
    %p78 = por %p76, %p77
    %p79 = scmp.ne.s32.totalorder %s68, %s71
    %p80 = scmp.eq.s32.totalorder %s23, 1
    %p81 = por %p79, %p80
    %p82 = scmp.ne.s32.totalorder %s71, %s72
    %p83 = scmp.eq.s32.totalorder %s23, 0
    %p84 = por %p82, %p83
    %p85 = scmp.ne.s32.totalorder %s71, %s72
    %p86 = scmp.eq.s32.totalorder %s24, 1
    %p87 = por %p85, %p86
    %p89 = scmp.ne.s32.totalorder %s72, %s88
    %p90 = scmp.eq.s32.totalorder %s24, 0
    %p91 = por %p89, %p90
    %s92 = ssub.s32 %s25, %s37
    %p93 = scmp.eq.s32.totalorder %s92, 0
    %s95 = sadd.s32 %s94, 1
    %s96 = scalar_select %p93, %s94, %s95
    %p99 = pneg %p93
    %p100 = scmp.eq.s32.totalorder %s18, 1
    %p101 = por %p99, %p100
    %p102 = scmp.ne.s32.totalorder %s94, %s97
    %p103 = scmp.eq.s32.totalorder %s18, 0
    %p104 = por %p102, %p103
    %p105 = scmp.ne.s32.totalorder %s94, %s97
    %p106 = scmp.eq.s32.totalorder %s23, 1
    %p107 = por %p105, %p106
    %p108 = scmp.ne.s32.totalorder %s97, %s98
    %p109 = scmp.eq.s32.totalorder %s23, 0
    %p110 = por %p108, %p109
    %p111 = scmp.ne.s32.totalorder %s97, %s98
    %p112 = scmp.eq.s32.totalorder %s24, 1
    %p113 = por %p111, %p112
    %p115 = scmp.ne.s32.totalorder %s98, %s114
    %p116 = scmp.eq.s32.totalorder %s24, 0
    %p117 = por %p115, %p116
    %s118 = ssub.s32 %s25, %s37
    %s119 = ssub.s32 %s26, %s33
    %s120 = sor.u32 %s118, %s119
    %p121 = scmp.eq.s32.totalorder %s120, 0
    %s123 = sadd.s32 %s122, 1
    %s124 = scalar_select %p121, %s122, %s123
    %p127 = pneg %p121
    %p128 = scmp.eq.s32.totalorder %s18, 1
    %p129 = por %p127, %p128
    %p130 = scmp.ne.s32.totalorder %s122, %s125
    %p131 = scmp.eq.s32.totalorder %s18, 0
    %p132 = por %p130, %p131
    %p133 = scmp.ne.s32.totalorder %s122, %s125
    %p134 = scmp.eq.s32.totalorder %s23, 1
    %p135 = por %p133, %p134
    %p136 = scmp.ne.s32.totalorder %s125, %s126
    %p137 = scmp.eq.s32.totalorder %s23, 0
    %p138 = por %p136, %p137
    %p139 = scmp.ne.s32.totalorder %s125, %s126
    %p140 = scmp.eq.s32.totalorder %s24, 1
    %p141 = por %p139, %p140
    %p143 = scmp.ne.s32.totalorder %s126, %s142
    %p144 = scmp.eq.s32.totalorder %s24, 0
    %p145 = por %p143, %p144
    %s147 = sadd.s32 %s146, 1
    %p150 = scmp.eq.s32.totalorder %s18, 1
    %p151 = scmp.ne.s32.totalorder %s146, %s148
    %p152 = scmp.eq.s32.totalorder %s18, 0
    %p153 = por %p151, %p152
    %p154 = scmp.ne.s32.totalorder %s146, %s148
    %p155 = scmp.eq.s32.totalorder %s23, 1
    %p156 = por %p154, %p155
    %p157 = scmp.ne.s32.totalorder %s148, %s149
    %p158 = scmp.eq.s32.totalorder %s23, 0
    %p159 = por %p157, %p158
    %p160 = scmp.ne.s32.totalorder %s148, %s149
    %p161 = scmp.eq.s32.totalorder %s24, 1
    %p162 = por %p160, %p161
    %p164 = scmp.ne.s32.totalorder %s149, %s163
    %p165 = scmp.eq.s32.totalorder %s24, 0
    %p166 = por %p164, %p165
    %s168 = sadd.s32 %s167, 1
    %p171 = scmp.eq.s32.totalorder %s18, 1
    %p172 = scmp.ne.s32.totalorder %s167, %s169
    %p173 = scmp.eq.s32.totalorder %s18, 0
    %p174 = por %p172, %p173
    %p175 = scmp.ne.s32.totalorder %s167, %s169
    %p176 = scmp.eq.s32.totalorder %s23, 1
    %p177 = por %p175, %p176
    %p178 = scmp.ne.s32.totalorder %s169, %s170
    %p179 = scmp.eq.s32.totalorder %s23, 0
    %p180 = por %p178, %p179
    %p181 = scmp.ne.s32.totalorder %s169, %s170
    %p182 = scmp.eq.s32.totalorder %s24, 1
    %p183 = por %p181, %p182
    %p185 = scmp.ne.s32.totalorder %s170, %s184
    %p186 = scmp.eq.s32.totalorder %s24, 0
    %p187 = por %p185, %p186
    %s189 = sadd.s32 %s188, 1
    %p192 = scmp.eq.s32.totalorder %s18, 1
    %p193 = scmp.ne.s32.totalorder %s188, %s190
    %p194 = scmp.eq.s32.totalorder %s18, 0
    %p195 = por %p193, %p194
    %p196 = scmp.ne.s32.totalorder %s188, %s190
    %p197 = scmp.eq.s32.totalorder %s23, 1
    %p198 = por %p196, %p197
    %p199 = scmp.ne.s32.totalorder %s190, %s191
    %p200 = scmp.eq.s32.totalorder %s23, 0
    %p201 = por %p199, %p200
    %p202 = scmp.ne.s32.totalorder %s190, %s191
    %p203 = scmp.eq.s32.totalorder %s24, 1
    %p204 = por %p202, %p203
    %p206 = scmp.ne.s32.totalorder %s191, %s205
    %p207 = scmp.eq.s32.totalorder %s24, 0
    %p208 = por %p206, %p207
    %s210 = sadd.s32 %s209, 1
    %p213 = scmp.eq.s32.totalorder %s18, 1
    %p214 = scmp.ne.s32.totalorder %s209, %s211
    %p215 = scmp.eq.s32.totalorder %s18, 0
    %p216 = por %p214, %p215
    %p217 = scmp.ne.s32.totalorder %s209, %s211
    %p218 = scmp.eq.s32.totalorder %s23, 1
    %p219 = por %p217, %p218
    %p220 = scmp.ne.s32.totalorder %s211, %s212
    %p221 = scmp.eq.s32.totalorder %s23, 0
    %p222 = por %p220, %p221
    %p223 = scmp.ne.s32.totalorder %s211, %s212
    %p224 = scmp.eq.s32.totalorder %s24, 1
    %p225 = por %p223, %p224
    %p227 = scmp.ne.s32.totalorder %s212, %s226
    %p228 = scmp.eq.s32.totalorder %s24, 0
    %p229 = por %p227, %p228
    %s231 = sadd.s32 %s230, 1
    %p234 = scmp.eq.s32.totalorder %s18, 1
    %p235 = scmp.ne.s32.totalorder %s230, %s232
    %p236 = scmp.eq.s32.totalorder %s18, 0
    %p237 = por %p235, %p236
    %p238 = scmp.ne.s32.totalorder %s230, %s232
    %p239 = scmp.eq.s32.totalorder %s23, 1
    %p240 = por %p238, %p239
    %p241 = scmp.ne.s32.totalorder %s232, %s233
    %p242 = scmp.eq.s32.totalorder %s23, 0
    %p243 = por %p241, %p242
    %p244 = scmp.ne.s32.totalorder %s232, %s233
    %p245 = scmp.eq.s32.totalorder %s24, 1
    %p246 = por %p244, %p245
    %p248 = scmp.ne.s32.totalorder %s233, %s247
    %p249 = scmp.eq.s32.totalorder %s24, 0
    %p250 = por %p248, %p249
    %s252 = sadd.s32 %s251, 1
    %p255 = scmp.eq.s32.totalorder %s18, 1
    %p256 = scmp.ne.s32.totalorder %s251, %s253
    %p257 = scmp.eq.s32.totalorder %s18, 0
    %p258 = por %p256, %p257
    %p259 = scmp.ne.s32.totalorder %s251, %s253
    %p260 = scmp.eq.s32.totalorder %s23, 1
    %p261 = por %p259, %p260
    %p262 = scmp.ne.s32.totalorder %s253, %s254
    %p263 = scmp.eq.s32.totalorder %s23, 0
    %p264 = por %p262, %p263
    %p265 = scmp.ne.s32.totalorder %s253, %s254
    %p266 = scmp.eq.s32.totalorder %s24, 1
    %p267 = por %p265, %p266
    %p269 = scmp.ne.s32.totalorder %s254, %s268
    %p270 = scmp.eq.s32.totalorder %s24, 0
    %p271 = por %p269, %p270
    %s273 = sadd.s32 %s272, 1
    %p276 = scmp.eq.s32.totalorder %s18, 1
    %p277 = scmp.ne.s32.totalorder %s272, %s274
    %p278 = scmp.eq.s32.totalorder %s18, 0
    %p279 = por %p277, %p278
    %p280 = scmp.ne.s32.totalorder %s272, %s274
    %p281 = scmp.eq.s32.totalorder %s23, 1
    %p282 = por %p280, %p281
    %p283 = scmp.ne.s32.totalorder %s274, %s275
    %p284 = scmp.eq.s32.totalorder %s23, 0
    %p285 = por %p283, %p284
    %p286 = scmp.ne.s32.totalorder %s274, %s275
    %p287 = scmp.eq.s32.totalorder %s24, 1
    %p288 = por %p286, %p287
    %p290 = scmp.ne.s32.totalorder %s275, %s289
    %p291 = scmp.eq.s32.totalorder %s24, 0
    %p292 = por %p290, %p291
    %s294 = sadd.s32 %s293, 1
    %p297 = scmp.eq.s32.totalorder %s18, 1
    %p298 = scmp.ne.s32.totalorder %s293, %s295
    %p299 = scmp.eq.s32.totalorder %s18, 0
    %p300 = por %p298, %p299
    %p301 = scmp.ne.s32.totalorder %s293, %s295
    %p302 = scmp.eq.s32.totalorder %s23, 1
    %p303 = por %p301, %p302
    %p304 = scmp.ne.s32.totalorder %s295, %s296
    %p305 = scmp.eq.s32.totalorder %s23, 0
    %p306 = por %p304, %p305
    %p307 = scmp.ne.s32.totalorder %s295, %s296
    %p308 = scmp.eq.s32.totalorder %s24, 1
    %p309 = por %p307, %p308
    %p311 = scmp.ne.s32.totalorder %s296, %s310
    %p312 = scmp.eq.s32.totalorder %s24, 0
    %p313 = por %p311, %p312
    %s314 = ssub.s32 %s25, %s37
    %s315 = ssub.s32 %s26, %s33
    %s316 = sor.u32 %s314, %s315
    %p317 = scmp.eq.s32.totalorder %s316, 0
    %s319 = sadd.s32 %s318, 1
    %s320 = scalar_select %p317, %s318, %s319
    %p323 = pneg %p317
    %p324 = scmp.eq.s32.totalorder %s18, 1
    %p325 = por %p323, %p324
    %p326 = scmp.ne.s32.totalorder %s318, %s321
    %p327 = scmp.eq.s32.totalorder %s18, 0
    %p328 = por %p326, %p327
    %p329 = scmp.ne.s32.totalorder %s318, %s321
    %p330 = scmp.eq.s32.totalorder %s23, 1
    %p331 = por %p329, %p330
    %p332 = scmp.ne.s32.totalorder %s321, %s322
    %p333 = scmp.eq.s32.totalorder %s23, 0
    %p334 = por %p332, %p333
    %p335 = scmp.ne.s32.totalorder %s321, %s322
    %p336 = scmp.eq.s32.totalorder %s24, 1
    %p337 = por %p335, %p336
    %p339 = scmp.ne.s32.totalorder %s322, %s338
    %p340 = scmp.eq.s32.totalorder %s24, 0
    %p341 = por %p339, %p340
    %p342 = scmp.le.s32.totalorder 1, %s18
    %p343 = scmp.lt.s32.totalorder %s18, 3
    %p344 = pnand %p342, %p343
    %p345 = pneg %p344
    // Predicated region
    $region9: #{transformer_decoder_forward.19} parent=5 // pred_check
      _
    $region10: #{transformer_decoder_forward.19} parent=5 // pred_check_branch
      %347 = sbr.rel (%p344) target = $region12
    $region11: #{transformer_decoder_forward.19} parent=5 // pred_region
      %s348 = ssub.s32 %s18, 1
      // Predicated region
      $region13: #{transformer_decoder_forward.19} parent=11 // pred_check
        %p349 = pneg %p159
      $region14: #{transformer_decoder_forward.19} parent=11 // pred_check_branch
        %351 = sbr.rel (%p349) target = $region16
      $region15: #{transformer_decoder_forward.19} parent=11 // pred_region
        _
      $region16: #{transformer_decoder_forward.19} parent=11 // pred_fallthru
        _
      // Predicated region
      $region17: #{transformer_decoder_forward.19} parent=11 // pred_check
        %p352 = pneg %p180
      $region18: #{transformer_decoder_forward.19} parent=11 // pred_check_branch
        %354 = sbr.rel (%p352) target = $region20
      $region19: #{transformer_decoder_forward.19} parent=11 // pred_region
        _
      $region20: #{transformer_decoder_forward.19} parent=11 // pred_fallthru
        _
      // Predicated region
      $region21: #{transformer_decoder_forward.19} parent=11 // pred_check
        %p355 = pneg %p201
      $region22: #{transformer_decoder_forward.19} parent=11 // pred_check_branch
        %357 = sbr.rel (%p355) target = $region24
      $region23: #{transformer_decoder_forward.19} parent=11 // pred_region
        _
      $region24: #{transformer_decoder_forward.19} parent=11 // pred_fallthru
        _
      // Predicated region
      $region25: #{transformer_decoder_forward.19} parent=11 // pred_check
        %p358 = pneg %p222
      $region26: #{transformer_decoder_forward.19} parent=11 // pred_check_branch
        %360 = sbr.rel (%p358) target = $region28
      $region27: #{transformer_decoder_forward.19} parent=11 // pred_region
        _
      $region28: #{transformer_decoder_forward.19} parent=11 // pred_fallthru
        _
      // Predicated region
      $region29: #{transformer_decoder_forward.19} parent=11 // pred_check
        %p361 = pneg %p243
      $region30: #{transformer_decoder_forward.19} parent=11 // pred_check_branch
        %363 = sbr.rel (%p361) target = $region32
      $region31: #{transformer_decoder_forward.19} parent=11 // pred_region
        _
      $region32: #{transformer_decoder_forward.19} parent=11 // pred_fallthru
        _
      // Predicated region
      $region33: #{transformer_decoder_forward.19} parent=11 // pred_check
        %p364 = pneg %p264
      $region34: #{transformer_decoder_forward.19} parent=11 // pred_check_branch
        %366 = sbr.rel (%p364) target = $region36
      $region35: #{transformer_decoder_forward.19} parent=11 // pred_region
        _
      $region36: #{transformer_decoder_forward.19} parent=11 // pred_fallthru
        _
      // Predicated region
      $region37: #{transformer_decoder_forward.19} parent=11 // pred_check
        %p367 = pneg %p285
      $region38: #{transformer_decoder_forward.19} parent=11 // pred_check_branch
        %369 = sbr.rel (%p367) target = $region40
      $region39: #{transformer_decoder_forward.19} parent=11 // pred_region
        _
      $region40: #{transformer_decoder_forward.19} parent=11 // pred_fallthru
        _
      // Predicated region
      $region41: #{transformer_decoder_forward.19} parent=11 // pred_check
        %p370 = pneg %p306
      $region42: #{transformer_decoder_forward.19} parent=11 // pred_check_branch
        %372 = sbr.rel (%p370) target = $region44
      $region43: #{transformer_decoder_forward.19} parent=11 // pred_region
        _
      $region44: #{transformer_decoder_forward.19} parent=11 // pred_fallthru
        _
    $region12: #{transformer_decoder_forward.19} parent=5 // pred_fallthru
      _
    %p373 = scmp.lt.s32.totalorder %s18, 2
    // Predicated region
    $region45: #{transformer_decoder_forward.19} parent=5 // pred_check
      %p374 = pneg %p373
    $region46: #{transformer_decoder_forward.19} parent=5 // pred_check_branch
      %376 = sbr.rel (%p374) target = $region48
    $region47: #{transformer_decoder_forward.19} parent=5 // pred_region
      // Predicated region
      $region49: #{transformer_decoder_forward.19} parent=47 // pred_check
        %p377 = pneg %p52
      $region50: #{transformer_decoder_forward.19} parent=47 // pred_check_branch
        %379 = sbr.rel (%p377) target = $region52
      $region51: #{transformer_decoder_forward.19} parent=47 // pred_region
        %p380 = scmp.lt.s32.totalorder %s25, 1
        %s381 = scalar_select %p380, %s25, 1
        %p382 = scmp.lt.s32.totalorder %s26, 0
        %s383 = scalar_select %p382, %s26, 0
        %s384 = sadd.s32 %s383, %s381
        %s385 = smul.addr %s384, 4
        %s386 = scalar_lea.vmem %s0, %s385
      $region52: #{transformer_decoder_forward.19} parent=47 // pred_fallthru
        _
      // Predicated region
      $region53: #{transformer_decoder_forward.19} parent=47 // pred_check
        %p387 = pneg %p78
      $region54: #{transformer_decoder_forward.19} parent=47 // pred_check_branch
        %389 = sbr.rel (%p387) target = $region56
      $region55: #{transformer_decoder_forward.19} parent=47 // pred_region
        %p390 = scmp.lt.s32.totalorder %s25, 1
        %s391 = scalar_select %p390, %s25, 1
        %s392 = smul.addr %s391, 4
        %s393 = scalar_lea.vmem %s1, %s392
      $region56: #{transformer_decoder_forward.19} parent=47 // pred_fallthru
        _
      // Predicated region
      $region57: #{transformer_decoder_forward.19} parent=47 // pred_check
        %p394 = pneg %p104
      $region58: #{transformer_decoder_forward.19} parent=47 // pred_check_branch
        %396 = sbr.rel (%p394) target = $region60
      $region59: #{transformer_decoder_forward.19} parent=47 // pred_region
        %p397 = scmp.lt.s32.totalorder %s25, 1
        %s398 = scalar_select %p397, %s25, 1
        %s399 = scalar_lea.vmem %s2, %s398
      $region60: #{transformer_decoder_forward.19} parent=47 // pred_fallthru
        _
      // Predicated region
      $region61: #{transformer_decoder_forward.19} parent=47 // pred_check
        %p400 = pneg %p132
      $region62: #{transformer_decoder_forward.19} parent=47 // pred_check_branch
        %402 = sbr.rel (%p400) target = $region64
      $region63: #{transformer_decoder_forward.19} parent=47 // pred_region
        %p403 = scmp.lt.s32.totalorder %s25, 1
        %s404 = scalar_select %p403, %s25, 1
        %p405 = scmp.lt.s32.totalorder %s26, 0
        %s406 = scalar_select %p405, %s26, 0
        %s407 = sadd.s32 %s406, %s404
        %s408 = smul.addr %s407, 8
        %s409 = scalar_lea.vmem %s3, %s408
      $region64: #{transformer_decoder_forward.19} parent=47 // pred_fallthru
        _
    $region48: #{transformer_decoder_forward.19} parent=5 // pred_fallthru
      _
    %p410 = scmp.le.s32.totalorder 1, %s18
    %p411 = scmp.lt.s32.totalorder %s18, 3
    %p412 = pnand %p410, %p411
    %p413 = pneg %p412
    // Predicated region
    $region65: #{transformer_decoder_forward.19} parent=5 // pred_check
      _
    $region66: #{transformer_decoder_forward.19} parent=5 // pred_check_branch
      %415 = sbr.rel (%p412) target = $region68
    $region67: #{transformer_decoder_forward.19} parent=5 // pred_region
      %s416 = ssub.s32 %s18, 1
      %p417 = scmp.lt.s32.totalorder %s27, 1
      %s418 = scalar_select %p417, %s27, 1
      %p419 = scmp.lt.s32.totalorder %s28, 0
      %s420 = scalar_select %p419, %s28, 0
      %s421 = sadd.s32 %s420, %s418
      %s422 = smul.addr %s421, 4
      %s423 = scalar_lea.vmem %s0, %s422
      %p424 = pneg %p58
      %p425 = pneg %p55
      %p426 = scmp.lt.s32.totalorder %s27, 1
      %s427 = scalar_select %p426, %s27, 1
      %s428 = smul.addr %s427, 4
      %s429 = scalar_lea.vmem %s1, %s428
      %p430 = pneg %p84
      %p431 = pneg %p81
      %p432 = scmp.lt.s32.totalorder %s27, 1
      %s433 = scalar_select %p432, %s27, 1
      %s434 = scalar_lea.vmem %s2, %s433
      %p435 = pneg %p110
      %p436 = pneg %p107
      %p437 = scmp.lt.s32.totalorder %s27, 1
      %s438 = scalar_select %p437, %s27, 1
      %p439 = scmp.lt.s32.totalorder %s28, 0
      %s440 = scalar_select %p439, %s28, 0
      %s441 = sadd.s32 %s440, %s438
      %s442 = smul.addr %s441, 8
      %s443 = scalar_lea.vmem %s3, %s442
      %p444 = pneg %p138
      %p445 = pneg %p135
      %p446 = pneg %p159
      %p447 = pneg %p156
      %p448 = pneg %p180
      %p449 = pneg %p177
      %p450 = pneg %p201
      %p451 = pneg %p198
      %p452 = pneg %p222
      %p453 = pneg %p219
      %p454 = pneg %p243
      %p455 = pneg %p240
      %p456 = pneg %p264
      %p457 = pneg %p261
      %p458 = pneg %p285
      %p459 = pneg %p282
      %p460 = pneg %p306
      %p461 = pneg %p303
      %p462 = pneg %p334
      %p463 = pneg %p331
      %p464 = scmp.lt.s32.totalorder %s27, 1
      %s465 = scalar_select %p464, %s27, 1
      %p466 = scmp.lt.s32.totalorder %s28, 0
      %s467 = scalar_select %p466, %s28, 0
      %s468 = sadd.s32 %s467, %s465
      %s469 = smul.addr %s468, 4
      %s470 = scalar_lea.vmem %s12, %s469
      %p471 = scmp.lt.s32.totalorder %s27, 1
      %s472 = scalar_select %p471, %s27, 1
      %p473 = scmp.lt.s32.totalorder %s28, 0
      %s474 = scalar_select %p473, %s28, 0
      %s475 = sadd.s32 %s474, %s472
      %s476 = smul.addr %s475, 4
      %s477 = scalar_lea.vmem %s0, %s476
      %p478 = scmp.lt.s32.totalorder %s27, 1
      %s479 = scalar_select %p478, %s27, 1
      %s480 = smul.addr %s479, 4
      %s481 = scalar_lea.vmem %s1, %s480
      %p482 = scmp.lt.s32.totalorder %s27, 1
      %s483 = scalar_select %p482, %s27, 1
      %s484 = scalar_lea.vmem %s2, %s483
      %p485 = scmp.lt.s32.totalorder %s27, 1
      %s486 = scalar_select %p485, %s27, 1
      %p487 = scmp.lt.s32.totalorder %s28, 0
      %s488 = scalar_select %p487, %s28, 0
      %s489 = sadd.s32 %s488, %s486
      %s490 = smul.addr %s489, 8
      %s491 = scalar_lea.vmem %s3, %s490
      %p492 = scmp.lt.s32.totalorder %s27, 1
      %s493 = scalar_select %p492, %s27, 1
      %p494 = scmp.lt.s32.totalorder %s28, 0
      %s495 = scalar_select %p494, %s28, 0
      %s496 = sadd.s32 %s495, %s493
      %s497 = smul.addr %s496, 4
      %s498 = scalar_lea.vmem %s12, %s497
      %v500 = vld [vmem:[%s477] sm:$0xf]
      %v501 = vld [vmem:[%s481] sm:$0xf]
      %v502 = vunpack.c.l.bf16 %v500
      %v503 = vld [vmem:[%s4] sm:$0xf]
      %v504 = vld [vmem:[%s4 + $0x4] sm:$0xf]
      %v505 = vld [vmem:[%s4 + $0x8] sm:$0xf]
      %v506 = vld [vmem:[%s4 + $0xc] sm:$0xf]
      %v507 = vld [vmem:[%s4 + $0x10] sm:$0xf]
      %v508 = vld [vmem:[%s4 + $0x14] sm:$0xf]
      %v509 = vld [vmem:[%s4 + $0x18] sm:$0xf]
      %v510 = vld [vmem:[%s4 + $0x1c] sm:$0xf]
      %v511 = vld [vmem:[%s4 + $0x20] sm:$0xf]
      %v512 = vld [vmem:[%s4 + $0x24] sm:$0xf]
      %v513 = vld [vmem:[%s4 + $0x28] sm:$0xf]
      %v514 = vld [vmem:[%s4 + $0x2c] sm:$0xf]
      %v515 = vld [vmem:[%s4 + $0x30] sm:$0xf]
      %v516 = vld [vmem:[%s4 + $0x34] sm:$0xf]
      %v517 = vld [vmem:[%s4 + $0x38] sm:$0xf]
      %v518 = vld [vmem:[%s4 + $0x3c] sm:$0xf]
      %v519 = vld [vmem:[%s5] sm:$0x1]
      %v521 = vlaneseq
      %v522 = vshrl.u32 %v521, 7
      %v523 = vsub.s32 0, %v522
      %v524 = vrot.slane %v519, %v523
      %v542 = vunpack.c.l.b16 %v503
      %v543 = vunpack.c.l.b16 %v504
      %v544 = vunpack.c.l.b16 %v505
      %v545 = vunpack.c.l.b16 %v506
      %v546 = vunpack.c.l.b16 %v507
      %v547 = vunpack.c.l.b16 %v508
      %v548 = vunpack.c.l.b16 %v509
      %v549 = vunpack.c.l.b16 %v510
      %v550 = vunpack.c.l.b16 %v511
      %v551 = vunpack.c.l.b16 %v512
      %v552 = vunpack.c.l.b16 %v513
      %v553 = vunpack.c.l.b16 %v514
      %v554 = vunpack.c.l.b16 %v515
      %v555 = vunpack.c.l.b16 %v516
      %v556 = vunpack.c.l.b16 %v517
      %v557 = vunpack.c.l.b16 %v518
      %v558 = vpack.c.b16 %v543, %v542
      %v559 = vpack.c.b16 %v545, %v544
      %v560 = vpack.c.b16 %v547, %v546
      %v561 = vpack.c.b16 %v549, %v548
      %v562 = vpack.c.b16 %v551, %v550
      %v563 = vpack.c.b16 %v553, %v552
      %v564 = vpack.c.b16 %v555, %v554
      %v565 = vpack.c.b16 %v557, %v556
      %574 = vmatprep.subr.bf16.mxu0 0
      %575 = vmatpush1.bf16.msra.mxu0 %v558
      %576 = vmatprep.subr.bf16.mxu0 0
      %577 = vmatpush1.bf16.msra.mxu0 %v559
      %578 = vmatprep.subr.bf16.mxu0 0
      %579 = vmatpush1.bf16.msra.mxu0 %v560
      %580 = vmatprep.subr.bf16.mxu0 0
      %581 = vmatpush1.bf16.msra.mxu0 %v561
      %582 = vmatprep.subr.bf16.mxu0 0
      %583 = vmatpush1.bf16.msra.mxu0 %v562
      %584 = vmatprep.subr.bf16.mxu0 0
      %585 = vmatpush1.bf16.msra.mxu0 %v563
      %586 = vmatprep.subr.bf16.mxu0 0
      %587 = vmatpush1.bf16.msra.mxu0 %v564
      %588 = vmatprep.subr.bf16.mxu0 0
      %589 = vmatpush1.bf16.msra.mxu0 %v565
      %590 = vmatprep.subr.bf16.mxu0 0
      %591 = vmatpush1.bf16.msra.mxu0 0
      %592 = vmatprep.subr.bf16.mxu0 0
      %593 = vmatpush1.bf16.msra.mxu0 0
      %594 = vmatprep.subr.bf16.mxu0 0
      %595 = vmatpush1.bf16.msra.mxu0 0
      %596 = vmatprep.subr.bf16.mxu0 0
      %597 = vmatpush1.bf16.msra.mxu0 0
      %598 = vmatprep.subr.bf16.mxu0 0
      %599 = vmatpush1.bf16.msra.mxu0 0
      %600 = vmatprep.subr.bf16.mxu0 0
      %601 = vmatpush1.bf16.msra.mxu0 0
      %602 = vmatprep.subr.bf16.mxu0 0
      %603 = vmatpush1.bf16.msra.mxu0 0
      %604 = vmatprep.subr.bf16.mxu0 0
      %605 = vmatpush1.bf16.msra.mxu0 0
      %606 = vmatprep.mubr.bf16.mxu0 0
      %607 = vmatmul.mubr.bf16.gmra.mrb[0].mxu0 %v500
      %v608 = vpop.f32.mrb[0].mxu0
      %v609 = vadd.f32 %v524, %v608
      %v610 = vpop.f32.mrb[0].mxu0
      %v611 = vpop.f32.mrb[0].mxu0
      %v612 = vpop.f32.mrb[0].mxu0
      %613 = vdwg.mxu0
      %v614 = vld [vmem:[%s6] sm:$0xff]
      %v615 = vld [vmem:[%s6 + $0x8] sm:$0xff]
      %v616 = vld [vmem:[%s6 + $0x10] sm:$0xff]
      %v617 = vld [vmem:[%s6 + $0x18] sm:$0xff]
      %v618 = vld [vmem:[%s6 + $0x20] sm:$0xff]
      %v619 = vld [vmem:[%s6 + $0x28] sm:$0xff]
      %v620 = vld [vmem:[%s6 + $0x30] sm:$0xff]
      %v621 = vld [vmem:[%s6 + $0x38] sm:$0xff]
      %v622 = vld [vmem:[%s6 + $0x40] sm:$0xff]
      %v623 = vld [vmem:[%s6 + $0x48] sm:$0xff]
      %v624 = vld [vmem:[%s6 + $0x50] sm:$0xff]
      %v625 = vld [vmem:[%s6 + $0x58] sm:$0xff]
      %v626 = vld [vmem:[%s6 + $0x60] sm:$0xff]
      %v627 = vld [vmem:[%s6 + $0x68] sm:$0xff]
      %v628 = vld [vmem:[%s6 + $0x70] sm:$0xff]
      %v629 = vld [vmem:[%s6 + $0x78] sm:$0xff]
      %v630 = vld [vmem:[%s7] sm:$0x3]
      %v632 = vlaneseq
      %v633 = vshrl.u32 %v632, 7
      %v634 = vsub.s32 0, %v633
      %v635 = vrot.slane %v630, %v634
      %v636 = vlaneseq
      %v637 = vshrl.u32 %v636, 7
      %v638 = vsub.s32 1, %v637
      %v639 = vrot.slane %v630, %v638
      %v658 = vunpack.c.l.b16 %v614
      %v659 = vunpack.c.h.b16 %v614
      %v660 = vunpack.c.l.b16 %v615
      %v661 = vunpack.c.h.b16 %v615
      %v662 = vunpack.c.l.b16 %v616
      %v663 = vunpack.c.h.b16 %v616
      %v664 = vunpack.c.l.b16 %v617
      %v665 = vunpack.c.h.b16 %v617
      %v666 = vunpack.c.l.b16 %v618
      %v667 = vunpack.c.h.b16 %v618
      %v668 = vunpack.c.l.b16 %v619
      %v669 = vunpack.c.h.b16 %v619
      %v670 = vunpack.c.l.b16 %v620
      %v671 = vunpack.c.h.b16 %v620
      %v672 = vunpack.c.l.b16 %v621
      %v673 = vunpack.c.h.b16 %v621
      %v674 = vunpack.c.l.b16 %v622
      %v675 = vunpack.c.h.b16 %v622
      %v676 = vunpack.c.l.b16 %v623
      %v677 = vunpack.c.h.b16 %v623
      %v678 = vunpack.c.l.b16 %v624
      %v679 = vunpack.c.h.b16 %v624
      %v680 = vunpack.c.l.b16 %v625
      %v681 = vunpack.c.h.b16 %v625
      %v682 = vunpack.c.l.b16 %v626
      %v683 = vunpack.c.h.b16 %v626
      %v684 = vunpack.c.l.b16 %v627
      %v685 = vunpack.c.h.b16 %v627
      %v686 = vunpack.c.l.b16 %v628
      %v687 = vunpack.c.h.b16 %v628
      %v688 = vunpack.c.l.b16 %v629
      %v689 = vunpack.c.h.b16 %v629
      %v690 = vpack.c.b16 %v660, %v658
      %v691 = vpack.c.b16 %v661, %v659
      %v692 = vpack.c.b16 %v664, %v662
      %v693 = vpack.c.b16 %v665, %v663
      %v694 = vpack.c.b16 %v668, %v666
      %v695 = vpack.c.b16 %v669, %v667
      %v696 = vpack.c.b16 %v672, %v670
      %v697 = vpack.c.b16 %v673, %v671
      %v698 = vpack.c.b16 %v676, %v674
      %v699 = vpack.c.b16 %v677, %v675
      %v700 = vpack.c.b16 %v680, %v678
      %v701 = vpack.c.b16 %v681, %v679
      %v702 = vpack.c.b16 %v684, %v682
      %v703 = vpack.c.b16 %v685, %v683
      %v704 = vpack.c.b16 %v688, %v686
      %v705 = vpack.c.b16 %v689, %v687
      %722 = vmatprep.subr.bf16.mxu0 %v691
      %723 = vmatpush1.bf16.msra.mxu0 %v690
      %724 = vmatprep.subr.bf16.mxu0 %v693
      %725 = vmatpush1.bf16.msra.mxu0 %v692
      %726 = vmatprep.subr.bf16.mxu0 %v695
      %727 = vmatpush1.bf16.msra.mxu0 %v694
      %728 = vmatprep.subr.bf16.mxu0 %v697
      %729 = vmatpush1.bf16.msra.mxu0 %v696
      %730 = vmatprep.subr.bf16.mxu0 %v699
      %731 = vmatpush1.bf16.msra.mxu0 %v698
      %732 = vmatprep.subr.bf16.mxu0 %v701
      %733 = vmatpush1.bf16.msra.mxu0 %v700
      %734 = vmatprep.subr.bf16.mxu0 %v703
      %735 = vmatpush1.bf16.msra.mxu0 %v702
      %736 = vmatprep.subr.bf16.mxu0 %v705
      %737 = vmatpush1.bf16.msra.mxu0 %v704
      %738 = vmatprep.subr.bf16.mxu0 0
      %739 = vmatpush1.bf16.msra.mxu0 0
      %740 = vmatprep.subr.bf16.mxu0 0
      %741 = vmatpush1.bf16.msra.mxu0 0
      %742 = vmatprep.subr.bf16.mxu0 0
      %743 = vmatpush1.bf16.msra.mxu0 0
      %744 = vmatprep.subr.bf16.mxu0 0
      %745 = vmatpush1.bf16.msra.mxu0 0
      %746 = vmatprep.subr.bf16.mxu0 0
      %747 = vmatpush1.bf16.msra.mxu0 0
      %748 = vmatprep.subr.bf16.mxu0 0
      %749 = vmatpush1.bf16.msra.mxu0 0
      %750 = vmatprep.subr.bf16.mxu0 0
      %751 = vmatpush1.bf16.msra.mxu0 0
      %752 = vmatprep.subr.bf16.mxu0 0
      %753 = vmatpush1.bf16.msra.mxu0 0
      %754 = vmatprep.mubr.bf16.mxu0 0
      %755 = vmatmul.mubr.bf16.gmra.mrb[0].mxu0 %v501
      %v756 = vpop.f32.mrb[0].mxu0
      %v757 = vadd.f32 %v635, %v756
      %v758 = vpop.f32.mrb[0].mxu0
      %v759 = vadd.f32 %v639, %v758
      %v760 = vpop.f32.mrb[0].mxu0
      %v761 = vpop.f32.mrb[0].mxu0
      %762 = vdwg.mxu0
      %764 = vrot.lane.b32.xlu0 %v609, 96
      %v765 = vpop.permute.xlu0 %764
      %767 = vrot.lane.b32.xlu0 %v609, 64
      %v768 = vpop.permute.xlu0 %767
      %770 = vrot.lane.b32.xlu0 %v609, 32
      %v771 = vpop.permute.xlu0 %770
      %v773 = vcombine.low %v609, %v768
      %v774 = vcombine.high %v609, %v768
      %v776 = vunpack.c.l.s4 1983009808
      %v777 = vunpack.c.0.s8 %v776
      %v778 = vlaneseq
      %v779 = vshrl.u32 %v778, 7
      %v780 = vsub.s32 %v777, %v779
      %v781 = vrot.slane %v773, %v780
      %v783 = vunpack.c.l.s4 1983009808
      %v784 = vunpack.c.0.s8 %v783
      %v785 = vlaneseq
      %v786 = vshrl.u32 %v785, 7
      %v787 = vsub.s32 %v784, %v786
      %v788 = vrot.slane %v774, %v787
      %v789 = vcombine.low %v765, %v771
      %v790 = vcombine.high %v765, %v771
      %v792 = vunpack.c.l.s4 1983009808
      %v793 = vunpack.c.0.s8 %v792
      %v794 = vlaneseq
      %v795 = vshrl.u32 %v794, 7
      %v796 = vsub.s32 %v793, %v795
      %v797 = vrot.slane %v789, %v796
      %v799 = vunpack.c.l.s4 1983009808
      %v800 = vunpack.c.0.s8 %v799
      %v801 = vlaneseq
      %v802 = vshrl.u32 %v801, 7
      %v803 = vsub.s32 %v800, %v802
      %v804 = vrot.slane %v790, %v803
      %v805 = vcombine.low %v781, %v797
      %v806 = vcombine.high %v781, %v797
      %v808 = vunpack.c.l.s4 1934713408
      %v809 = vunpack.c.0.s8 %v808
      %v810 = vlaneseq
      %v811 = vshrl.u32 %v810, 7
      %v812 = vsub.s32 %v809, %v811
      %v813 = vrot.slane %v805, %v812
      %v815 = vunpack.c.l.s4 1934713408
      %v816 = vunpack.c.0.s8 %v815
      %v817 = vlaneseq
      %v818 = vshrl.u32 %v817, 7
      %v819 = vsub.s32 %v816, %v818
      %v820 = vrot.slane %v806, %v819
      %v821 = vcombine.low %v788, %v804
      %v822 = vcombine.high %v788, %v804
      %v824 = vunpack.c.l.s4 1934713408
      %v825 = vunpack.c.0.s8 %v824
      %v826 = vlaneseq
      %v827 = vshrl.u32 %v826, 7
      %v828 = vsub.s32 %v825, %v827
      %v829 = vrot.slane %v821, %v828
      %v831 = vunpack.c.l.s4 1934713408
      %v832 = vunpack.c.0.s8 %v831
      %v833 = vlaneseq
      %v834 = vshrl.u32 %v833, 7
      %v835 = vsub.s32 %v832, %v834
      %v836 = vrot.slane %v822, %v835
      %v837 = vcombine.high %v813, 0.0
      %v838 = vcombine.high %v820, 0.0
      %v839 = vcombine.high %v829, 0.0
      %v840 = vcombine.high %v836, 0.0
      %v841 = vcombine.low %v813, %v820
      %v843 = vunpack.c.l.s4 1983009808
      %v844 = vunpack.c.0.s8 %v843
      %v845 = vlaneseq
      %v846 = vshrl.u32 %v845, 7
      %v847 = vsub.s32 %v844, %v846
      %v848 = vrot.slane %v841, %v847
      %v849 = vcombine.low %v837, %v838
      %v851 = vunpack.c.l.s4 1983009808
      %v852 = vunpack.c.0.s8 %v851
      %v853 = vlaneseq
      %v854 = vshrl.u32 %v853, 7
      %v855 = vsub.s32 %v852, %v854
      %v856 = vrot.slane %v849, %v855
      %v857 = vcombine.low %v829, %v836
      %v859 = vunpack.c.l.s4 1983009808
      %v860 = vunpack.c.0.s8 %v859
      %v861 = vlaneseq
      %v862 = vshrl.u32 %v861, 7
      %v863 = vsub.s32 %v860, %v862
      %v864 = vrot.slane %v857, %v863
      %v865 = vcombine.low %v839, %v840
      %v867 = vunpack.c.l.s4 1983009808
      %v868 = vunpack.c.0.s8 %v867
      %v869 = vlaneseq
      %v870 = vshrl.u32 %v869, 7
      %v871 = vsub.s32 %v868, %v870
      %v872 = vrot.slane %v865, %v871
      %v873 = vcombine.low %v848, %v856
      %v874 = vcombine.high %v848, %v856
      %v876 = vunpack.c.l.s4 1934713408
      %v877 = vunpack.c.0.s8 %v876
      %v878 = vlaneseq
      %v879 = vshrl.u32 %v878, 7
      %v880 = vsub.s32 %v877, %v879
      %v881 = vrot.slane %v873, %v880
      %v883 = vunpack.c.l.s4 1934713408
      %v884 = vunpack.c.0.s8 %v883
      %v885 = vlaneseq
      %v886 = vshrl.u32 %v885, 7
      %v887 = vsub.s32 %v884, %v886
      %v888 = vrot.slane %v874, %v887
      %v889 = vcombine.low %v864, %v872
      %v890 = vcombine.high %v864, %v872
      %v892 = vunpack.c.l.s4 1934713408
      %v893 = vunpack.c.0.s8 %v892
      %v894 = vlaneseq
      %v895 = vshrl.u32 %v894, 7
      %v896 = vsub.s32 %v893, %v895
      %v897 = vrot.slane %v889, %v896
      %v899 = vunpack.c.l.s4 1934713408
      %v900 = vunpack.c.0.s8 %v899
      %v901 = vlaneseq
      %v902 = vshrl.u32 %v901, 7
      %v903 = vsub.s32 %v900, %v902
      %v904 = vrot.slane %v890, %v903
      %v905 = vcombine.low %v881, %v897
      %v906 = vcombine.high %v881, %v897
      %v907 = vcombine.low %v888, %v904
      %v908 = vcombine.high %v888, %v904
      %v909 = vpack.c.bf16 %v905, %v905
      %v910 = vpack.c.bf16 %v906, %v906
      %v911 = vpack.c.bf16 %v907, %v907
      %v912 = vpack.c.bf16 %v908, %v908
      %914 = vrot.lane.b32.xlu0 %v757, 96
      %v915 = vpop.permute.xlu0 %914
      %917 = vrot.lane.b32.xlu0 %v757, 64
      %v918 = vpop.permute.xlu0 %917
      %920 = vrot.lane.b32.xlu0 %v757, 32
      %v921 = vpop.permute.xlu0 %920
      %v923 = vcombine.low %v757, %v918
      %v924 = vcombine.high %v757, %v918
      %v926 = vunpack.c.l.s4 1983009808
      %v927 = vunpack.c.0.s8 %v926
      %v928 = vlaneseq
      %v929 = vshrl.u32 %v928, 7
      %v930 = vsub.s32 %v927, %v929
      %v931 = vrot.slane %v923, %v930
      %v933 = vunpack.c.l.s4 1983009808
      %v934 = vunpack.c.0.s8 %v933
      %v935 = vlaneseq
      %v936 = vshrl.u32 %v935, 7
      %v937 = vsub.s32 %v934, %v936
      %v938 = vrot.slane %v924, %v937
      %v939 = vcombine.low %v915, %v921
      %v940 = vcombine.high %v915, %v921
      %v942 = vunpack.c.l.s4 1983009808
      %v943 = vunpack.c.0.s8 %v942
      %v944 = vlaneseq
      %v945 = vshrl.u32 %v944, 7
      %v946 = vsub.s32 %v943, %v945
      %v947 = vrot.slane %v939, %v946
      %v949 = vunpack.c.l.s4 1983009808
      %v950 = vunpack.c.0.s8 %v949
      %v951 = vlaneseq
      %v952 = vshrl.u32 %v951, 7
      %v953 = vsub.s32 %v950, %v952
      %v954 = vrot.slane %v940, %v953
      %v955 = vcombine.low %v931, %v947
      %v956 = vcombine.high %v931, %v947
      %v958 = vunpack.c.l.s4 1934713408
      %v959 = vunpack.c.0.s8 %v958
      %v960 = vlaneseq
      %v961 = vshrl.u32 %v960, 7
      %v962 = vsub.s32 %v959, %v961
      %v963 = vrot.slane %v955, %v962
      %v965 = vunpack.c.l.s4 1934713408
      %v966 = vunpack.c.0.s8 %v965
      %v967 = vlaneseq
      %v968 = vshrl.u32 %v967, 7
      %v969 = vsub.s32 %v966, %v968
      %v970 = vrot.slane %v956, %v969
      %v971 = vcombine.low %v938, %v954
      %v972 = vcombine.high %v938, %v954
      %v974 = vunpack.c.l.s4 1934713408
      %v975 = vunpack.c.0.s8 %v974
      %v976 = vlaneseq
      %v977 = vshrl.u32 %v976, 7
      %v978 = vsub.s32 %v975, %v977
      %v979 = vrot.slane %v971, %v978
      %v981 = vunpack.c.l.s4 1934713408
      %v982 = vunpack.c.0.s8 %v981
      %v983 = vlaneseq
      %v984 = vshrl.u32 %v983, 7
      %v985 = vsub.s32 %v982, %v984
      %v986 = vrot.slane %v972, %v985
      %v987 = vcombine.high %v963, 0.0
      %v988 = vcombine.high %v970, 0.0
      %v989 = vcombine.high %v979, 0.0
      %v990 = vcombine.high %v986, 0.0
      %v991 = vcombine.low %v963, %v970
      %v993 = vunpack.c.l.s4 1983009808
      %v994 = vunpack.c.0.s8 %v993
      %v995 = vlaneseq
      %v996 = vshrl.u32 %v995, 7
      %v997 = vsub.s32 %v994, %v996
      %v998 = vrot.slane %v991, %v997
      %v999 = vcombine.low %v987, %v988
      %v1001 = vunpack.c.l.s4 1983009808
      %v1002 = vunpack.c.0.s8 %v1001
      %v1003 = vlaneseq
      %v1004 = vshrl.u32 %v1003, 7
      %v1005 = vsub.s32 %v1002, %v1004
      %v1006 = vrot.slane %v999, %v1005
      %v1007 = vcombine.low %v979, %v986
      %v1009 = vunpack.c.l.s4 1983009808
      %v1010 = vunpack.c.0.s8 %v1009
      %v1011 = vlaneseq
      %v1012 = vshrl.u32 %v1011, 7
      %v1013 = vsub.s32 %v1010, %v1012
      %v1014 = vrot.slane %v1007, %v1013
      %v1015 = vcombine.low %v989, %v990
      %v1017 = vunpack.c.l.s4 1983009808
      %v1018 = vunpack.c.0.s8 %v1017
      %v1019 = vlaneseq
      %v1020 = vshrl.u32 %v1019, 7
      %v1021 = vsub.s32 %v1018, %v1020
      %v1022 = vrot.slane %v1015, %v1021
      %v1023 = vcombine.low %v998, %v1006
      %v1024 = vcombine.high %v998, %v1006
      %v1026 = vunpack.c.l.s4 1934713408
      %v1027 = vunpack.c.0.s8 %v1026
      %v1028 = vlaneseq
      %v1029 = vshrl.u32 %v1028, 7
      %v1030 = vsub.s32 %v1027, %v1029
      %v1031 = vrot.slane %v1023, %v1030
      %v1033 = vunpack.c.l.s4 1934713408
      %v1034 = vunpack.c.0.s8 %v1033
      %v1035 = vlaneseq
      %v1036 = vshrl.u32 %v1035, 7
      %v1037 = vsub.s32 %v1034, %v1036
      %v1038 = vrot.slane %v1024, %v1037
      %v1039 = vcombine.low %v1014, %v1022
      %v1040 = vcombine.high %v1014, %v1022
      %v1042 = vunpack.c.l.s4 1934713408
      %v1043 = vunpack.c.0.s8 %v1042
      %v1044 = vlaneseq
      %v1045 = vshrl.u32 %v1044, 7
      %v1046 = vsub.s32 %v1043, %v1045
      %v1047 = vrot.slane %v1039, %v1046
      %v1049 = vunpack.c.l.s4 1934713408
      %v1050 = vunpack.c.0.s8 %v1049
      %v1051 = vlaneseq
      %v1052 = vshrl.u32 %v1051, 7
      %v1053 = vsub.s32 %v1050, %v1052
      %v1054 = vrot.slane %v1040, %v1053
      %v1055 = vcombine.low %v1031, %v1047
      %v1056 = vcombine.high %v1031, %v1047
      %v1057 = vcombine.low %v1038, %v1054
      %v1058 = vcombine.high %v1038, %v1054
      %v1059 = vpack.c.bf16 %v1055, %v1055
      %v1060 = vpack.c.bf16 %v1056, %v1056
      %v1061 = vpack.c.bf16 %v1057, %v1057
      %v1062 = vpack.c.bf16 %v1058, %v1058
      %1064 = vrot.lane.b32.xlu0 %v759, 96
      %v1065 = vpop.permute.xlu0 %1064
      %1067 = vrot.lane.b32.xlu0 %v759, 64
      %v1068 = vpop.permute.xlu0 %1067
      %1070 = vrot.lane.b32.xlu0 %v759, 32
      %v1071 = vpop.permute.xlu0 %1070
      %v1073 = vcombine.low %v759, %v1068
      %v1074 = vcombine.high %v759, %v1068
      %v1076 = vunpack.c.l.s4 1983009808
      %v1077 = vunpack.c.0.s8 %v1076
      %v1078 = vlaneseq
      %v1079 = vshrl.u32 %v1078, 7
      %v1080 = vsub.s32 %v1077, %v1079
      %v1081 = vrot.slane %v1073, %v1080
      %v1083 = vunpack.c.l.s4 1983009808
      %v1084 = vunpack.c.0.s8 %v1083
      %v1085 = vlaneseq
      %v1086 = vshrl.u32 %v1085, 7
      %v1087 = vsub.s32 %v1084, %v1086
      %v1088 = vrot.slane %v1074, %v1087
      %v1089 = vcombine.low %v1065, %v1071
      %v1090 = vcombine.high %v1065, %v1071
      %v1092 = vunpack.c.l.s4 1983009808
      %v1093 = vunpack.c.0.s8 %v1092
      %v1094 = vlaneseq
      %v1095 = vshrl.u32 %v1094, 7
      %v1096 = vsub.s32 %v1093, %v1095
      %v1097 = vrot.slane %v1089, %v1096
      %v1099 = vunpack.c.l.s4 1983009808
      %v1100 = vunpack.c.0.s8 %v1099
      %v1101 = vlaneseq
      %v1102 = vshrl.u32 %v1101, 7
      %v1103 = vsub.s32 %v1100, %v1102
      %v1104 = vrot.slane %v1090, %v1103
      %v1105 = vcombine.low %v1081, %v1097
      %v1106 = vcombine.high %v1081, %v1097
      %v1108 = vunpack.c.l.s4 1934713408
      %v1109 = vunpack.c.0.s8 %v1108
      %v1110 = vlaneseq
      %v1111 = vshrl.u32 %v1110, 7
      %v1112 = vsub.s32 %v1109, %v1111
      %v1113 = vrot.slane %v1105, %v1112
      %v1115 = vunpack.c.l.s4 1934713408
      %v1116 = vunpack.c.0.s8 %v1115
      %v1117 = vlaneseq
      %v1118 = vshrl.u32 %v1117, 7
      %v1119 = vsub.s32 %v1116, %v1118
      %v1120 = vrot.slane %v1106, %v1119
      %v1121 = vcombine.low %v1088, %v1104
      %v1122 = vcombine.high %v1088, %v1104
      %v1124 = vunpack.c.l.s4 1934713408
      %v1125 = vunpack.c.0.s8 %v1124
      %v1126 = vlaneseq
      %v1127 = vshrl.u32 %v1126, 7
      %v1128 = vsub.s32 %v1125, %v1127
      %v1129 = vrot.slane %v1121, %v1128
      %v1131 = vunpack.c.l.s4 1934713408
      %v1132 = vunpack.c.0.s8 %v1131
      %v1133 = vlaneseq
      %v1134 = vshrl.u32 %v1133, 7
      %v1135 = vsub.s32 %v1132, %v1134
      %v1136 = vrot.slane %v1122, %v1135
      %v1137 = vcombine.high %v1113, 0.0
      %v1138 = vcombine.high %v1120, 0.0
      %v1139 = vcombine.high %v1129, 0.0
      %v1140 = vcombine.high %v1136, 0.0
      %v1141 = vcombine.low %v1113, %v1120
      %v1143 = vunpack.c.l.s4 1983009808
      %v1144 = vunpack.c.0.s8 %v1143
      %v1145 = vlaneseq
      %v1146 = vshrl.u32 %v1145, 7
      %v1147 = vsub.s32 %v1144, %v1146
      %v1148 = vrot.slane %v1141, %v1147
      %v1149 = vcombine.low %v1137, %v1138
      %v1151 = vunpack.c.l.s4 1983009808
      %v1152 = vunpack.c.0.s8 %v1151
      %v1153 = vlaneseq
      %v1154 = vshrl.u32 %v1153, 7
      %v1155 = vsub.s32 %v1152, %v1154
      %v1156 = vrot.slane %v1149, %v1155
      %v1157 = vcombine.low %v1129, %v1136
      %v1159 = vunpack.c.l.s4 1983009808
      %v1160 = vunpack.c.0.s8 %v1159
      %v1161 = vlaneseq
      %v1162 = vshrl.u32 %v1161, 7
      %v1163 = vsub.s32 %v1160, %v1162
      %v1164 = vrot.slane %v1157, %v1163
      %v1165 = vcombine.low %v1139, %v1140
      %v1167 = vunpack.c.l.s4 1983009808
      %v1168 = vunpack.c.0.s8 %v1167
      %v1169 = vlaneseq
      %v1170 = vshrl.u32 %v1169, 7
      %v1171 = vsub.s32 %v1168, %v1170
      %v1172 = vrot.slane %v1165, %v1171
      %v1173 = vcombine.low %v1148, %v1156
      %v1174 = vcombine.high %v1148, %v1156
      %v1176 = vunpack.c.l.s4 1934713408
      %v1177 = vunpack.c.0.s8 %v1176
      %v1178 = vlaneseq
      %v1179 = vshrl.u32 %v1178, 7
      %v1180 = vsub.s32 %v1177, %v1179
      %v1181 = vrot.slane %v1173, %v1180
      %v1183 = vunpack.c.l.s4 1934713408
      %v1184 = vunpack.c.0.s8 %v1183
      %v1185 = vlaneseq
      %v1186 = vshrl.u32 %v1185, 7
      %v1187 = vsub.s32 %v1184, %v1186
      %v1188 = vrot.slane %v1174, %v1187
      %v1189 = vcombine.low %v1164, %v1172
      %v1190 = vcombine.high %v1164, %v1172
      %v1192 = vunpack.c.l.s4 1934713408
      %v1193 = vunpack.c.0.s8 %v1192
      %v1194 = vlaneseq
      %v1195 = vshrl.u32 %v1194, 7
      %v1196 = vsub.s32 %v1193, %v1195
      %v1197 = vrot.slane %v1189, %v1196
      %v1199 = vunpack.c.l.s4 1934713408
      %v1200 = vunpack.c.0.s8 %v1199
      %v1201 = vlaneseq
      %v1202 = vshrl.u32 %v1201, 7
      %v1203 = vsub.s32 %v1200, %v1202
      %v1204 = vrot.slane %v1190, %v1203
      %v1205 = vcombine.low %v1181, %v1197
      %v1206 = vcombine.high %v1181, %v1197
      %v1207 = vcombine.low %v1188, %v1204
      %v1208 = vcombine.high %v1188, %v1204
      %v1209 = vpack.c.bf16 %v1205, %v1205
      %v1210 = vpack.c.bf16 %v1206, %v1206
      %v1211 = vpack.c.bf16 %v1207, %v1207
      %v1212 = vpack.c.bf16 %v1208, %v1208
      %v1213 = vld [vmem:[%s484] sm:$0x1]
      %v1214 = vmul.f32 %v1213, -1e+09
      %s1215 = smul.u32 %s28, 8
      %v1216 = vlaneseq
      %v1217 = vshrl.u32 %v1216, 7
      %v1218 = vstv %s1215
      %v1219 = vadd.s32 %v1217, %v1218
      %v1220 = vlaneseq
      %v1221 = vand.u32 %v1220, 127
      %vm1222 = vcmp.gt.s32.totalorder %v1221, %v1219
      %v1223 = vsel %vm1222, -1e+09, 0.0
      %v1225 = vlaneseq
      %v1226 = vshrl.u32 %v1225, 7
      %v1227 = vsub.s32 0, %v1226
      %v1228 = vrot.slane %v1214, %v1227
      %v1230 = vadd.f32 %v1228, %v1223
      %vm1231 = vcmask 261120
      %v1233 = vsel %vm1231, %v909, 0
      %v1236 = vsel %vm1231, %v1059, 0
      %1238 = vmatprep.subr.bf16.mxu0 0
      %1239 = vmatpush1.bf16.xpose.msra.mxu0 %v1236
      %1240 = vmatprep.subr.bf16.mxu0 0
      %1241 = vmatpush1.bf16.xpose.msra.mxu0 0
      %1242 = vmatprep.subr.bf16.mxu0 0
      %1243 = vmatpush1.bf16.xpose.msra.mxu0 0
      %1244 = vmatprep.subr.bf16.mxu0 0
      %1245 = vmatpush1.bf16.xpose.msra.mxu0 0
      %1246 = vmatprep.subr.bf16.mxu0 0
      %1247 = vmatpush1.bf16.xpose.msra.mxu0 0
      %1248 = vmatprep.subr.bf16.mxu0 0
      %1249 = vmatpush1.bf16.xpose.msra.mxu0 0
      %1250 = vmatprep.subr.bf16.mxu0 0
      %1251 = vmatpush1.bf16.xpose.msra.mxu0 0
      %1252 = vmatprep.subr.bf16.mxu0 0
      %1253 = vmatpush1.bf16.xpose.msra.mxu0 0
      %1254 = vmatprep.subr.bf16.mxu0 0
      %1255 = vmatpush1.bf16.xpose.msra.mxu0 0
      %1256 = vmatprep.subr.bf16.mxu0 0
      %1257 = vmatpush1.bf16.xpose.msra.mxu0 0
      %1258 = vmatprep.subr.bf16.mxu0 0
      %1259 = vmatpush1.bf16.xpose.msra.mxu0 0
      %1260 = vmatprep.subr.bf16.mxu0 0
      %1261 = vmatpush1.bf16.xpose.msra.mxu0 0
      %1262 = vmatprep.subr.bf16.mxu0 0
      %1263 = vmatpush1.bf16.xpose.msra.mxu0 0
      %1264 = vmatprep.subr.bf16.mxu0 0
      %1265 = vmatpush1.bf16.xpose.msra.mxu0 0
      %1266 = vmatprep.subr.bf16.mxu0 0
      %1267 = vmatpush1.bf16.xpose.msra.mxu0 0
      %1268 = vmatprep.subr.bf16.mxu0 0
      %1269 = vmatpush1.bf16.xpose.msra.mxu0 0
      %1270 = vmatprep.mubr.bf16.mxu0 0
      %1271 = vmatmul.mubr.bf16.gmra.mrb[0].mxu0 %v1233
      %v1272 = vpop.f32.mrb[0].mxu0
      %v1273 = vadd.f32 %v1230, %v1272
      %v1274 = vpop.f32.mrb[0].mxu0
      %v1275 = vpop.f32.mrb[0].mxu0
      %v1276 = vpop.f32.mrb[0].mxu0
      %1277 = vdwg.mxu0
      %v1279 = vsel %vm1231, %v910, 0
      %v1282 = vsel %vm1231, %v1060, 0
      %1284 = vmatprep.subr.bf16.mxu0 0
      %1285 = vmatpush1.bf16.xpose.msra.mxu0 %v1282
      %1286 = vmatprep.subr.bf16.mxu0 0
      %1287 = vmatpush1.bf16.xpose.msra.mxu0 0
      %1288 = vmatprep.subr.bf16.mxu0 0
      %1289 = vmatpush1.bf16.xpose.msra.mxu0 0
      %1290 = vmatprep.subr.bf16.mxu0 0
      %1291 = vmatpush1.bf16.xpose.msra.mxu0 0
      %1292 = vmatprep.subr.bf16.mxu0 0
      %1293 = vmatpush1.bf16.xpose.msra.mxu0 0
      %1294 = vmatprep.subr.bf16.mxu0 0
      %1295 = vmatpush1.bf16.xpose.msra.mxu0 0
      %1296 = vmatprep.subr.bf16.mxu0 0
      %1297 = vmatpush1.bf16.xpose.msra.mxu0 0
      %1298 = vmatprep.subr.bf16.mxu0 0
      %1299 = vmatpush1.bf16.xpose.msra.mxu0 0
      %1300 = vmatprep.subr.bf16.mxu0 0
      %1301 = vmatpush1.bf16.xpose.msra.mxu0 0
      %1302 = vmatprep.subr.bf16.mxu0 0
      %1303 = vmatpush1.bf16.xpose.msra.mxu0 0
      %1304 = vmatprep.subr.bf16.mxu0 0
      %1305 = vmatpush1.bf16.xpose.msra.mxu0 0
      %1306 = vmatprep.subr.bf16.mxu0 0
      %1307 = vmatpush1.bf16.xpose.msra.mxu0 0
      %1308 = vmatprep.subr.bf16.mxu0 0
      %1309 = vmatpush1.bf16.xpose.msra.mxu0 0
      %1310 = vmatprep.subr.bf16.mxu0 0
      %1311 = vmatpush1.bf16.xpose.msra.mxu0 0
      %1312 = vmatprep.subr.bf16.mxu0 0
      %1313 = vmatpush1.bf16.xpose.msra.mxu0 0
      %1314 = vmatprep.subr.bf16.mxu0 0
      %1315 = vmatpush1.bf16.xpose.msra.mxu0 0
      %1316 = vmatprep.mubr.bf16.mxu0 0
      %1317 = vmatmul.mubr.bf16.gmra.mrb[0].mxu0 %v1279
      %v1318 = vpop.f32.mrb[0].mxu0
      %v1319 = vadd.f32 %v1230, %v1318
      %v1320 = vpop.f32.mrb[0].mxu0
      %v1321 = vpop.f32.mrb[0].mxu0
      %v1322 = vpop.f32.mrb[0].mxu0
      %1323 = vdwg.mxu0
      %v1325 = vsel %vm1231, %v911, 0
      %v1328 = vsel %vm1231, %v1061, 0
      %1330 = vmatprep.subr.bf16.mxu0 0
      %1331 = vmatpush1.bf16.xpose.msra.mxu0 %v1328
      %1332 = vmatprep.subr.bf16.mxu0 0
      %1333 = vmatpush1.bf16.xpose.msra.mxu0 0
      %1334 = vmatprep.subr.bf16.mxu0 0
      %1335 = vmatpush1.bf16.xpose.msra.mxu0 0
      %1336 = vmatprep.subr.bf16.mxu0 0
      %1337 = vmatpush1.bf16.xpose.msra.mxu0 0
      %1338 = vmatprep.subr.bf16.mxu0 0
      %1339 = vmatpush1.bf16.xpose.msra.mxu0 0
      %1340 = vmatprep.subr.bf16.mxu0 0
      %1341 = vmatpush1.bf16.xpose.msra.mxu0 0
      %1342 = vmatprep.subr.bf16.mxu0 0
      %1343 = vmatpush1.bf16.xpose.msra.mxu0 0
      %1344 = vmatprep.subr.bf16.mxu0 0
      %1345 = vmatpush1.bf16.xpose.msra.mxu0 0
      %1346 = vmatprep.subr.bf16.mxu0 0
      %1347 = vmatpush1.bf16.xpose.msra.mxu0 0
      %1348 = vmatprep.subr.bf16.mxu0 0
      %1349 = vmatpush1.bf16.xpose.msra.mxu0 0
      %1350 = vmatprep.subr.bf16.mxu0 0
      %1351 = vmatpush1.bf16.xpose.msra.mxu0 0
      %1352 = vmatprep.subr.bf16.mxu0 0
      %1353 = vmatpush1.bf16.xpose.msra.mxu0 0
      %1354 = vmatprep.subr.bf16.mxu0 0
      %1355 = vmatpush1.bf16.xpose.msra.mxu0 0
      %1356 = vmatprep.subr.bf16.mxu0 0
      %1357 = vmatpush1.bf16.xpose.msra.mxu0 0
      %1358 = vmatprep.subr.bf16.mxu0 0
      %1359 = vmatpush1.bf16.xpose.msra.mxu0 0
      %1360 = vmatprep.subr.bf16.mxu0 0
      %1361 = vmatpush1.bf16.xpose.msra.mxu0 0
      %1362 = vmatprep.mubr.bf16.mxu0 0
      %1363 = vmatmul.mubr.bf16.gmra.mrb[0].mxu0 %v1325
      %v1364 = vpop.f32.mrb[0].mxu0
      %v1365 = vadd.f32 %v1230, %v1364
      %v1366 = vpop.f32.mrb[0].mxu0
      %v1367 = vpop.f32.mrb[0].mxu0
      %v1368 = vpop.f32.mrb[0].mxu0
      %1369 = vdwg.mxu0
      %v1371 = vsel %vm1231, %v912, 0
      %v1374 = vsel %vm1231, %v1062, 0
      %1376 = vmatprep.subr.bf16.mxu0 0
      %1377 = vmatpush1.bf16.xpose.msra.mxu0 %v1374
      %1378 = vmatprep.subr.bf16.mxu0 0
      %1379 = vmatpush1.bf16.xpose.msra.mxu0 0
      %1380 = vmatprep.subr.bf16.mxu0 0
      %1381 = vmatpush1.bf16.xpose.msra.mxu0 0
      %1382 = vmatprep.subr.bf16.mxu0 0
      %1383 = vmatpush1.bf16.xpose.msra.mxu0 0
      %1384 = vmatprep.subr.bf16.mxu0 0
      %1385 = vmatpush1.bf16.xpose.msra.mxu0 0
      %1386 = vmatprep.subr.bf16.mxu0 0
      %1387 = vmatpush1.bf16.xpose.msra.mxu0 0
      %1388 = vmatprep.subr.bf16.mxu0 0
      %1389 = vmatpush1.bf16.xpose.msra.mxu0 0
      %1390 = vmatprep.subr.bf16.mxu0 0
      %1391 = vmatpush1.bf16.xpose.msra.mxu0 0
      %1392 = vmatprep.subr.bf16.mxu0 0
      %1393 = vmatpush1.bf16.xpose.msra.mxu0 0
      %1394 = vmatprep.subr.bf16.mxu0 0
      %1395 = vmatpush1.bf16.xpose.msra.mxu0 0
      %1396 = vmatprep.subr.bf16.mxu0 0
      %1397 = vmatpush1.bf16.xpose.msra.mxu0 0
      %1398 = vmatprep.subr.bf16.mxu0 0
      %1399 = vmatpush1.bf16.xpose.msra.mxu0 0
      %1400 = vmatprep.subr.bf16.mxu0 0
      %1401 = vmatpush1.bf16.xpose.msra.mxu0 0
      %1402 = vmatprep.subr.bf16.mxu0 0
      %1403 = vmatpush1.bf16.xpose.msra.mxu0 0
      %1404 = vmatprep.subr.bf16.mxu0 0
      %1405 = vmatpush1.bf16.xpose.msra.mxu0 0
      %1406 = vmatprep.subr.bf16.mxu0 0
      %1407 = vmatpush1.bf16.xpose.msra.mxu0 0
      %1408 = vmatprep.mubr.bf16.mxu0 0
      %1409 = vmatmul.mubr.bf16.gmra.mrb[0].mxu0 %v1371
      %v1410 = vpop.f32.mrb[0].mxu0
      %v1411 = vadd.f32 %v1230, %v1410
      %v1412 = vpop.f32.mrb[0].mxu0
      %v1413 = vpop.f32.mrb[0].mxu0
      %v1414 = vpop.f32.mrb[0].mxu0
      %1415 = vdwg.mxu0
      %vm1416 = vcmask 64512
      %v1417 = vsel %vm1416, %v1273, -inf
      %1418 = vmax.xlane.f32.xlu0 %v1417
      %v1419 = vpop.xlane.xlu0 %1418
      %v1420 = vsel %vm1416, %v1319, -inf
      %1421 = vmax.xlane.f32.xlu0 %v1420
      %v1422 = vpop.xlane.xlu0 %1421
      %v1423 = vsel %vm1416, %v1365, -inf
      %1424 = vmax.xlane.f32.xlu0 %v1423
      %v1425 = vpop.xlane.xlu0 %1424
      %v1426 = vsel %vm1416, %v1411, -inf
      %1427 = vmax.xlane.f32.xlu0 %v1426
      %v1428 = vpop.xlane.xlu0 %1427
      %v1429 = vsub.f32 %v1273, %v1419
      %v1430 = vsub.f32 %v1319, %v1422
      %v1431 = vsub.f32 %v1365, %v1425
      %v1432 = vsub.f32 %v1411, %v1428
      %v1433 = vmul.f32 %v1429, 1.442695
      %v1434 = vpow.pop %v1433
      %v1435 = vmul.f32 %v1430, 1.442695
      %v1436 = vpow.pop %v1435
      %v1437 = vmul.f32 %v1431, 1.442695
      %v1438 = vpow.pop %v1437
      %v1439 = vmul.f32 %v1432, 1.442695
      %v1440 = vpow.pop %v1439
      %v1441 = vsel %vm1416, %v1434, 0.0
      %1442 = vadd.xlane.f32.xlu0 %v1441
      %v1443 = vpop.xlane.xlu0 %1442
      %v1444 = vsel %vm1416, %v1436, 0.0
      %1445 = vadd.xlane.f32.xlu0 %v1444
      %v1446 = vpop.xlane.xlu0 %1445
      %v1447 = vsel %vm1416, %v1438, 0.0
      %1448 = vadd.xlane.f32.xlu0 %v1447
      %v1449 = vpop.xlane.xlu0 %1448
      %v1450 = vsel %vm1416, %v1440, 0.0
      %1451 = vadd.xlane.f32.xlu0 %v1450
      %v1452 = vpop.xlane.xlu0 %1451
      %v1453 = vrcp.pop %v1443
      %v1454 = vrcp.pop %v1446
      %v1455 = vrcp.pop %v1449
      %v1456 = vrcp.pop %v1452
      %v1457 = vmul.f32 %v1434, %v1453
      %v1458 = vmul.f32 %v1436, %v1454
      %v1459 = vmul.f32 %v1438, %v1455
      %v1460 = vmul.f32 %v1440, %v1456
      %v1461 = vpack.c.bf16 %v1457, %v1457
      %v1462 = vpack.c.bf16 %v1458, %v1458
      %v1463 = vpack.c.bf16 %v1459, %v1459
      %v1464 = vpack.c.bf16 %v1460, %v1460
      %v1466 = vsel %vm1416, %v1461, 0
      %vm1468 = vcmask 1043456
      %v1470 = vsel %vm1468, %v1209, 0
      %1472 = vmatprep.subr.bf16.mxu0 0
      %1473 = vmatpush1.bf16.msra.mxu0 %v1470
      %1474 = vmatprep.subr.bf16.mxu0 0
      %1475 = vmatpush1.bf16.msra.mxu0 0
      %1476 = vmatprep.subr.bf16.mxu0 0
      %1477 = vmatpush1.bf16.msra.mxu0 0
      %1478 = vmatprep.subr.bf16.mxu0 0
      %1479 = vmatpush1.bf16.msra.mxu0 0
      %1480 = vmatprep.subr.bf16.mxu0 0
      %1481 = vmatpush1.bf16.msra.mxu0 0
      %1482 = vmatprep.subr.bf16.mxu0 0
      %1483 = vmatpush1.bf16.msra.mxu0 0
      %1484 = vmatprep.subr.bf16.mxu0 0
      %1485 = vmatpush1.bf16.msra.mxu0 0
      %1486 = vmatprep.subr.bf16.mxu0 0
      %1487 = vmatpush1.bf16.msra.mxu0 0
      %1488 = vmatprep.subr.bf16.mxu0 0
      %1489 = vmatpush1.bf16.msra.mxu0 0
      %1490 = vmatprep.subr.bf16.mxu0 0
      %1491 = vmatpush1.bf16.msra.mxu0 0
      %1492 = vmatprep.subr.bf16.mxu0 0
      %1493 = vmatpush1.bf16.msra.mxu0 0
      %1494 = vmatprep.subr.bf16.mxu0 0
      %1495 = vmatpush1.bf16.msra.mxu0 0
      %1496 = vmatprep.subr.bf16.mxu0 0
      %1497 = vmatpush1.bf16.msra.mxu0 0
      %1498 = vmatprep.subr.bf16.mxu0 0
      %1499 = vmatpush1.bf16.msra.mxu0 0
      %1500 = vmatprep.subr.bf16.mxu0 0
      %1501 = vmatpush1.bf16.msra.mxu0 0
      %1502 = vmatprep.subr.bf16.mxu0 0
      %1503 = vmatpush1.bf16.msra.mxu0 0
      %1504 = vmatprep.mubr.bf16.mxu0 0
      %1505 = vmatmul.mubr.bf16.gmra.mrb[0].mxu0 %v1466
      %v1506 = vpop.f32.mrb[0].mxu0
      %v1507 = vadd.f32 0.0, %v1506
      %v1508 = vpop.f32.mrb[0].mxu0
      %v1509 = vpop.f32.mrb[0].mxu0
      %v1510 = vpop.f32.mrb[0].mxu0
      %1511 = vdwg.mxu0
      %v1513 = vsel %vm1416, %v1462, 0
      %v1516 = vsel %vm1468, %v1210, 0
      %1518 = vmatprep.subr.bf16.mxu0 0
      %1519 = vmatpush1.bf16.msra.mxu0 %v1516
      %1520 = vmatprep.subr.bf16.mxu0 0
      %1521 = vmatpush1.bf16.msra.mxu0 0
      %1522 = vmatprep.subr.bf16.mxu0 0
      %1523 = vmatpush1.bf16.msra.mxu0 0
      %1524 = vmatprep.subr.bf16.mxu0 0
      %1525 = vmatpush1.bf16.msra.mxu0 0
      %1526 = vmatprep.subr.bf16.mxu0 0
      %1527 = vmatpush1.bf16.msra.mxu0 0
      %1528 = vmatprep.subr.bf16.mxu0 0
      %1529 = vmatpush1.bf16.msra.mxu0 0
      %1530 = vmatprep.subr.bf16.mxu0 0
      %1531 = vmatpush1.bf16.msra.mxu0 0
      %1532 = vmatprep.subr.bf16.mxu0 0
      %1533 = vmatpush1.bf16.msra.mxu0 0
      %1534 = vmatprep.subr.bf16.mxu0 0
      %1535 = vmatpush1.bf16.msra.mxu0 0
      %1536 = vmatprep.subr.bf16.mxu0 0
      %1537 = vmatpush1.bf16.msra.mxu0 0
      %1538 = vmatprep.subr.bf16.mxu0 0
      %1539 = vmatpush1.bf16.msra.mxu0 0
      %1540 = vmatprep.subr.bf16.mxu0 0
      %1541 = vmatpush1.bf16.msra.mxu0 0
      %1542 = vmatprep.subr.bf16.mxu0 0
      %1543 = vmatpush1.bf16.msra.mxu0 0
      %1544 = vmatprep.subr.bf16.mxu0 0
      %1545 = vmatpush1.bf16.msra.mxu0 0
      %1546 = vmatprep.subr.bf16.mxu0 0
      %1547 = vmatpush1.bf16.msra.mxu0 0
      %1548 = vmatprep.subr.bf16.mxu0 0
      %1549 = vmatpush1.bf16.msra.mxu0 0
      %1550 = vmatprep.mubr.bf16.mxu0 0
      %1551 = vmatmul.mubr.bf16.gmra.mrb[0].mxu0 %v1513
      %v1552 = vpop.f32.mrb[0].mxu0
      %v1553 = vadd.f32 0.0, %v1552
      %v1554 = vpop.f32.mrb[0].mxu0
      %v1555 = vpop.f32.mrb[0].mxu0
      %v1556 = vpop.f32.mrb[0].mxu0
      %1557 = vdwg.mxu0
      %v1559 = vsel %vm1416, %v1463, 0
      %v1562 = vsel %vm1468, %v1211, 0
      %1564 = vmatprep.subr.bf16.mxu0 0
      %1565 = vmatpush1.bf16.msra.mxu0 %v1562
      %1566 = vmatprep.subr.bf16.mxu0 0
      %1567 = vmatpush1.bf16.msra.mxu0 0
      %1568 = vmatprep.subr.bf16.mxu0 0
      %1569 = vmatpush1.bf16.msra.mxu0 0
      %1570 = vmatprep.subr.bf16.mxu0 0
      %1571 = vmatpush1.bf16.msra.mxu0 0
      %1572 = vmatprep.subr.bf16.mxu0 0
      %1573 = vmatpush1.bf16.msra.mxu0 0
      %1574 = vmatprep.subr.bf16.mxu0 0
      %1575 = vmatpush1.bf16.msra.mxu0 0
      %1576 = vmatprep.subr.bf16.mxu0 0
      %1577 = vmatpush1.bf16.msra.mxu0 0
      %1578 = vmatprep.subr.bf16.mxu0 0
      %1579 = vmatpush1.bf16.msra.mxu0 0
      %1580 = vmatprep.subr.bf16.mxu0 0
      %1581 = vmatpush1.bf16.msra.mxu0 0
      %1582 = vmatprep.subr.bf16.mxu0 0
      %1583 = vmatpush1.bf16.msra.mxu0 0
      %1584 = vmatprep.subr.bf16.mxu0 0
      %1585 = vmatpush1.bf16.msra.mxu0 0
      %1586 = vmatprep.subr.bf16.mxu0 0
      %1587 = vmatpush1.bf16.msra.mxu0 0
      %1588 = vmatprep.subr.bf16.mxu0 0
      %1589 = vmatpush1.bf16.msra.mxu0 0
      %1590 = vmatprep.subr.bf16.mxu0 0
      %1591 = vmatpush1.bf16.msra.mxu0 0
      %1592 = vmatprep.subr.bf16.mxu0 0
      %1593 = vmatpush1.bf16.msra.mxu0 0
      %1594 = vmatprep.subr.bf16.mxu0 0
      %1595 = vmatpush1.bf16.msra.mxu0 0
      %1596 = vmatprep.mubr.bf16.mxu0 0
      %1597 = vmatmul.mubr.bf16.gmra.mrb[0].mxu0 %v1559
      %v1598 = vpop.f32.mrb[0].mxu0
      %v1599 = vadd.f32 0.0, %v1598
      %v1600 = vpop.f32.mrb[0].mxu0
      %v1601 = vpop.f32.mrb[0].mxu0
      %v1602 = vpop.f32.mrb[0].mxu0
      %1603 = vdwg.mxu0
      %v1605 = vsel %vm1416, %v1464, 0
      %v1608 = vsel %vm1468, %v1212, 0
      %1610 = vmatprep.subr.bf16.mxu0 0
      %1611 = vmatpush1.bf16.msra.mxu0 %v1608
      %1612 = vmatprep.subr.bf16.mxu0 0
      %1613 = vmatpush1.bf16.msra.mxu0 0
      %1614 = vmatprep.subr.bf16.mxu0 0
      %1615 = vmatpush1.bf16.msra.mxu0 0
      %1616 = vmatprep.subr.bf16.mxu0 0
      %1617 = vmatpush1.bf16.msra.mxu0 0
      %1618 = vmatprep.subr.bf16.mxu0 0
      %1619 = vmatpush1.bf16.msra.mxu0 0
      %1620 = vmatprep.subr.bf16.mxu0 0
      %1621 = vmatpush1.bf16.msra.mxu0 0
      %1622 = vmatprep.subr.bf16.mxu0 0
      %1623 = vmatpush1.bf16.msra.mxu0 0
      %1624 = vmatprep.subr.bf16.mxu0 0
      %1625 = vmatpush1.bf16.msra.mxu0 0
      %1626 = vmatprep.subr.bf16.mxu0 0
      %1627 = vmatpush1.bf16.msra.mxu0 0
      %1628 = vmatprep.subr.bf16.mxu0 0
      %1629 = vmatpush1.bf16.msra.mxu0 0
      %1630 = vmatprep.subr.bf16.mxu0 0
      %1631 = vmatpush1.bf16.msra.mxu0 0
      %1632 = vmatprep.subr.bf16.mxu0 0
      %1633 = vmatpush1.bf16.msra.mxu0 0
      %1634 = vmatprep.subr.bf16.mxu0 0
      %1635 = vmatpush1.bf16.msra.mxu0 0
      %1636 = vmatprep.subr.bf16.mxu0 0
      %1637 = vmatpush1.bf16.msra.mxu0 0
      %1638 = vmatprep.subr.bf16.mxu0 0
      %1639 = vmatpush1.bf16.msra.mxu0 0
      %1640 = vmatprep.subr.bf16.mxu0 0
      %1641 = vmatpush1.bf16.msra.mxu0 0
      %1642 = vmatprep.mubr.bf16.mxu0 0
      %1643 = vmatmul.mubr.bf16.gmra.mrb[0].mxu0 %v1605
      %v1644 = vpop.f32.mrb[0].mxu0
      %v1645 = vadd.f32 0.0, %v1644
      %v1646 = vpop.f32.mrb[0].mxu0
      %v1647 = vpop.f32.mrb[0].mxu0
      %v1648 = vpop.f32.mrb[0].mxu0
      %1649 = vdwg.mxu0
      %v1650 = vcombine.low %v1507, %v1599
      %v1651 = vcombine.high %v1507, %v1599
      %v1653 = vunpack.c.l.s4 1983009808
      %v1654 = vunpack.c.0.s8 %v1653
      %v1655 = vlaneseq
      %v1656 = vshrl.u32 %v1655, 7
      %v1657 = vsub.s32 %v1654, %v1656
      %v1658 = vrot.slane %v1650, %v1657
      %v1660 = vunpack.c.l.s4 1983009808
      %v1661 = vunpack.c.0.s8 %v1660
      %v1662 = vlaneseq
      %v1663 = vshrl.u32 %v1662, 7
      %v1664 = vsub.s32 %v1661, %v1663
      %v1665 = vrot.slane %v1651, %v1664
      %v1666 = vcombine.low %v1553, %v1645
      %v1667 = vcombine.high %v1553, %v1645
      %v1669 = vunpack.c.l.s4 1983009808
      %v1670 = vunpack.c.0.s8 %v1669
      %v1671 = vlaneseq
      %v1672 = vshrl.u32 %v1671, 7
      %v1673 = vsub.s32 %v1670, %v1672
      %v1674 = vrot.slane %v1666, %v1673
      %v1676 = vunpack.c.l.s4 1983009808
      %v1677 = vunpack.c.0.s8 %v1676
      %v1678 = vlaneseq
      %v1679 = vshrl.u32 %v1678, 7
      %v1680 = vsub.s32 %v1677, %v1679
      %v1681 = vrot.slane %v1667, %v1680
      %v1682 = vcombine.low %v1658, %v1674
      %v1683 = vcombine.high %v1658, %v1674
      %v1685 = vunpack.c.l.s4 1934713408
      %v1686 = vunpack.c.0.s8 %v1685
      %v1687 = vlaneseq
      %v1688 = vshrl.u32 %v1687, 7
      %v1689 = vsub.s32 %v1686, %v1688
      %v1690 = vrot.slane %v1682, %v1689
      %v1692 = vunpack.c.l.s4 1934713408
      %v1693 = vunpack.c.0.s8 %v1692
      %v1694 = vlaneseq
      %v1695 = vshrl.u32 %v1694, 7
      %v1696 = vsub.s32 %v1693, %v1695
      %v1697 = vrot.slane %v1683, %v1696
      %v1698 = vcombine.low %v1665, %v1681
      %v1699 = vcombine.high %v1665, %v1681
      %v1701 = vunpack.c.l.s4 1934713408
      %v1702 = vunpack.c.0.s8 %v1701
      %v1703 = vlaneseq
      %v1704 = vshrl.u32 %v1703, 7
      %v1705 = vsub.s32 %v1702, %v1704
      %v1706 = vrot.slane %v1698, %v1705
      %v1708 = vunpack.c.l.s4 1934713408
      %v1709 = vunpack.c.0.s8 %v1708
      %v1710 = vlaneseq
      %v1711 = vshrl.u32 %v1710, 7
      %v1712 = vsub.s32 %v1709, %v1711
      %v1713 = vrot.slane %v1699, %v1712
      %v1714 = vcombine.high %v1690, 0.0
      %v1715 = vcombine.high %v1697, 0.0
      %v1716 = vcombine.high %v1706, 0.0
      %v1717 = vcombine.high %v1713, 0.0
      %v1718 = vcombine.low %v1690, %v1697
      %v1720 = vunpack.c.l.s4 1983009808
      %v1721 = vunpack.c.0.s8 %v1720
      %v1722 = vlaneseq
      %v1723 = vshrl.u32 %v1722, 7
      %v1724 = vsub.s32 %v1721, %v1723
      %v1725 = vrot.slane %v1718, %v1724
      %v1726 = vcombine.low %v1714, %v1715
      %v1728 = vunpack.c.l.s4 1983009808
      %v1729 = vunpack.c.0.s8 %v1728
      %v1730 = vlaneseq
      %v1731 = vshrl.u32 %v1730, 7
      %v1732 = vsub.s32 %v1729, %v1731
      %v1733 = vrot.slane %v1726, %v1732
      %v1734 = vcombine.low %v1706, %v1713
      %v1736 = vunpack.c.l.s4 1983009808
      %v1737 = vunpack.c.0.s8 %v1736
      %v1738 = vlaneseq
      %v1739 = vshrl.u32 %v1738, 7
      %v1740 = vsub.s32 %v1737, %v1739
      %v1741 = vrot.slane %v1734, %v1740
      %v1742 = vcombine.low %v1716, %v1717
      %v1744 = vunpack.c.l.s4 1983009808
      %v1745 = vunpack.c.0.s8 %v1744
      %v1746 = vlaneseq
      %v1747 = vshrl.u32 %v1746, 7
      %v1748 = vsub.s32 %v1745, %v1747
      %v1749 = vrot.slane %v1742, %v1748
      %v1750 = vcombine.low %v1725, %v1733
      %v1751 = vcombine.high %v1725, %v1733
      %v1753 = vunpack.c.l.s4 1934713408
      %v1754 = vunpack.c.0.s8 %v1753
      %v1755 = vlaneseq
      %v1756 = vshrl.u32 %v1755, 7
      %v1757 = vsub.s32 %v1754, %v1756
      %v1758 = vrot.slane %v1750, %v1757
      %v1760 = vunpack.c.l.s4 1934713408
      %v1761 = vunpack.c.0.s8 %v1760
      %v1762 = vlaneseq
      %v1763 = vshrl.u32 %v1762, 7
      %v1764 = vsub.s32 %v1761, %v1763
      %v1765 = vrot.slane %v1751, %v1764
      %v1766 = vcombine.low %v1741, %v1749
      %v1767 = vcombine.high %v1741, %v1749
      %v1769 = vunpack.c.l.s4 1934713408
      %v1770 = vunpack.c.0.s8 %v1769
      %v1771 = vlaneseq
      %v1772 = vshrl.u32 %v1771, 7
      %v1773 = vsub.s32 %v1770, %v1772
      %v1774 = vrot.slane %v1766, %v1773
      %v1776 = vunpack.c.l.s4 1934713408
      %v1777 = vunpack.c.0.s8 %v1776
      %v1778 = vlaneseq
      %v1779 = vshrl.u32 %v1778, 7
      %v1780 = vsub.s32 %v1777, %v1779
      %v1781 = vrot.slane %v1767, %v1780
      %v1782 = vcombine.low %v1758, %v1774
      %v1783 = vcombine.high %v1758, %v1774
      %v1784 = vcombine.low %v1765, %v1781
      %v1785 = vcombine.high %v1765, %v1781
      %1787 = vrot.lane.b32.xlu0 %v1783, 32
      %v1788 = vpop.permute.xlu0 %1787
      %1791 = vrot.lane.b32.xlu0 %v1784, 64
      %v1792 = vpop.permute.xlu0 %1791
      %1795 = vrot.lane.b32.xlu0 %v1785, 96
      %v1796 = vpop.permute.xlu0 %1795
      %v1798 = vsel %vm1231, %v1782, %v1788
      %vm1799 = vcmask 523264
      %v1800 = vsel %vm1799, %v1798, %v1792
      %vm1801 = vcmask 785408
      %v1802 = vsel %vm1801, %v1800, %v1796
      %v1803 = vpack.c.bf16 %v1802, %v1802
      %v1804 = vld [vmem:[%s8] sm:$0xf]
      %v1805 = vld [vmem:[%s8 + $0x4] sm:$0xf]
      %v1806 = vld [vmem:[%s8 + $0x8] sm:$0xf]
      %v1807 = vld [vmem:[%s8 + $0xc] sm:$0xf]
      %v1808 = vld [vmem:[%s8 + $0x10] sm:$0xf]
      %v1809 = vld [vmem:[%s8 + $0x14] sm:$0xf]
      %v1810 = vld [vmem:[%s8 + $0x18] sm:$0xf]
      %v1811 = vld [vmem:[%s8 + $0x1c] sm:$0xf]
      %v1812 = vld [vmem:[%s8 + $0x20] sm:$0xf]
      %v1813 = vld [vmem:[%s8 + $0x24] sm:$0xf]
      %v1814 = vld [vmem:[%s8 + $0x28] sm:$0xf]
      %v1815 = vld [vmem:[%s8 + $0x2c] sm:$0xf]
      %v1816 = vld [vmem:[%s8 + $0x30] sm:$0xf]
      %v1817 = vld [vmem:[%s8 + $0x34] sm:$0xf]
      %v1818 = vld [vmem:[%s8 + $0x38] sm:$0xf]
      %v1819 = vld [vmem:[%s8 + $0x3c] sm:$0xf]
      %v1820 = vld [vmem:[%s9] sm:$0x1]
      %v1822 = vlaneseq
      %v1823 = vshrl.u32 %v1822, 7
      %v1824 = vsub.s32 0, %v1823
      %v1825 = vrot.slane %v1820, %v1824
      %v1843 = vunpack.c.l.b16 %v1804
      %v1844 = vunpack.c.l.b16 %v1805
      %v1845 = vunpack.c.l.b16 %v1806
      %v1846 = vunpack.c.l.b16 %v1807
      %v1847 = vunpack.c.l.b16 %v1808
      %v1848 = vunpack.c.l.b16 %v1809
      %v1849 = vunpack.c.l.b16 %v1810
      %v1850 = vunpack.c.l.b16 %v1811
      %v1851 = vunpack.c.l.b16 %v1812
      %v1852 = vunpack.c.l.b16 %v1813
      %v1853 = vunpack.c.l.b16 %v1814
      %v1854 = vunpack.c.l.b16 %v1815
      %v1855 = vunpack.c.l.b16 %v1816
      %v1856 = vunpack.c.l.b16 %v1817
      %v1857 = vunpack.c.l.b16 %v1818
      %v1858 = vunpack.c.l.b16 %v1819
      %v1859 = vpack.c.b16 %v1844, %v1843
      %v1860 = vpack.c.b16 %v1846, %v1845
      %v1861 = vpack.c.b16 %v1848, %v1847
      %v1862 = vpack.c.b16 %v1850, %v1849
      %v1863 = vpack.c.b16 %v1852, %v1851
      %v1864 = vpack.c.b16 %v1854, %v1853
      %v1865 = vpack.c.b16 %v1856, %v1855
      %v1866 = vpack.c.b16 %v1858, %v1857
      %1875 = vmatprep.subr.bf16.mxu0 0
      %1876 = vmatpush1.bf16.msra.mxu0 %v1859
      %1877 = vmatprep.subr.bf16.mxu0 0
      %1878 = vmatpush1.bf16.msra.mxu0 %v1860
      %1879 = vmatprep.subr.bf16.mxu0 0
      %1880 = vmatpush1.bf16.msra.mxu0 %v1861
      %1881 = vmatprep.subr.bf16.mxu0 0
      %1882 = vmatpush1.bf16.msra.mxu0 %v1862
      %1883 = vmatprep.subr.bf16.mxu0 0
      %1884 = vmatpush1.bf16.msra.mxu0 %v1863
      %1885 = vmatprep.subr.bf16.mxu0 0
      %1886 = vmatpush1.bf16.msra.mxu0 %v1864
      %1887 = vmatprep.subr.bf16.mxu0 0
      %1888 = vmatpush1.bf16.msra.mxu0 %v1865
      %1889 = vmatprep.subr.bf16.mxu0 0
      %1890 = vmatpush1.bf16.msra.mxu0 %v1866
      %1891 = vmatprep.subr.bf16.mxu0 0
      %1892 = vmatpush1.bf16.msra.mxu0 0
      %1893 = vmatprep.subr.bf16.mxu0 0
      %1894 = vmatpush1.bf16.msra.mxu0 0
      %1895 = vmatprep.subr.bf16.mxu0 0
      %1896 = vmatpush1.bf16.msra.mxu0 0
      %1897 = vmatprep.subr.bf16.mxu0 0
      %1898 = vmatpush1.bf16.msra.mxu0 0
      %1899 = vmatprep.subr.bf16.mxu0 0
      %1900 = vmatpush1.bf16.msra.mxu0 0
      %1901 = vmatprep.subr.bf16.mxu0 0
      %1902 = vmatpush1.bf16.msra.mxu0 0
      %1903 = vmatprep.subr.bf16.mxu0 0
      %1904 = vmatpush1.bf16.msra.mxu0 0
      %1905 = vmatprep.subr.bf16.mxu0 0
      %1906 = vmatpush1.bf16.msra.mxu0 0
      %1907 = vmatprep.mubr.bf16.mxu0 0
      %1908 = vmatmul.mubr.bf16.gmra.mrb[0].mxu0 %v1803
      %v1909 = vpop.f32.mrb[0].mxu0
      %v1910 = vadd.f32 %v1825, %v1909
      %v1911 = vpop.f32.mrb[0].mxu0
      %v1912 = vpop.f32.mrb[0].mxu0
      %v1913 = vpop.f32.mrb[0].mxu0
      %1914 = vdwg.mxu0
      %v1915 = vadd.f32 %v1910, %v502
      %1916 = vadd.xlane.f32.xlu0 %v1915
      %v1917 = vpop.xlane.xlu0 %1916
      %v1918 = vrcp.pop 128.0
      %v1919 = vmul.f32 %v1917, %v1918
      %v1920 = vsub.f32 %v1915, %v1919
      %v1921 = vmul.f32 %v1920, %v1920
      %1922 = vadd.xlane.f32.xlu0 %v1921
      %v1923 = vpop.xlane.xlu0 %1922
      %v1924 = vmul.f32 %v1923, %v1918
      %v1925 = vadd.f32 %v1924, 1e-05
      %v1926 = vrsqrt.pop %v1925
      %v1927 = vmul.f32 %v1920, %v1926
      %v1928 = vld [vmem:[%s10] sm:$0x1]
      %v1930 = vlaneseq
      %v1931 = vshrl.u32 %v1930, 7
      %v1932 = vsub.s32 0, %v1931
      %v1933 = vrot.slane %v1928, %v1932
      %v1935 = vmul.f32 %v1927, %v1933
      %v1936 = vld [vmem:[%s11] sm:$0x1]
      %v1938 = vlaneseq
      %v1939 = vshrl.u32 %v1938, 7
      %v1940 = vsub.s32 0, %v1939
      %v1941 = vrot.slane %v1936, %v1940
      %v1943 = vadd.f32 %v1935, %v1941
      %v1944 = vld [vmem:[%s491] sm:$0xff]
      %1946 = vset.pattern.permute.xlu0 0
      %1947 = vperm.xlu0 %1946, %v1944
      %v1948 = vpop.permute.xlu0 %1947
      %v1950 = vmul.f32 %v1943, %v1948
      %v1951 = vpack.c.bf16 %v1950, %v1950
      %1952 = vst [vmem:[%s498] sm:$0xf] %v1951
      %p1953 = scmp.lt.s32.totalorder %s27, 1
      %s1954 = scalar_select %p1953, %s27, 1
      %p1955 = scmp.lt.s32.totalorder %s28, 0
      %s1956 = scalar_select %p1955, %s28, 0
      %s1957 = sadd.s32 %s1956, %s1954
      %s1958 = smul.addr %s1957, 4
      %s1959 = scalar_lea.vmem %s12, %s1958
      // Predicated region
      $region69: #{transformer_decoder_forward.19} parent=67 // pred_check
        %p1960 = pneg %p331
      $region70: #{transformer_decoder_forward.19} parent=67 // pred_check_branch
        %1962 = sbr.rel (%p1960) target = $region72
      $region71: #{transformer_decoder_forward.19} parent=67 // pred_region
        _
      $region72: #{transformer_decoder_forward.19} parent=67 // pred_fallthru
        _
    $region68: #{transformer_decoder_forward.19} parent=5 // pred_fallthru
      _
    %p1963 = scmp.le.s32.totalorder 2, %s18
    // Predicated region
    $region73: #{transformer_decoder_forward.19} parent=5 // pred_check
      %p1964 = pneg %p1963
    $region74: #{transformer_decoder_forward.19} parent=5 // pred_check_branch
      %1966 = sbr.rel (%p1964) target = $region76
    $region75: #{transformer_decoder_forward.19} parent=5 // pred_region
      %s1967 = ssub.s32 %s18, 2
      // Predicated region
      $region77: #{transformer_decoder_forward.19} parent=75 // pred_check
        %p1968 = pneg %p337
      $region78: #{transformer_decoder_forward.19} parent=75 // pred_check_branch
        %1970 = sbr.rel (%p1968) target = $region80
      $region79: #{transformer_decoder_forward.19} parent=75 // pred_region
        %p1971 = scmp.lt.s32.totalorder %s29, 1
        %s1972 = scalar_select %p1971, %s29, 1
        %p1973 = scmp.lt.s32.totalorder %s30, 0
        %s1974 = scalar_select %p1973, %s30, 0
        %s1975 = sadd.s32 %s1974, %s1972
        %s1976 = smul.addr %s1975, 4
        %s1977 = scalar_lea.vmem %s12, %s1976
      $region80: #{transformer_decoder_forward.19} parent=75 // pred_fallthru
        _
    $region76: #{transformer_decoder_forward.19} parent=5 // pred_fallthru
      _
  $region6: #{transformer_decoder_forward.19} parent=0 // loop_footer
    %s22 = sadd.s32 1, %s18
  $region7: #{transformer_decoder_forward.19} parent=0 // loop_footer_branch
    %17 = sbr.rel target = $region3
  $region8: #{transformer_decoder_forward.19} parent=0 // loop_exit
    _

</llo_original>
